<compile_context>
chip_gen: v7x
topology: tpu7x:2x2x1
jax: 0.10.0
libtpu: 0.0.40
codegen_flags: <defaults>
</compile_context>

<pallas_src>
import functools

import jax
import jax.numpy as jnp
import numpy as np
from jax import lax
from jax.experimental import pallas as pl
from jax.experimental.pallas import tpu as pltpu


def _resblock_kernel(xg_ref, w1_ref, b1_ref, w2_ref, b2_ref, mask_ref,
                     o_ref, p1_ref, hg_ref, p2_ref,
                     *, Cin, Cout, P3, G, shifts):
    """One batch element per grid step.

    xg_ref  : (1, Cin, G+P3+G)    bf16  zero-guarded, zero-padded, flattened input
    w1_ref  : (Cout, 27*Cin)      bf16  conv1 weights, K index = tap*Cin + ci
    b1_ref  : (Cout, 1)           f32
    w2_ref  : (Cout, 27*Cout+Cin) bf16  conv2 weights with 1x1x1 identity appended
    b2_ref  : (Cout, 1)           f32   (= conv2 bias + identity bias)
    mask_ref: (1, P3)             f32   1.0 at interior padded positions, 0 at halo
    o_ref   : (1, Cout, P3)       f32   output over the padded flat volume
    p1_ref  : (27*Cin, P3)        bf16  scratch: im2col patches for conv1
    hg_ref  : (Cout, G+P3+G)      bf16  scratch: guarded ReLU(conv1) activations
    p2_ref  : (27*Cout+Cin, P3)   bf16  scratch: im2col patches for conv2+identity
    """
    # Guard bands must read as zero for boundary taps. They are tiny ((Cout, G)
    # each); re-zeroing them every step is cheap and keeps the kernel state-free,
    # which makes "parallel" (megacore) sharding of the batch axis safe.
    zg = jnp.zeros((Cout, G), hg_ref.dtype)
    hg_ref[:, 0:G] = zg
    hg_ref[:, G + P3:G + P3 + G] = zg

    # ---- conv1: build im2col patches (27 lane-shifted copies) + one MXU matmul ----
    for tap, s in enumerate(shifts):
        p1_ref[tap * Cin:(tap + 1) * Cin, :] = xg_ref[0, :, G + s:G + s + P3]
    acc1 = jnp.dot(w1_ref[...], p1_ref[...], preferred_element_type=jnp.float32)

    # bias + ReLU in f32, zero out halo positions, stage guarded bf16 activations
    h = jnp.maximum(acc1 + b1_ref[...], 0.0) * mask_ref[...]
    hg_ref[:, G:G + P3] = h.astype(hg_ref.dtype)

    # ---- conv2 (+ fused 1x1x1 identity path as extra K rows) ----
    for tap, s in enumerate(shifts):
        p2_ref[tap * Cout:(tap + 1) * Cout, :] = hg_ref[:, G + s:G + s + P3]
    p2_ref[27 * Cout:27 * Cout + Cin, :] = xg_ref[0, :, G:G + P3]
    acc2 = jnp.dot(w2_ref[...], p2_ref[...], preferred_element_type=jnp.float32)

    # ---- final ReLU(conv2 + identity); store is lane-dense (minor dim = P3) ----
    o_ref[0] = jnp.maximum(acc2 + b2_ref[...], 0.0).astype(o_ref.dtype)


def resblock_forward(x_ncdhw, params):
    """Pallas forward pass. x_ncdhw: (N, Cin, D, H, W) float32 (PyTorch layout)."""
    w1, b1, w2, b2, wid, bid = params
    N, Cin, D, H, W = x_ncdhw.shape
    Cout = w1.shape[0]
    PD, PH, PW = D + 2, H + 2, W + 2
    P3 = PD * PH * PW
    G = PH * PW + PW + 1          # max |flat tap offset|
    Ltot = P3 + 2 * G

    # flat offsets of the 27 taps (kd, kh, kw), row-major over the padded volume
    shifts = tuple((kd - 1) * PH * PW + (kh - 1) * PW + (kw - 1)
                   for kd in range(3) for kh in range(3) for kw in range(3))

    # ---- wrapper-side layout prep (cheap XLA ops) ----
    # zero-pad spatial dims, flatten spatial, add zero guard bands, cast to bf16
    xp = jnp.pad(x_ncdhw, ((0, 0), (0, 0), (1, 1), (1, 1), (1, 1)))
    xg = jnp.pad(xp.reshape(N, Cin, P3), ((0, 0), (0, 0), (G, G))).astype(jnp.bfloat16)

    # conv weights -> (Cout, 27*C) with K index = (kd*9 + kh*3 + kw)*C + c
    w1m = jnp.transpose(w1, (0, 2, 3, 4, 1)).reshape(Cout, 27 * Cin).astype(jnp.bfloat16)
    w2m = jnp.transpose(w2, (0, 2, 3, 4, 1)).reshape(Cout, 27 * Cout)
    if wid is None:                       # in_channels == out_channels: identity = x
        widm = jnp.eye(Cout, Cin, dtype=jnp.float32)
        bidv = jnp.zeros((Cout,), jnp.float32)
    else:
        widm = wid.reshape(Cout, Cin)
        bidv = bid
    w2m = jnp.concatenate([w2m, widm], axis=1).astype(jnp.bfloat16)

    b1c = b1.reshape(Cout, 1).astype(jnp.float32)
    b2c = (b2 + bidv).reshape(Cout, 1).astype(jnp.float32)

    # interior mask over the padded flat volume (kills garbage at halo positions)
    mask = jnp.zeros((PD, PH, PW), jnp.float32)
    mask = mask.at[1:-1, 1:-1, 1:-1].set(1.0).reshape(1, P3)

    kernel = functools.partial(_resblock_kernel, Cin=Cin, Cout=Cout,
                               P3=P3, G=G, shifts=shifts)

    out_flat = pl.pallas_call(
        kernel,
        out_shape=jax.ShapeDtypeStruct((N, Cout, P3), jnp.float32),
        grid_spec=pltpu.PrefetchScalarGridSpec(
            num_scalar_prefetch=0,
            grid=(N,),
            in_specs=[
                pl.BlockSpec((1, Cin, Ltot), lambda n: (n, 0, 0)),
                pl.BlockSpec((Cout, 27 * Cin), lambda n: (0, 0)),
                pl.BlockSpec((Cout, 1), lambda n: (0, 0)),
                pl.BlockSpec((Cout, 27 * Cout + Cin), lambda n: (0, 0)),
                pl.BlockSpec((Cout, 1), lambda n: (0, 0)),
                pl.BlockSpec((1, P3), lambda n: (0, 0)),
            ],
            out_specs=pl.BlockSpec((1, Cout, P3), lambda n: (n, 0, 0)),
            scratch_shapes=[
                pltpu.VMEM((27 * Cin, P3), jnp.bfloat16),
                pltpu.VMEM((Cout, Ltot), jnp.bfloat16),
                pltpu.VMEM((27 * Cout + Cin, P3), jnp.bfloat16),
            ],
        ),
        compiler_params=pltpu.CompilerParams(
            dimension_semantics=("parallel",),
            vmem_limit_bytes=48 * 1024 * 1024,
        ),
    )(xg, w1m, b1c, w2m, b2c, mask)

    # drop the spatial halo; result is already in NCDHW order
    out = out_flat.reshape(N, Cout, PD, PH, PW)[:, :, 1:D + 1, 1:H + 1, 1:W + 1]
    return out


def resblock_reference(x, params):
    """Pure-JAX f32 reference matching PyTorch ResBlock.forward semantics (NCDHW)."""
    w1, b1, w2, b2, wid, bid = params
    dn = ('NCDHW', 'OIDHW', 'NCDHW')

    def conv(inp, w, pad):
        return lax.conv_general_dilated(inp, w, (1, 1, 1), [(pad, pad)] * 3,
                                        dimension_numbers=dn)

    out = conv(x, w1, 1) + b1[None, :, None, None, None]
    out = jnp.maximum(out, 0.0)
    out = conv(out, w2, 1) + b2[None, :, None, None, None]
    if wid is None:
        ident = x
    else:
        ident = conv(x, wid, 0) + bid[None, :, None, None, None]
    return jnp.maximum(out + ident, 0.0)


if __name__ == "__main__":
    # Small shapes: batch=2, in_channels=4, out_channels=8, depth=height=width=8.
    N, Cin, Cout, D, H, W = 2, 4, 8, 8, 8, 8

    key = jax.random.PRNGKey(0)
    kx, k1, kb1, k2, kb2, kid, kbid = jax.random.split(key, 7)

    x = jax.random.normal(kx, (N, Cin, D, H, W), dtype=jnp.float32)

    # Deterministic synthetic parameters (bias=True), PyTorch weight layouts.
    w1 = 0.1 * jax.random.normal(k1, (Cout, Cin, 3, 3, 3), dtype=jnp.float32)
    b1 = 0.1 * jax.random.normal(kb1, (Cout,), dtype=jnp.float32)
    w2 = 0.1 * jax.random.normal(k2, (Cout, Cout, 3, 3, 3), dtype=jnp.float32)
    b2 = 0.1 * jax.random.normal(kb2, (Cout,), dtype=jnp.float32)
    wid = 0.1 * jax.random.normal(kid, (Cout, Cin, 1, 1, 1), dtype=jnp.float32)
    bid = 0.1 * jax.random.normal(kbid, (Cout,), dtype=jnp.float32)
    params = (w1, b1, w2, b2, wid, bid)

    out = jax.block_until_ready(resblock_forward(x, params))
    ref = jax.block_until_ready(resblock_reference(x, params))

    # bf16 matmul operands with f32 accumulation -> slightly relaxed tolerance
    # vs the pure-f32 reference.
    np.testing.assert_allclose(np.asarray(out), np.asarray(ref),
                               rtol=5e-2, atol=5e-2)

    print("KERNEL_OK")
</pallas_src>

<mosaic_0001>
module attributes {stable_mosaic.version = 11 : i64} {
  func.func @_resblock_kernel(%arg0: i32, %arg1: memref<1x4x1222xbf16, #tpu.memory_space<vmem>>, %arg2: memref<8x108xbf16, #tpu.memory_space<vmem>>, %arg3: memref<8x1xf32, #tpu.memory_space<vmem>>, %arg4: memref<8x220xbf16, #tpu.memory_space<vmem>>, %arg5: memref<8x1xf32, #tpu.memory_space<vmem>>, %arg6: memref<1x1000xf32, #tpu.memory_space<vmem>>, %arg7: memref<1x8x1000xf32, #tpu.memory_space<vmem>>, %arg8: memref<108x1000xbf16, #tpu.memory_space<vmem>>, %arg9: memref<8x1222xbf16, #tpu.memory_space<vmem>>, %arg10: memref<220x1000xbf16, #tpu.memory_space<vmem>>) attributes {dimension_semantics = [#tpu.dimension_semantics<parallel>], iteration_bounds = array<i64: 2>, scalar_prefetch = 0 : i64, scratch_operands = 3 : i64, tpu.core_type = #tpu.core_type<tc>, window_params = [{transform_indices = @transform_0, window_bounds = array<i64: 1, 4, 1222>}, {pipeline_mode = #tpu.pipeline_mode<synchronous>, transform_indices = @transform_1, window_bounds = array<i64: 8, 108>}, {pipeline_mode = #tpu.pipeline_mode<synchronous>, transform_indices = @transform_2, window_bounds = array<i64: 8, 1>}, {pipeline_mode = #tpu.pipeline_mode<synchronous>, transform_indices = @transform_3, window_bounds = array<i64: 8, 220>}, {pipeline_mode = #tpu.pipeline_mode<synchronous>, transform_indices = @transform_4, window_bounds = array<i64: 8, 1>}, {pipeline_mode = #tpu.pipeline_mode<synchronous>, transform_indices = @transform_5, window_bounds = array<i64: 1, 1000>}, {transform_indices = @transform_6, window_bounds = array<i64: 1, 8, 1000>}]} {
    %cst = arith.constant 0.000000e+00 : bf16
    %0 = vector.broadcast %cst : bf16 to vector<8x111xbf16>
    %c0 = arith.constant 0 : index
    %c0_0 = arith.constant 0 : index
    %1 = vector.load %arg9[%c0, %c0_0] : memref<8x1222xbf16, #tpu.memory_space<vmem>>, vector<8x111xbf16>
    tpu.vector_store %arg9[%c0, %c0_0], %0 {strides = array<i32>} : memref<8x1222xbf16, #tpu.memory_space<vmem>>, vector<8x111xbf16>,
    %c0_1 = arith.constant 0 : index
    %c1111 = arith.constant 1111 : index
    %2 = vector.load %arg9[%c0_1, %c1111] : memref<8x1222xbf16, #tpu.memory_space<vmem>>, vector<8x111xbf16>
    tpu.vector_store %arg9[%c0_1, %c1111], %0 {strides = array<i32>} : memref<8x1222xbf16, #tpu.memory_space<vmem>>, vector<8x111xbf16>,
    %c0_2 = arith.constant 0 : index
    %c0_3 = arith.constant 0 : index
    %c0_4 = arith.constant 0 : index
    %3 = vector.load %arg1[%c0_2, %c0_3, %c0_4] : memref<1x4x1222xbf16, #tpu.memory_space<vmem>>, vector<1x4x1000xbf16>
    %4 = vector.shape_cast %3 : vector<1x4x1000xbf16> to vector<4x1000xbf16>
    %c0_5 = arith.constant 0 : index
    %c0_6 = arith.constant 0 : index
    %5 = vector.load %arg8[%c0_5, %c0_6] : memref<108x1000xbf16, #tpu.memory_space<vmem>>, vector<4x1000xbf16>
    tpu.vector_store %arg8[%c0_5, %c0_6], %4 {strides = array<i32>} : memref<108x1000xbf16, #tpu.memory_space<vmem>>, vector<4x1000xbf16>,
    %c0_7 = arith.constant 0 : index
    %c0_8 = arith.constant 0 : index
    %c1 = arith.constant 1 : index
    %6 = vector.load %arg1[%c0_7, %c0_8, %c1] : memref<1x4x1222xbf16, #tpu.memory_space<vmem>>, vector<1x4x1000xbf16>
    %7 = vector.shape_cast %6 : vector<1x4x1000xbf16> to vector<4x1000xbf16>
    %c4 = arith.constant 4 : index
    %c0_9 = arith.constant 0 : index
    %8 = vector.load %arg8[%c4, %c0_9] : memref<108x1000xbf16, #tpu.memory_space<vmem>>, vector<4x1000xbf16>
    tpu.vector_store %arg8[%c4, %c0_9], %7 {strides = array<i32>} : memref<108x1000xbf16, #tpu.memory_space<vmem>>, vector<4x1000xbf16>,
    %c0_10 = arith.constant 0 : index
    %c0_11 = arith.constant 0 : index
    %c2 = arith.constant 2 : index
    %9 = vector.load %arg1[%c0_10, %c0_11, %c2] : memref<1x4x1222xbf16, #tpu.memory_space<vmem>>, vector<1x4x1000xbf16>
    %10 = vector.shape_cast %9 : vector<1x4x1000xbf16> to vector<4x1000xbf16>
    %c8 = arith.constant 8 : index
    %c0_12 = arith.constant 0 : index
    %11 = vector.load %arg8[%c8, %c0_12] : memref<108x1000xbf16, #tpu.memory_space<vmem>>, vector<4x1000xbf16>
    tpu.vector_store %arg8[%c8, %c0_12], %10 {strides = array<i32>} : memref<108x1000xbf16, #tpu.memory_space<vmem>>, vector<4x1000xbf16>,
    %c0_13 = arith.constant 0 : index
    %c0_14 = arith.constant 0 : index
    %c10 = arith.constant 10 : index
    %12 = vector.load %arg1[%c0_13, %c0_14, %c10] : memref<1x4x1222xbf16, #tpu.memory_space<vmem>>, vector<1x4x1000xbf16>
    %13 = vector.shape_cast %12 : vector<1x4x1000xbf16> to vector<4x1000xbf16>
    %c12 = arith.constant 12 : index
    %c0_15 = arith.constant 0 : index
    %14 = vector.load %arg8[%c12, %c0_15] : memref<108x1000xbf16, #tpu.memory_space<vmem>>, vector<4x1000xbf16>
    tpu.vector_store %arg8[%c12, %c0_15], %13 {strides = array<i32>} : memref<108x1000xbf16, #tpu.memory_space<vmem>>, vector<4x1000xbf16>,
    %c0_16 = arith.constant 0 : index
    %c0_17 = arith.constant 0 : index
    %c11 = arith.constant 11 : index
    %15 = vector.load %arg1[%c0_16, %c0_17, %c11] : memref<1x4x1222xbf16, #tpu.memory_space<vmem>>, vector<1x4x1000xbf16>
    %16 = vector.shape_cast %15 : vector<1x4x1000xbf16> to vector<4x1000xbf16>
    %c16 = arith.constant 16 : index
    %c0_18 = arith.constant 0 : index
    %17 = vector.load %arg8[%c16, %c0_18] : memref<108x1000xbf16, #tpu.memory_space<vmem>>, vector<4x1000xbf16>
    tpu.vector_store %arg8[%c16, %c0_18], %16 {strides = array<i32>} : memref<108x1000xbf16, #tpu.memory_space<vmem>>, vector<4x1000xbf16>,
    %c0_19 = arith.constant 0 : index
    %c0_20 = arith.constant 0 : index
    %c12_21 = arith.constant 12 : index
    %18 = vector.load %arg1[%c0_19, %c0_20, %c12_21] : memref<1x4x1222xbf16, #tpu.memory_space<vmem>>, vector<1x4x1000xbf16>
    %19 = vector.shape_cast %18 : vector<1x4x1000xbf16> to vector<4x1000xbf16>
    %c20 = arith.constant 20 : index
    %c0_22 = arith.constant 0 : index
    %20 = vector.load %arg8[%c20, %c0_22] : memref<108x1000xbf16, #tpu.memory_space<vmem>>, vector<4x1000xbf16>
    tpu.vector_store %arg8[%c20, %c0_22], %19 {strides = array<i32>} : memref<108x1000xbf16, #tpu.memory_space<vmem>>, vector<4x1000xbf16>,
    %c0_23 = arith.constant 0 : index
    %c0_24 = arith.constant 0 : index
    %c20_25 = arith.constant 20 : index
    %21 = vector.load %arg1[%c0_23, %c0_24, %c20_25] : memref<1x4x1222xbf16, #tpu.memory_space<vmem>>, vector<1x4x1000xbf16>
    %22 = vector.shape_cast %21 : vector<1x4x1000xbf16> to vector<4x1000xbf16>
    %c24 = arith.constant 24 : index
    %c0_26 = arith.constant 0 : index
    %23 = vector.load %arg8[%c24, %c0_26] : memref<108x1000xbf16, #tpu.memory_space<vmem>>, vector<4x1000xbf16>
    tpu.vector_store %arg8[%c24, %c0_26], %22 {strides = array<i32>} : memref<108x1000xbf16, #tpu.memory_space<vmem>>, vector<4x1000xbf16>,
    %c0_27 = arith.constant 0 : index
    %c0_28 = arith.constant 0 : index
    %c21 = arith.constant 21 : index
    %24 = vector.load %arg1[%c0_27, %c0_28, %c21] : memref<1x4x1222xbf16, #tpu.memory_space<vmem>>, vector<1x4x1000xbf16>
    %25 = vector.shape_cast %24 : vector<1x4x1000xbf16> to vector<4x1000xbf16>
    %c28 = arith.constant 28 : index
    %c0_29 = arith.constant 0 : index
    %26 = vector.load %arg8[%c28, %c0_29] : memref<108x1000xbf16, #tpu.memory_space<vmem>>, vector<4x1000xbf16>
    tpu.vector_store %arg8[%c28, %c0_29], %25 {strides = array<i32>} : memref<108x1000xbf16, #tpu.memory_space<vmem>>, vector<4x1000xbf16>,
    %c0_30 = arith.constant 0 : index
    %c0_31 = arith.constant 0 : index
    %c22 = arith.constant 22 : index
    %27 = vector.load %arg1[%c0_30, %c0_31, %c22] : memref<1x4x1222xbf16, #tpu.memory_space<vmem>>, vector<1x4x1000xbf16>
    %28 = vector.shape_cast %27 : vector<1x4x1000xbf16> to vector<4x1000xbf16>
    %c32 = arith.constant 32 : index
    %c0_32 = arith.constant 0 : index
    %29 = vector.load %arg8[%c32, %c0_32] : memref<108x1000xbf16, #tpu.memory_space<vmem>>, vector<4x1000xbf16>
    tpu.vector_store %arg8[%c32, %c0_32], %28 {strides = array<i32>} : memref<108x1000xbf16, #tpu.memory_space<vmem>>, vector<4x1000xbf16>,
    %c0_33 = arith.constant 0 : index
    %c0_34 = arith.constant 0 : index
    %c100 = arith.constant 100 : index
    %30 = vector.load %arg1[%c0_33, %c0_34, %c100] : memref<1x4x1222xbf16, #tpu.memory_space<vmem>>, vector<1x4x1000xbf16>
    %31 = vector.shape_cast %30 : vector<1x4x1000xbf16> to vector<4x1000xbf16>
    %c36 = arith.constant 36 : index
    %c0_35 = arith.constant 0 : index
    %32 = vector.load %arg8[%c36, %c0_35] : memref<108x1000xbf16, #tpu.memory_space<vmem>>, vector<4x1000xbf16>
    tpu.vector_store %arg8[%c36, %c0_35], %31 {strides = array<i32>} : memref<108x1000xbf16, #tpu.memory_space<vmem>>, vector<4x1000xbf16>,
    %c0_36 = arith.constant 0 : index
    %c0_37 = arith.constant 0 : index
    %c101 = arith.constant 101 : index
    %33 = vector.load %arg1[%c0_36, %c0_37, %c101] : memref<1x4x1222xbf16, #tpu.memory_space<vmem>>, vector<1x4x1000xbf16>
    %34 = vector.shape_cast %33 : vector<1x4x1000xbf16> to vector<4x1000xbf16>
    %c40 = arith.constant 40 : index
    %c0_38 = arith.constant 0 : index
    %35 = vector.load %arg8[%c40, %c0_38] : memref<108x1000xbf16, #tpu.memory_space<vmem>>, vector<4x1000xbf16>
    tpu.vector_store %arg8[%c40, %c0_38], %34 {strides = array<i32>} : memref<108x1000xbf16, #tpu.memory_space<vmem>>, vector<4x1000xbf16>,
    %c0_39 = arith.constant 0 : index
    %c0_40 = arith.constant 0 : index
    %c102 = arith.constant 102 : index
    %36 = vector.load %arg1[%c0_39, %c0_40, %c102] : memref<1x4x1222xbf16, #tpu.memory_space<vmem>>, vector<1x4x1000xbf16>
    %37 = vector.shape_cast %36 : vector<1x4x1000xbf16> to vector<4x1000xbf16>
    %c44 = arith.constant 44 : index
    %c0_41 = arith.constant 0 : index
    %38 = vector.load %arg8[%c44, %c0_41] : memref<108x1000xbf16, #tpu.memory_space<vmem>>, vector<4x1000xbf16>
    tpu.vector_store %arg8[%c44, %c0_41], %37 {strides = array<i32>} : memref<108x1000xbf16, #tpu.memory_space<vmem>>, vector<4x1000xbf16>,
    %c0_42 = arith.constant 0 : index
    %c0_43 = arith.constant 0 : index
    %c110 = arith.constant 110 : index
    %39 = vector.load %arg1[%c0_42, %c0_43, %c110] : memref<1x4x1222xbf16, #tpu.memory_space<vmem>>, vector<1x4x1000xbf16>
    %40 = vector.shape_cast %39 : vector<1x4x1000xbf16> to vector<4x1000xbf16>
    %c48 = arith.constant 48 : index
    %c0_44 = arith.constant 0 : index
    %41 = vector.load %arg8[%c48, %c0_44] : memref<108x1000xbf16, #tpu.memory_space<vmem>>, vector<4x1000xbf16>
    tpu.vector_store %arg8[%c48, %c0_44], %40 {strides = array<i32>} : memref<108x1000xbf16, #tpu.memory_space<vmem>>, vector<4x1000xbf16>,
    %c0_45 = arith.constant 0 : index
    %c0_46 = arith.constant 0 : index
    %c111 = arith.constant 111 : index
    %42 = vector.load %arg1[%c0_45, %c0_46, %c111] : memref<1x4x1222xbf16, #tpu.memory_space<vmem>>, vector<1x4x1000xbf16>
    %43 = vector.shape_cast %42 : vector<1x4x1000xbf16> to vector<4x1000xbf16>
    %c52 = arith.constant 52 : index
    %c0_47 = arith.constant 0 : index
    %44 = vector.load %arg8[%c52, %c0_47] : memref<108x1000xbf16, #tpu.memory_space<vmem>>, vector<4x1000xbf16>
    tpu.vector_store %arg8[%c52, %c0_47], %43 {strides = array<i32>} : memref<108x1000xbf16, #tpu.memory_space<vmem>>, vector<4x1000xbf16>,
    %c0_48 = arith.constant 0 : index
    %c0_49 = arith.constant 0 : index
    %c112 = arith.constant 112 : index
    %45 = vector.load %arg1[%c0_48, %c0_49, %c112] : memref<1x4x1222xbf16, #tpu.memory_space<vmem>>, vector<1x4x1000xbf16>
    %46 = vector.shape_cast %45 : vector<1x4x1000xbf16> to vector<4x1000xbf16>
    %c56 = arith.constant 56 : index
    %c0_50 = arith.constant 0 : index
    %47 = vector.load %arg8[%c56, %c0_50] : memref<108x1000xbf16, #tpu.memory_space<vmem>>, vector<4x1000xbf16>
    tpu.vector_store %arg8[%c56, %c0_50], %46 {strides = array<i32>} : memref<108x1000xbf16, #tpu.memory_space<vmem>>, vector<4x1000xbf16>,
    %c0_51 = arith.constant 0 : index
    %c0_52 = arith.constant 0 : index
    %c120 = arith.constant 120 : index
    %48 = vector.load %arg1[%c0_51, %c0_52, %c120] : memref<1x4x1222xbf16, #tpu.memory_space<vmem>>, vector<1x4x1000xbf16>
    %49 = vector.shape_cast %48 : vector<1x4x1000xbf16> to vector<4x1000xbf16>
    %c60 = arith.constant 60 : index
    %c0_53 = arith.constant 0 : index
    %50 = vector.load %arg8[%c60, %c0_53] : memref<108x1000xbf16, #tpu.memory_space<vmem>>, vector<4x1000xbf16>
    tpu.vector_store %arg8[%c60, %c0_53], %49 {strides = array<i32>} : memref<108x1000xbf16, #tpu.memory_space<vmem>>, vector<4x1000xbf16>,
    %c0_54 = arith.constant 0 : index
    %c0_55 = arith.constant 0 : index
    %c121 = arith.constant 121 : index
    %51 = vector.load %arg1[%c0_54, %c0_55, %c121] : memref<1x4x1222xbf16, #tpu.memory_space<vmem>>, vector<1x4x1000xbf16>
    %52 = vector.shape_cast %51 : vector<1x4x1000xbf16> to vector<4x1000xbf16>
    %c64 = arith.constant 64 : index
    %c0_56 = arith.constant 0 : index
    %53 = vector.load %arg8[%c64, %c0_56] : memref<108x1000xbf16, #tpu.memory_space<vmem>>, vector<4x1000xbf16>
    tpu.vector_store %arg8[%c64, %c0_56], %52 {strides = array<i32>} : memref<108x1000xbf16, #tpu.memory_space<vmem>>, vector<4x1000xbf16>,
    %c0_57 = arith.constant 0 : index
    %c0_58 = arith.constant 0 : index
    %c122 = arith.constant 122 : index
    %54 = vector.load %arg1[%c0_57, %c0_58, %c122] : memref<1x4x1222xbf16, #tpu.memory_space<vmem>>, vector<1x4x1000xbf16>
    %55 = vector.shape_cast %54 : vector<1x4x1000xbf16> to vector<4x1000xbf16>
    %c68 = arith.constant 68 : index
    %c0_59 = arith.constant 0 : index
    %56 = vector.load %arg8[%c68, %c0_59] : memref<108x1000xbf16, #tpu.memory_space<vmem>>, vector<4x1000xbf16>
    tpu.vector_store %arg8[%c68, %c0_59], %55 {strides = array<i32>} : memref<108x1000xbf16, #tpu.memory_space<vmem>>, vector<4x1000xbf16>,
    %c0_60 = arith.constant 0 : index
    %c0_61 = arith.constant 0 : index
    %c200 = arith.constant 200 : index
    %57 = vector.load %arg1[%c0_60, %c0_61, %c200] : memref<1x4x1222xbf16, #tpu.memory_space<vmem>>, vector<1x4x1000xbf16>
    %58 = vector.shape_cast %57 : vector<1x4x1000xbf16> to vector<4x1000xbf16>
    %c72 = arith.constant 72 : index
    %c0_62 = arith.constant 0 : index
    %59 = vector.load %arg8[%c72, %c0_62] : memref<108x1000xbf16, #tpu.memory_space<vmem>>, vector<4x1000xbf16>
    tpu.vector_store %arg8[%c72, %c0_62], %58 {strides = array<i32>} : memref<108x1000xbf16, #tpu.memory_space<vmem>>, vector<4x1000xbf16>,
    %c0_63 = arith.constant 0 : index
    %c0_64 = arith.constant 0 : index
    %c201 = arith.constant 201 : index
    %60 = vector.load %arg1[%c0_63, %c0_64, %c201] : memref<1x4x1222xbf16, #tpu.memory_space<vmem>>, vector<1x4x1000xbf16>
    %61 = vector.shape_cast %60 : vector<1x4x1000xbf16> to vector<4x1000xbf16>
    %c76 = arith.constant 76 : index
    %c0_65 = arith.constant 0 : index
    %62 = vector.load %arg8[%c76, %c0_65] : memref<108x1000xbf16, #tpu.memory_space<vmem>>, vector<4x1000xbf16>
    tpu.vector_store %arg8[%c76, %c0_65], %61 {strides = array<i32>} : memref<108x1000xbf16, #tpu.memory_space<vmem>>, vector<4x1000xbf16>,
    %c0_66 = arith.constant 0 : index
    %c0_67 = arith.constant 0 : index
    %c202 = arith.constant 202 : index
    %63 = vector.load %arg1[%c0_66, %c0_67, %c202] : memref<1x4x1222xbf16, #tpu.memory_space<vmem>>, vector<1x4x1000xbf16>
    %64 = vector.shape_cast %63 : vector<1x4x1000xbf16> to vector<4x1000xbf16>
    %c80 = arith.constant 80 : index
    %c0_68 = arith.constant 0 : index
    %65 = vector.load %arg8[%c80, %c0_68] : memref<108x1000xbf16, #tpu.memory_space<vmem>>, vector<4x1000xbf16>
    tpu.vector_store %arg8[%c80, %c0_68], %64 {strides = array<i32>} : memref<108x1000xbf16, #tpu.memory_space<vmem>>, vector<4x1000xbf16>,
    %c0_69 = arith.constant 0 : index
    %c0_70 = arith.constant 0 : index
    %c210 = arith.constant 210 : index
    %66 = vector.load %arg1[%c0_69, %c0_70, %c210] : memref<1x4x1222xbf16, #tpu.memory_space<vmem>>, vector<1x4x1000xbf16>
    %67 = vector.shape_cast %66 : vector<1x4x1000xbf16> to vector<4x1000xbf16>
    %c84 = arith.constant 84 : index
    %c0_71 = arith.constant 0 : index
    %68 = vector.load %arg8[%c84, %c0_71] : memref<108x1000xbf16, #tpu.memory_space<vmem>>, vector<4x1000xbf16>
    tpu.vector_store %arg8[%c84, %c0_71], %67 {strides = array<i32>} : memref<108x1000xbf16, #tpu.memory_space<vmem>>, vector<4x1000xbf16>,
    %c0_72 = arith.constant 0 : index
    %c0_73 = arith.constant 0 : index
    %c211 = arith.constant 211 : index
    %69 = vector.load %arg1[%c0_72, %c0_73, %c211] : memref<1x4x1222xbf16, #tpu.memory_space<vmem>>, vector<1x4x1000xbf16>
    %70 = vector.shape_cast %69 : vector<1x4x1000xbf16> to vector<4x1000xbf16>
    %c88 = arith.constant 88 : index
    %c0_74 = arith.constant 0 : index
    %71 = vector.load %arg8[%c88, %c0_74] : memref<108x1000xbf16, #tpu.memory_space<vmem>>, vector<4x1000xbf16>
    tpu.vector_store %arg8[%c88, %c0_74], %70 {strides = array<i32>} : memref<108x1000xbf16, #tpu.memory_space<vmem>>, vector<4x1000xbf16>,
    %c0_75 = arith.constant 0 : index
    %c0_76 = arith.constant 0 : index
    %c212 = arith.constant 212 : index
    %72 = vector.load %arg1[%c0_75, %c0_76, %c212] : memref<1x4x1222xbf16, #tpu.memory_space<vmem>>, vector<1x4x1000xbf16>
    %73 = vector.shape_cast %72 : vector<1x4x1000xbf16> to vector<4x1000xbf16>
    %c92 = arith.constant 92 : index
    %c0_77 = arith.constant 0 : index
    %74 = vector.load %arg8[%c92, %c0_77] : memref<108x1000xbf16, #tpu.memory_space<vmem>>, vector<4x1000xbf16>
    tpu.vector_store %arg8[%c92, %c0_77], %73 {strides = array<i32>} : memref<108x1000xbf16, #tpu.memory_space<vmem>>, vector<4x1000xbf16>,
    %c0_78 = arith.constant 0 : index
    %c0_79 = arith.constant 0 : index
    %c220 = arith.constant 220 : index
    %75 = vector.load %arg1[%c0_78, %c0_79, %c220] : memref<1x4x1222xbf16, #tpu.memory_space<vmem>>, vector<1x4x1000xbf16>
    %76 = vector.shape_cast %75 : vector<1x4x1000xbf16> to vector<4x1000xbf16>
    %c96 = arith.constant 96 : index
    %c0_80 = arith.constant 0 : index
    %77 = vector.load %arg8[%c96, %c0_80] : memref<108x1000xbf16, #tpu.memory_space<vmem>>, vector<4x1000xbf16>
    tpu.vector_store %arg8[%c96, %c0_80], %76 {strides = array<i32>} : memref<108x1000xbf16, #tpu.memory_space<vmem>>, vector<4x1000xbf16>,
    %c0_81 = arith.constant 0 : index
    %c0_82 = arith.constant 0 : index
    %c221 = arith.constant 221 : index
    %78 = vector.load %arg1[%c0_81, %c0_82, %c221] : memref<1x4x1222xbf16, #tpu.memory_space<vmem>>, vector<1x4x1000xbf16>
    %79 = vector.shape_cast %78 : vector<1x4x1000xbf16> to vector<4x1000xbf16>
    %c100_83 = arith.constant 100 : index
    %c0_84 = arith.constant 0 : index
    %80 = vector.load %arg8[%c100_83, %c0_84] : memref<108x1000xbf16, #tpu.memory_space<vmem>>, vector<4x1000xbf16>
    tpu.vector_store %arg8[%c100_83, %c0_84], %79 {strides = array<i32>} : memref<108x1000xbf16, #tpu.memory_space<vmem>>, vector<4x1000xbf16>,
    %c0_85 = arith.constant 0 : index
    %c0_86 = arith.constant 0 : index
    %c222 = arith.constant 222 : index
    %81 = vector.load %arg1[%c0_85, %c0_86, %c222] : memref<1x4x1222xbf16, #tpu.memory_space<vmem>>, vector<1x4x1000xbf16>
    %82 = vector.shape_cast %81 : vector<1x4x1000xbf16> to vector<4x1000xbf16>
    %c104 = arith.constant 104 : index
    %c0_87 = arith.constant 0 : index
    %83 = vector.load %arg8[%c104, %c0_87] : memref<108x1000xbf16, #tpu.memory_space<vmem>>, vector<4x1000xbf16>
    tpu.vector_store %arg8[%c104, %c0_87], %82 {strides = array<i32>} : memref<108x1000xbf16, #tpu.memory_space<vmem>>, vector<4x1000xbf16>,
    %c0_88 = arith.constant 0 : index
    %c0_89 = arith.constant 0 : index
    %84 = vector.load %arg2[%c0_88, %c0_89] : memref<8x108xbf16, #tpu.memory_space<vmem>>, vector<8x108xbf16>
    %c0_90 = arith.constant 0 : index
    %c0_91 = arith.constant 0 : index
    %85 = vector.load %arg8[%c0_90, %c0_91] : memref<108x1000xbf16, #tpu.memory_space<vmem>>, vector<108x1000xbf16>
    %cst_92 = arith.constant dense<0.000000e+00> : vector<8x1000xf32>
    %86 = tpu.matmul %84, %85, %cst_92 {dimension_numbers = #tpu.dot_dimension_numbers<[1], [0], [0], [1], [0, 0, 1, 1], [], []>} : vector<8x108xbf16>, vector<108x1000xbf16>, vector<8x1000xf32> -> vector<8x1000xf32>
    %c0_93 = arith.constant 0 : index
    %c0_94 = arith.constant 0 : index
    %87 = vector.load %arg3[%c0_93, %c0_94] : memref<8x1xf32, #tpu.memory_space<vmem>>, vector<8x1xf32>
    %88 = vector.broadcast %87 : vector<8x1xf32> to vector<8x1000xf32>
    %89 = arith.addf %86, %88 : vector<8x1000xf32>
    %cst_95 = arith.constant 0.000000e+00 : f32
    %90 = vector.broadcast %cst_95 : f32 to vector<8x1000xf32>
    %91 = arith.maximumf %89, %90 : vector<8x1000xf32>
    %c0_96 = arith.constant 0 : index
    %c0_97 = arith.constant 0 : index
    %92 = vector.load %arg6[%c0_96, %c0_97] : memref<1x1000xf32, #tpu.memory_space<vmem>>, vector<1x1000xf32>
    %93 = vector.broadcast %92 : vector<1x1000xf32> to vector<8x1000xf32>
    %94 = arith.mulf %91, %93 : vector<8x1000xf32>
    %95 = arith.truncf %94 : vector<8x1000xf32> to vector<8x1000xbf16>
    %c0_98 = arith.constant 0 : index
    %c111_99 = arith.constant 111 : index
    %96 = vector.load %arg9[%c0_98, %c111_99] : memref<8x1222xbf16, #tpu.memory_space<vmem>>, vector<8x1000xbf16>
    tpu.vector_store %arg9[%c0_98, %c111_99], %95 {strides = array<i32>} : memref<8x1222xbf16, #tpu.memory_space<vmem>>, vector<8x1000xbf16>,
    %c0_100 = arith.constant 0 : index
    %c0_101 = arith.constant 0 : index
    %97 = vector.load %arg9[%c0_100, %c0_101] : memref<8x1222xbf16, #tpu.memory_space<vmem>>, vector<8x1000xbf16>
    %c0_102 = arith.constant 0 : index
    %c0_103 = arith.constant 0 : index
    %98 = vector.load %arg10[%c0_102, %c0_103] : memref<220x1000xbf16, #tpu.memory_space<vmem>>, vector<8x1000xbf16>
    tpu.vector_store %arg10[%c0_102, %c0_103], %97 {strides = array<i32>} : memref<220x1000xbf16, #tpu.memory_space<vmem>>, vector<8x1000xbf16>,
    %c0_104 = arith.constant 0 : index
    %c1_105 = arith.constant 1 : index
    %99 = vector.load %arg9[%c0_104, %c1_105] : memref<8x1222xbf16, #tpu.memory_space<vmem>>, vector<8x1000xbf16>
    %c8_106 = arith.constant 8 : index
    %c0_107 = arith.constant 0 : index
    %100 = vector.load %arg10[%c8_106, %c0_107] : memref<220x1000xbf16, #tpu.memory_space<vmem>>, vector<8x1000xbf16>
    tpu.vector_store %arg10[%c8_106, %c0_107], %99 {strides = array<i32>} : memref<220x1000xbf16, #tpu.memory_space<vmem>>, vector<8x1000xbf16>,
    %c0_108 = arith.constant 0 : index
    %c2_109 = arith.constant 2 : index
    %101 = vector.load %arg9[%c0_108, %c2_109] : memref<8x1222xbf16, #tpu.memory_space<vmem>>, vector<8x1000xbf16>
    %c16_110 = arith.constant 16 : index
    %c0_111 = arith.constant 0 : index
    %102 = vector.load %arg10[%c16_110, %c0_111] : memref<220x1000xbf16, #tpu.memory_space<vmem>>, vector<8x1000xbf16>
    tpu.vector_store %arg10[%c16_110, %c0_111], %101 {strides = array<i32>} : memref<220x1000xbf16, #tpu.memory_space<vmem>>, vector<8x1000xbf16>,
    %c0_112 = arith.constant 0 : index
    %c10_113 = arith.constant 10 : index
    %103 = vector.load %arg9[%c0_112, %c10_113] : memref<8x1222xbf16, #tpu.memory_space<vmem>>, vector<8x1000xbf16>
    %c24_114 = arith.constant 24 : index
    %c0_115 = arith.constant 0 : index
    %104 = vector.load %arg10[%c24_114, %c0_115] : memref<220x1000xbf16, #tpu.memory_space<vmem>>, vector<8x1000xbf16>
    tpu.vector_store %arg10[%c24_114, %c0_115], %103 {strides = array<i32>} : memref<220x1000xbf16, #tpu.memory_space<vmem>>, vector<8x1000xbf16>,
    %c0_116 = arith.constant 0 : index
    %c11_117 = arith.constant 11 : index
    %105 = vector.load %arg9[%c0_116, %c11_117] : memref<8x1222xbf16, #tpu.memory_space<vmem>>, vector<8x1000xbf16>
    %c32_118 = arith.constant 32 : index
    %c0_119 = arith.constant 0 : index
    %106 = vector.load %arg10[%c32_118, %c0_119] : memref<220x1000xbf16, #tpu.memory_space<vmem>>, vector<8x1000xbf16>
    tpu.vector_store %arg10[%c32_118, %c0_119], %105 {strides = array<i32>} : memref<220x1000xbf16, #tpu.memory_space<vmem>>, vector<8x1000xbf16>,
    %c0_120 = arith.constant 0 : index
    %c12_121 = arith.constant 12 : index
    %107 = vector.load %arg9[%c0_120, %c12_121] : memref<8x1222xbf16, #tpu.memory_space<vmem>>, vector<8x1000xbf16>
    %c40_122 = arith.constant 40 : index
    %c0_123 = arith.constant 0 : index
    %108 = vector.load %arg10[%c40_122, %c0_123] : memref<220x1000xbf16, #tpu.memory_space<vmem>>, vector<8x1000xbf16>
    tpu.vector_store %arg10[%c40_122, %c0_123], %107 {strides = array<i32>} : memref<220x1000xbf16, #tpu.memory_space<vmem>>, vector<8x1000xbf16>,
    %c0_124 = arith.constant 0 : index
    %c20_125 = arith.constant 20 : index
    %109 = vector.load %arg9[%c0_124, %c20_125] : memref<8x1222xbf16, #tpu.memory_space<vmem>>, vector<8x1000xbf16>
    %c48_126 = arith.constant 48 : index
    %c0_127 = arith.constant 0 : index
    %110 = vector.load %arg10[%c48_126, %c0_127] : memref<220x1000xbf16, #tpu.memory_space<vmem>>, vector<8x1000xbf16>
    tpu.vector_store %arg10[%c48_126, %c0_127], %109 {strides = array<i32>} : memref<220x1000xbf16, #tpu.memory_space<vmem>>, vector<8x1000xbf16>,
    %c0_128 = arith.constant 0 : index
    %c21_129 = arith.constant 21 : index
    %111 = vector.load %arg9[%c0_128, %c21_129] : memref<8x1222xbf16, #tpu.memory_space<vmem>>, vector<8x1000xbf16>
    %c56_130 = arith.constant 56 : index
    %c0_131 = arith.constant 0 : index
    %112 = vector.load %arg10[%c56_130, %c0_131] : memref<220x1000xbf16, #tpu.memory_space<vmem>>, vector<8x1000xbf16>
    tpu.vector_store %arg10[%c56_130, %c0_131], %111 {strides = array<i32>} : memref<220x1000xbf16, #tpu.memory_space<vmem>>, vector<8x1000xbf16>,
    %c0_132 = arith.constant 0 : index
    %c22_133 = arith.constant 22 : index
    %113 = vector.load %arg9[%c0_132, %c22_133] : memref<8x1222xbf16, #tpu.memory_space<vmem>>, vector<8x1000xbf16>
    %c64_134 = arith.constant 64 : index
    %c0_135 = arith.constant 0 : index
    %114 = vector.load %arg10[%c64_134, %c0_135] : memref<220x1000xbf16, #tpu.memory_space<vmem>>, vector<8x1000xbf16>
    tpu.vector_store %arg10[%c64_134, %c0_135], %113 {strides = array<i32>} : memref<220x1000xbf16, #tpu.memory_space<vmem>>, vector<8x1000xbf16>,
    %c0_136 = arith.constant 0 : index
    %c100_137 = arith.constant 100 : index
    %115 = vector.load %arg9[%c0_136, %c100_137] : memref<8x1222xbf16, #tpu.memory_space<vmem>>, vector<8x1000xbf16>
    %c72_138 = arith.constant 72 : index
    %c0_139 = arith.constant 0 : index
    %116 = vector.load %arg10[%c72_138, %c0_139] : memref<220x1000xbf16, #tpu.memory_space<vmem>>, vector<8x1000xbf16>
    tpu.vector_store %arg10[%c72_138, %c0_139], %115 {strides = array<i32>} : memref<220x1000xbf16, #tpu.memory_space<vmem>>, vector<8x1000xbf16>,
    %c0_140 = arith.constant 0 : index
    %c101_141 = arith.constant 101 : index
    %117 = vector.load %arg9[%c0_140, %c101_141] : memref<8x1222xbf16, #tpu.memory_space<vmem>>, vector<8x1000xbf16>
    %c80_142 = arith.constant 80 : index
    %c0_143 = arith.constant 0 : index
    %118 = vector.load %arg10[%c80_142, %c0_143] : memref<220x1000xbf16, #tpu.memory_space<vmem>>, vector<8x1000xbf16>
    tpu.vector_store %arg10[%c80_142, %c0_143], %117 {strides = array<i32>} : memref<220x1000xbf16, #tpu.memory_space<vmem>>, vector<8x1000xbf16>,
    %c0_144 = arith.constant 0 : index
    %c102_145 = arith.constant 102 : index
    %119 = vector.load %arg9[%c0_144, %c102_145] : memref<8x1222xbf16, #tpu.memory_space<vmem>>, vector<8x1000xbf16>
    %c88_146 = arith.constant 88 : index
    %c0_147 = arith.constant 0 : index
    %120 = vector.load %arg10[%c88_146, %c0_147] : memref<220x1000xbf16, #tpu.memory_space<vmem>>, vector<8x1000xbf16>
    tpu.vector_store %arg10[%c88_146, %c0_147], %119 {strides = array<i32>} : memref<220x1000xbf16, #tpu.memory_space<vmem>>, vector<8x1000xbf16>,
    %c0_148 = arith.constant 0 : index
    %c110_149 = arith.constant 110 : index
    %121 = vector.load %arg9[%c0_148, %c110_149] : memref<8x1222xbf16, #tpu.memory_space<vmem>>, vector<8x1000xbf16>
    %c96_150 = arith.constant 96 : index
    %c0_151 = arith.constant 0 : index
    %122 = vector.load %arg10[%c96_150, %c0_151] : memref<220x1000xbf16, #tpu.memory_space<vmem>>, vector<8x1000xbf16>
    tpu.vector_store %arg10[%c96_150, %c0_151], %121 {strides = array<i32>} : memref<220x1000xbf16, #tpu.memory_space<vmem>>, vector<8x1000xbf16>,
    %c0_152 = arith.constant 0 : index
    %c111_153 = arith.constant 111 : index
    %123 = vector.load %arg9[%c0_152, %c111_153] : memref<8x1222xbf16, #tpu.memory_space<vmem>>, vector<8x1000xbf16>
    %c104_154 = arith.constant 104 : index
    %c0_155 = arith.constant 0 : index
    %124 = vector.load %arg10[%c104_154, %c0_155] : memref<220x1000xbf16, #tpu.memory_space<vmem>>, vector<8x1000xbf16>
    tpu.vector_store %arg10[%c104_154, %c0_155], %123 {strides = array<i32>} : memref<220x1000xbf16, #tpu.memory_space<vmem>>, vector<8x1000xbf16>,
    %c0_156 = arith.constant 0 : index
    %c112_157 = arith.constant 112 : index
    %125 = vector.load %arg9[%c0_156, %c112_157] : memref<8x1222xbf16, #tpu.memory_space<vmem>>, vector<8x1000xbf16>
    %c112_158 = arith.constant 112 : index
    %c0_159 = arith.constant 0 : index
    %126 = vector.load %arg10[%c112_158, %c0_159] : memref<220x1000xbf16, #tpu.memory_space<vmem>>, vector<8x1000xbf16>
    tpu.vector_store %arg10[%c112_158, %c0_159], %125 {strides = array<i32>} : memref<220x1000xbf16, #tpu.memory_space<vmem>>, vector<8x1000xbf16>,
    %c0_160 = arith.constant 0 : index
    %c120_161 = arith.constant 120 : index
    %127 = vector.load %arg9[%c0_160, %c120_161] : memref<8x1222xbf16, #tpu.memory_space<vmem>>, vector<8x1000xbf16>
    %c120_162 = arith.constant 120 : index
    %c0_163 = arith.constant 0 : index
    %128 = vector.load %arg10[%c120_162, %c0_163] : memref<220x1000xbf16, #tpu.memory_space<vmem>>, vector<8x1000xbf16>
    tpu.vector_store %arg10[%c120_162, %c0_163], %127 {strides = array<i32>} : memref<220x1000xbf16, #tpu.memory_space<vmem>>, vector<8x1000xbf16>,
    %c0_164 = arith.constant 0 : index
    %c121_165 = arith.constant 121 : index
    %129 = vector.load %arg9[%c0_164, %c121_165] : memref<8x1222xbf16, #tpu.memory_space<vmem>>, vector<8x1000xbf16>
    %c128 = arith.constant 128 : index
    %c0_166 = arith.constant 0 : index
    %130 = vector.load %arg10[%c128, %c0_166] : memref<220x1000xbf16, #tpu.memory_space<vmem>>, vector<8x1000xbf16>
    tpu.vector_store %arg10[%c128, %c0_166], %129 {strides = array<i32>} : memref<220x1000xbf16, #tpu.memory_space<vmem>>, vector<8x1000xbf16>,
    %c0_167 = arith.constant 0 : index
    %c122_168 = arith.constant 122 : index
    %131 = vector.load %arg9[%c0_167, %c122_168] : memref<8x1222xbf16, #tpu.memory_space<vmem>>, vector<8x1000xbf16>
    %c136 = arith.constant 136 : index
    %c0_169 = arith.constant 0 : index
    %132 = vector.load %arg10[%c136, %c0_169] : memref<220x1000xbf16, #tpu.memory_space<vmem>>, vector<8x1000xbf16>
    tpu.vector_store %arg10[%c136, %c0_169], %131 {strides = array<i32>} : memref<220x1000xbf16, #tpu.memory_space<vmem>>, vector<8x1000xbf16>,
    %c0_170 = arith.constant 0 : index
    %c200_171 = arith.constant 200 : index
    %133 = vector.load %arg9[%c0_170, %c200_171] : memref<8x1222xbf16, #tpu.memory_space<vmem>>, vector<8x1000xbf16>
    %c144 = arith.constant 144 : index
    %c0_172 = arith.constant 0 : index
    %134 = vector.load %arg10[%c144, %c0_172] : memref<220x1000xbf16, #tpu.memory_space<vmem>>, vector<8x1000xbf16>
    tpu.vector_store %arg10[%c144, %c0_172], %133 {strides = array<i32>} : memref<220x1000xbf16, #tpu.memory_space<vmem>>, vector<8x1000xbf16>,
    %c0_173 = arith.constant 0 : index
    %c201_174 = arith.constant 201 : index
    %135 = vector.load %arg9[%c0_173, %c201_174] : memref<8x1222xbf16, #tpu.memory_space<vmem>>, vector<8x1000xbf16>
    %c152 = arith.constant 152 : index
    %c0_175 = arith.constant 0 : index
    %136 = vector.load %arg10[%c152, %c0_175] : memref<220x1000xbf16, #tpu.memory_space<vmem>>, vector<8x1000xbf16>
    tpu.vector_store %arg10[%c152, %c0_175], %135 {strides = array<i32>} : memref<220x1000xbf16, #tpu.memory_space<vmem>>, vector<8x1000xbf16>,
    %c0_176 = arith.constant 0 : index
    %c202_177 = arith.constant 202 : index
    %137 = vector.load %arg9[%c0_176, %c202_177] : memref<8x1222xbf16, #tpu.memory_space<vmem>>, vector<8x1000xbf16>
    %c160 = arith.constant 160 : index
    %c0_178 = arith.constant 0 : index
    %138 = vector.load %arg10[%c160, %c0_178] : memref<220x1000xbf16, #tpu.memory_space<vmem>>, vector<8x1000xbf16>
    tpu.vector_store %arg10[%c160, %c0_178], %137 {strides = array<i32>} : memref<220x1000xbf16, #tpu.memory_space<vmem>>, vector<8x1000xbf16>,
    %c0_179 = arith.constant 0 : index
    %c210_180 = arith.constant 210 : index
    %139 = vector.load %arg9[%c0_179, %c210_180] : memref<8x1222xbf16, #tpu.memory_space<vmem>>, vector<8x1000xbf16>
    %c168 = arith.constant 168 : index
    %c0_181 = arith.constant 0 : index
    %140 = vector.load %arg10[%c168, %c0_181] : memref<220x1000xbf16, #tpu.memory_space<vmem>>, vector<8x1000xbf16>
    tpu.vector_store %arg10[%c168, %c0_181], %139 {strides = array<i32>} : memref<220x1000xbf16, #tpu.memory_space<vmem>>, vector<8x1000xbf16>,
    %c0_182 = arith.constant 0 : index
    %c211_183 = arith.constant 211 : index
    %141 = vector.load %arg9[%c0_182, %c211_183] : memref<8x1222xbf16, #tpu.memory_space<vmem>>, vector<8x1000xbf16>
    %c176 = arith.constant 176 : index
    %c0_184 = arith.constant 0 : index
    %142 = vector.load %arg10[%c176, %c0_184] : memref<220x1000xbf16, #tpu.memory_space<vmem>>, vector<8x1000xbf16>
    tpu.vector_store %arg10[%c176, %c0_184], %141 {strides = array<i32>} : memref<220x1000xbf16, #tpu.memory_space<vmem>>, vector<8x1000xbf16>,
    %c0_185 = arith.constant 0 : index
    %c212_186 = arith.constant 212 : index
    %143 = vector.load %arg9[%c0_185, %c212_186] : memref<8x1222xbf16, #tpu.memory_space<vmem>>, vector<8x1000xbf16>
    %c184 = arith.constant 184 : index
    %c0_187 = arith.constant 0 : index
    %144 = vector.load %arg10[%c184, %c0_187] : memref<220x1000xbf16, #tpu.memory_space<vmem>>, vector<8x1000xbf16>
    tpu.vector_store %arg10[%c184, %c0_187], %143 {strides = array<i32>} : memref<220x1000xbf16, #tpu.memory_space<vmem>>, vector<8x1000xbf16>,
    %c0_188 = arith.constant 0 : index
    %c220_189 = arith.constant 220 : index
    %145 = vector.load %arg9[%c0_188, %c220_189] : memref<8x1222xbf16, #tpu.memory_space<vmem>>, vector<8x1000xbf16>
    %c192 = arith.constant 192 : index
    %c0_190 = arith.constant 0 : index
    %146 = vector.load %arg10[%c192, %c0_190] : memref<220x1000xbf16, #tpu.memory_space<vmem>>, vector<8x1000xbf16>
    tpu.vector_store %arg10[%c192, %c0_190], %145 {strides = array<i32>} : memref<220x1000xbf16, #tpu.memory_space<vmem>>, vector<8x1000xbf16>,
    %c0_191 = arith.constant 0 : index
    %c221_192 = arith.constant 221 : index
    %147 = vector.load %arg9[%c0_191, %c221_192] : memref<8x1222xbf16, #tpu.memory_space<vmem>>, vector<8x1000xbf16>
    %c200_193 = arith.constant 200 : index
    %c0_194 = arith.constant 0 : index
    %148 = vector.load %arg10[%c200_193, %c0_194] : memref<220x1000xbf16, #tpu.memory_space<vmem>>, vector<8x1000xbf16>
    tpu.vector_store %arg10[%c200_193, %c0_194], %147 {strides = array<i32>} : memref<220x1000xbf16, #tpu.memory_space<vmem>>, vector<8x1000xbf16>,
    %c0_195 = arith.constant 0 : index
    %c222_196 = arith.constant 222 : index
    %149 = vector.load %arg9[%c0_195, %c222_196] : memref<8x1222xbf16, #tpu.memory_space<vmem>>, vector<8x1000xbf16>
    %c208 = arith.constant 208 : index
    %c0_197 = arith.constant 0 : index
    %150 = vector.load %arg10[%c208, %c0_197] : memref<220x1000xbf16, #tpu.memory_space<vmem>>, vector<8x1000xbf16>
    tpu.vector_store %arg10[%c208, %c0_197], %149 {strides = array<i32>} : memref<220x1000xbf16, #tpu.memory_space<vmem>>, vector<8x1000xbf16>,
    %c0_198 = arith.constant 0 : index
    %c0_199 = arith.constant 0 : index
    %c111_200 = arith.constant 111 : index
    %151 = vector.load %arg1[%c0_198, %c0_199, %c111_200] : memref<1x4x1222xbf16, #tpu.memory_space<vmem>>, vector<1x4x1000xbf16>
    %152 = vector.shape_cast %151 : vector<1x4x1000xbf16> to vector<4x1000xbf16>
    %c216 = arith.constant 216 : index
    %c0_201 = arith.constant 0 : index
    %153 = vector.load %arg10[%c216, %c0_201] : memref<220x1000xbf16, #tpu.memory_space<vmem>>, vector<4x1000xbf16>
    tpu.vector_store %arg10[%c216, %c0_201], %152 {strides = array<i32>} : memref<220x1000xbf16, #tpu.memory_space<vmem>>, vector<4x1000xbf16>,
    %c0_202 = arith.constant 0 : index
    %c0_203 = arith.constant 0 : index
    %154 = vector.load %arg4[%c0_202, %c0_203] : memref<8x220xbf16, #tpu.memory_space<vmem>>, vector<8x220xbf16>
    %c0_204 = arith.constant 0 : index
    %c0_205 = arith.constant 0 : index
    %155 = vector.load %arg10[%c0_204, %c0_205] : memref<220x1000xbf16, #tpu.memory_space<vmem>>, vector<220x1000xbf16>
    %cst_206 = arith.constant dense<0.000000e+00> : vector<8x1000xf32>
    %156 = tpu.matmul %154, %155, %cst_206 {dimension_numbers = #tpu.dot_dimension_numbers<[1], [0], [0], [1], [0, 0, 1, 1], [], []>} : vector<8x220xbf16>, vector<220x1000xbf16>, vector<8x1000xf32> -> vector<8x1000xf32>
    %c0_207 = arith.constant 0 : index
    %c0_208 = arith.constant 0 : index
    %157 = vector.load %arg5[%c0_207, %c0_208] : memref<8x1xf32, #tpu.memory_space<vmem>>, vector<8x1xf32>
    %158 = vector.broadcast %157 : vector<8x1xf32> to vector<8x1000xf32>
    %159 = arith.addf %156, %158 : vector<8x1000xf32>
    %cst_209 = arith.constant 0.000000e+00 : f32
    %160 = vector.broadcast %cst_209 : f32 to vector<8x1000xf32>
    %161 = arith.maximumf %159, %160 : vector<8x1000xf32>
    %c0_210 = arith.constant 0 : index
    %c0_211 = arith.constant 0 : index
    %c0_212 = arith.constant 0 : index
    %162 = vector.load %arg7[%c0_210, %c0_211, %c0_212] : memref<1x8x1000xf32, #tpu.memory_space<vmem>>, vector<1x8x1000xf32>
    %163 = vector.shape_cast %162 : vector<1x8x1000xf32> to vector<8x1000xf32>
    %164 = vector.shape_cast %161 : vector<8x1000xf32> to vector<1x8x1000xf32>
    tpu.vector_store %arg7[%c0_210, %c0_211, %c0_212], %164 {strides = array<i32>} : memref<1x8x1000xf32, #tpu.memory_space<vmem>>, vector<1x8x1000xf32>,
    return
  }
  func.func @transform_0(%arg0: i32) -> (i32, i32, i32) {
    %c0_i32 = arith.constant 0 : i32
    %c0_i32_0 = arith.constant 0 : i32
    %c0_i32_1 = arith.constant 0 : i32
    return %arg0, %c0_i32, %c0_i32_0 : i32, i32, i32
  }
  func.func @transform_1(%arg0: i32) -> (i32, i32) {
    %c0_i32 = arith.constant 0 : i32
    %c0_i32_0 = arith.constant 0 : i32
    %c0_i32_1 = arith.constant 0 : i32
    return %c0_i32, %c0_i32_0 : i32, i32
  }
  func.func @transform_2(%arg0: i32) -> (i32, i32) {
    %c0_i32 = arith.constant 0 : i32
    %c0_i32_0 = arith.constant 0 : i32
    %c0_i32_1 = arith.constant 0 : i32
    return %c0_i32, %c0_i32_0 : i32, i32
  }
  func.func @transform_3(%arg0: i32) -> (i32, i32) {
    %c0_i32 = arith.constant 0 : i32
    %c0_i32_0 = arith.constant 0 : i32
    %c0_i32_1 = arith.constant 0 : i32
    return %c0_i32, %c0_i32_0 : i32, i32
  }
  func.func @transform_4(%arg0: i32) -> (i32, i32) {
    %c0_i32 = arith.constant 0 : i32
    %c0_i32_0 = arith.constant 0 : i32
    %c0_i32_1 = arith.constant 0 : i32
    return %c0_i32, %c0_i32_0 : i32, i32
  }
  func.func @transform_5(%arg0: i32) -> (i32, i32) {
    %c0_i32 = arith.constant 0 : i32
    %c0_i32_0 = arith.constant 0 : i32
    %c0_i32_1 = arith.constant 0 : i32
    return %c0_i32, %c0_i32_0 : i32, i32
  }
  func.func @transform_6(%arg0: i32) -> (i32, i32, i32) {
    %c0_i32 = arith.constant 0 : i32
    %c0_i32_0 = arith.constant 0 : i32
    %c0_i32_1 = arith.constant 0 : i32
    return %arg0, %c0_i32, %c0_i32_0 : i32, i32, i32
  }
}

</mosaic_0001>

<llo_original>
// kernel: tpu_custom_call.1
$region0: #{tpu_custom_call.1}
  #allocation0 [shape = 'u32[]', space=smem, size = 0x4, offset = 0x4, fixed_abs, tag = 'smem constant byte address 0x4 - core index']
  #allocation1 [shape = 'u32[144,128]{1,0:T(1,128)}', space=vmem, size = 0x12000, scoped, tag = 'internal scratch']
  #allocation2 [shape = 'bf16[108,1000]{1,0:T(8,128)(2,1)}', space=vmem, size = 0x38000, scoped, tag = 'scratch operand']
  #allocation3 [shape = 'bf16[8,1222]{1,0:T(8,128)(2,1)}', space=vmem, size = 0x5000, scoped, tag = 'scratch operand']
  #allocation4 [shape = 'bf16[220,1000]{1,0:T(8,128)(2,1)}', space=vmem, size = 0x70000, scoped, tag = 'scratch operand']
  %s0 = inlined_call_operand.hbm [shape: bf16[2,4,1222], index: 0, kind: input, shape index: {}]
  %s1 = inlined_call_operand.vmem [shape: bf16[8,108], index: 1, kind: input, shape index: {}]
  %s2 = inlined_call_operand.vmem [shape: f32[8,1], index: 2, kind: input, shape index: {}]
  %s3 = inlined_call_operand.vmem [shape: bf16[8,220], index: 3, kind: input, shape index: {}]
  %s4 = inlined_call_operand.vmem [shape: f32[8,1], index: 4, kind: input, shape index: {}]
  %s5 = inlined_call_operand.vmem [shape: f32[1,1000], index: 5, kind: input, shape index: {}]
  %s6 = inlined_call_operand.hbm [shape: f32[2,8,1000], index: 6, kind: output, shape index: {}]
  %s7 = sld [smem:[#allocation0]]
  $region61: #{tpu_custom_call.1} parent=0
    _
  %s9 = ssub.s32 1, %s7
  %s10 = scalar_select 0, %s9, %s7
  $region1: #{tpu_custom_call.1} parent=0
    #allocation5 [shape = 'u8[20480]{0}', space=vmem, size = 0x5000, scoped, tag = 'input window, operand 0']
    #allocation6 [shape = 's32[2]{0}', space=sflag, size = 0x8, scoped, tag = 'scoped memory for tpu_custom_call.1']
    #allocation7 [shape = 's32[2]{0}', space=sflag, size = 0x8, scoped, tag = 'scoped memory for tpu_custom_call.1']
    #allocation8 [shape = 'u8[65536]{0}', space=vmem, size = 0x10000, scoped, tag = 'output window, operand 0']
    %11 = vsyncpa [#allocation6], 0
    %s12 = scalar_lea.sflag [#allocation6], 1
    %13 = vsyncpa %s12, 0
    %14 = vsyncpa [#allocation7], 0
    %s15 = scalar_lea.sflag [#allocation7], 1
    %16 = vsyncpa %s15, 0
    loop: start=0, step=1, limit=4
    $region2: #{tpu_custom_call.1} parent=1 // loop_pre_header
      _
    $region3: #{tpu_custom_call.1} parent=1 // loop_header
      %s18 = sphi 0, %s22
      %p19 = scmp.ge.s32.totalorder %s18, 4
      %s28 = sphi 0, %s30
      %s31 = sphi 0, %s28
      %s32 = sphi 0, %s31
      %s48 = sphi 0, %s32
      %s52 = sphi 0, %s52
      %s54 = sphi 0, %s52
      %s55 = sphi 0, %s54
      %s69 = sphi 0, %s55
      %s73 = sphi 0, %s73
      %s75 = sphi 0, %s73
      %s76 = sphi 0, %s75
      %s90 = sphi 0, %s76
      %s94 = sphi 0, %s94
      %s96 = sphi 0, %s94
      %s97 = sphi 0, %s96
      %s111 = sphi 0, %s97
      %s115 = sphi 0, %s115
      %s117 = sphi 0, %s115
      %s118 = sphi 0, %s117
      %s132 = sphi 0, %s118
      %s136 = sphi 0, %s136
      %s138 = sphi 0, %s136
      %s139 = sphi 0, %s138
      %s153 = sphi 0, %s139
      %s159 = sphi 0, %s161
      %s162 = sphi 0, %s159
      %s163 = sphi 0, %s162
      %s179 = sphi 0, %s163
    $region4: #{tpu_custom_call.1} parent=1 // loop_header_branch
      %21 = sbr.rel (%p19) target = $region8
    $region5: #{tpu_custom_call.1} parent=1 // loop_body
      %s23 = ssub.s32 %s18, 1
      %s24 = ssub.s32 %s18, 2
      %s25 = sadd.s32 %s18, 1
      %s26 = ssub.s32 %s18, %s25
      %p27 = scmp.eq.s32.totalorder %s26, 0
      %s29 = sadd.s32 %s28, 1
      %s30 = scalar_select %p27, %s28, %s29
      %p33 = pneg %p27
      %p34 = scmp.eq.s32.totalorder %s18, 1
      %p35 = por %p33, %p34
      %p36 = scmp.ne.s32.totalorder %s28, %s31
      %p37 = scmp.eq.s32.totalorder %s18, 0
      %p38 = por %p36, %p37
      %p39 = scmp.ne.s32.totalorder %s28, %s31
      %p40 = scmp.eq.s32.totalorder %s23, 1
      %p41 = por %p39, %p40
      %p42 = scmp.ne.s32.totalorder %s31, %s32
      %p43 = scmp.eq.s32.totalorder %s23, 0
      %p44 = por %p42, %p43
      %p45 = scmp.ne.s32.totalorder %s31, %s32
      %p46 = scmp.eq.s32.totalorder %s24, 1
      %p47 = por %p45, %p46
      %p49 = scmp.ne.s32.totalorder %s32, %s48
      %p50 = scmp.eq.s32.totalorder %s24, 0
      %p51 = por %p49, %p50
      %s53 = sadd.s32 %s52, 1
      %p56 = scmp.eq.s32.totalorder %s18, 1
      %p57 = scmp.ne.s32.totalorder %s52, %s54
      %p58 = scmp.eq.s32.totalorder %s18, 0
      %p59 = por %p57, %p58
      %p60 = scmp.ne.s32.totalorder %s52, %s54
      %p61 = scmp.eq.s32.totalorder %s23, 1
      %p62 = por %p60, %p61
      %p63 = scmp.ne.s32.totalorder %s54, %s55
      %p64 = scmp.eq.s32.totalorder %s23, 0
      %p65 = por %p63, %p64
      %p66 = scmp.ne.s32.totalorder %s54, %s55
      %p67 = scmp.eq.s32.totalorder %s24, 1
      %p68 = por %p66, %p67
      %p70 = scmp.ne.s32.totalorder %s55, %s69
      %p71 = scmp.eq.s32.totalorder %s24, 0
      %p72 = por %p70, %p71
      %s74 = sadd.s32 %s73, 1
      %p77 = scmp.eq.s32.totalorder %s18, 1
      %p78 = scmp.ne.s32.totalorder %s73, %s75
      %p79 = scmp.eq.s32.totalorder %s18, 0
      %p80 = por %p78, %p79
      %p81 = scmp.ne.s32.totalorder %s73, %s75
      %p82 = scmp.eq.s32.totalorder %s23, 1
      %p83 = por %p81, %p82
      %p84 = scmp.ne.s32.totalorder %s75, %s76
      %p85 = scmp.eq.s32.totalorder %s23, 0
      %p86 = por %p84, %p85
      %p87 = scmp.ne.s32.totalorder %s75, %s76
      %p88 = scmp.eq.s32.totalorder %s24, 1
      %p89 = por %p87, %p88
      %p91 = scmp.ne.s32.totalorder %s76, %s90
      %p92 = scmp.eq.s32.totalorder %s24, 0
      %p93 = por %p91, %p92
      %s95 = sadd.s32 %s94, 1
      %p98 = scmp.eq.s32.totalorder %s18, 1
      %p99 = scmp.ne.s32.totalorder %s94, %s96
      %p100 = scmp.eq.s32.totalorder %s18, 0
      %p101 = por %p99, %p100
      %p102 = scmp.ne.s32.totalorder %s94, %s96
      %p103 = scmp.eq.s32.totalorder %s23, 1
      %p104 = por %p102, %p103
      %p105 = scmp.ne.s32.totalorder %s96, %s97
      %p106 = scmp.eq.s32.totalorder %s23, 0
      %p107 = por %p105, %p106
      %p108 = scmp.ne.s32.totalorder %s96, %s97
      %p109 = scmp.eq.s32.totalorder %s24, 1
      %p110 = por %p108, %p109
      %p112 = scmp.ne.s32.totalorder %s97, %s111
      %p113 = scmp.eq.s32.totalorder %s24, 0
      %p114 = por %p112, %p113
      %s116 = sadd.s32 %s115, 1
      %p119 = scmp.eq.s32.totalorder %s18, 1
      %p120 = scmp.ne.s32.totalorder %s115, %s117
      %p121 = scmp.eq.s32.totalorder %s18, 0
      %p122 = por %p120, %p121
      %p123 = scmp.ne.s32.totalorder %s115, %s117
      %p124 = scmp.eq.s32.totalorder %s23, 1
      %p125 = por %p123, %p124
      %p126 = scmp.ne.s32.totalorder %s117, %s118
      %p127 = scmp.eq.s32.totalorder %s23, 0
      %p128 = por %p126, %p127
      %p129 = scmp.ne.s32.totalorder %s117, %s118
      %p130 = scmp.eq.s32.totalorder %s24, 1
      %p131 = por %p129, %p130
      %p133 = scmp.ne.s32.totalorder %s118, %s132
      %p134 = scmp.eq.s32.totalorder %s24, 0
      %p135 = por %p133, %p134
      %s137 = sadd.s32 %s136, 1
      %p140 = scmp.eq.s32.totalorder %s18, 1
      %p141 = scmp.ne.s32.totalorder %s136, %s138
      %p142 = scmp.eq.s32.totalorder %s18, 0
      %p143 = por %p141, %p142
      %p144 = scmp.ne.s32.totalorder %s136, %s138
      %p145 = scmp.eq.s32.totalorder %s23, 1
      %p146 = por %p144, %p145
      %p147 = scmp.ne.s32.totalorder %s138, %s139
      %p148 = scmp.eq.s32.totalorder %s23, 0
      %p149 = por %p147, %p148
      %p150 = scmp.ne.s32.totalorder %s138, %s139
      %p151 = scmp.eq.s32.totalorder %s24, 1
      %p152 = por %p150, %p151
      %p154 = scmp.ne.s32.totalorder %s139, %s153
      %p155 = scmp.eq.s32.totalorder %s24, 0
      %p156 = por %p154, %p155
      %s157 = ssub.s32 %s18, %s25
      %p158 = scmp.eq.s32.totalorder %s157, 0
      %s160 = sadd.s32 %s159, 1
      %s161 = scalar_select %p158, %s159, %s160
      %p164 = pneg %p158
      %p165 = scmp.eq.s32.totalorder %s18, 1
      %p166 = por %p164, %p165
      %p167 = scmp.ne.s32.totalorder %s159, %s162
      %p168 = scmp.eq.s32.totalorder %s18, 0
      %p169 = por %p167, %p168
      %p170 = scmp.ne.s32.totalorder %s159, %s162
      %p171 = scmp.eq.s32.totalorder %s23, 1
      %p172 = por %p170, %p171
      %p173 = scmp.ne.s32.totalorder %s162, %s163
      %p174 = scmp.eq.s32.totalorder %s23, 0
      %p175 = por %p173, %p174
      %p176 = scmp.ne.s32.totalorder %s162, %s163
      %p177 = scmp.eq.s32.totalorder %s24, 1
      %p178 = por %p176, %p177
      %p180 = scmp.ne.s32.totalorder %s163, %s179
      %p181 = scmp.eq.s32.totalorder %s24, 0
      %p182 = por %p180, %p181
      %p183 = scmp.le.s32.totalorder 1, %s18
      %p184 = scmp.lt.s32.totalorder %s18, 3
      %p185 = pnand %p183, %p184
      %p186 = pneg %p185
      // Predicated region
      $region9: #{tpu_custom_call.1} parent=5 // pred_check
        _
      $region10: #{tpu_custom_call.1} parent=5 // pred_check_branch
        %188 = sbr.rel (%p185) target = $region12
      $region11: #{tpu_custom_call.1} parent=5 // pred_region
        %s189 = ssub.s32 %s18, 1
        // Predicated region
        $region13: #{tpu_custom_call.1} parent=11 // pred_check
          %p190 = pneg %p65
        $region14: #{tpu_custom_call.1} parent=11 // pred_check_branch
          %192 = sbr.rel (%p190) target = $region16
        $region15: #{tpu_custom_call.1} parent=11 // pred_region
          _
        $region16: #{tpu_custom_call.1} parent=11 // pred_fallthru
          _
        // Predicated region
        $region17: #{tpu_custom_call.1} parent=11 // pred_check
          %p193 = pneg %p86
        $region18: #{tpu_custom_call.1} parent=11 // pred_check_branch
          %195 = sbr.rel (%p193) target = $region20
        $region19: #{tpu_custom_call.1} parent=11 // pred_region
          _
        $region20: #{tpu_custom_call.1} parent=11 // pred_fallthru
          _
        // Predicated region
        $region21: #{tpu_custom_call.1} parent=11 // pred_check
          %p196 = pneg %p107
        $region22: #{tpu_custom_call.1} parent=11 // pred_check_branch
          %198 = sbr.rel (%p196) target = $region24
        $region23: #{tpu_custom_call.1} parent=11 // pred_region
          _
        $region24: #{tpu_custom_call.1} parent=11 // pred_fallthru
          _
        // Predicated region
        $region25: #{tpu_custom_call.1} parent=11 // pred_check
          %p199 = pneg %p128
        $region26: #{tpu_custom_call.1} parent=11 // pred_check_branch
          %201 = sbr.rel (%p199) target = $region28
        $region27: #{tpu_custom_call.1} parent=11 // pred_region
          _
        $region28: #{tpu_custom_call.1} parent=11 // pred_fallthru
          _
        // Predicated region
        $region29: #{tpu_custom_call.1} parent=11 // pred_check
          %p202 = pneg %p149
        $region30: #{tpu_custom_call.1} parent=11 // pred_check_branch
          %204 = sbr.rel (%p202) target = $region32
        $region31: #{tpu_custom_call.1} parent=11 // pred_region
          _
        $region32: #{tpu_custom_call.1} parent=11 // pred_fallthru
          _
      $region12: #{tpu_custom_call.1} parent=5 // pred_fallthru
        _
      %p205 = scmp.lt.s32.totalorder %s18, 2
      // Predicated region
      $region33: #{tpu_custom_call.1} parent=5 // pred_check
        %p206 = pneg %p205
      $region34: #{tpu_custom_call.1} parent=5 // pred_check_branch
        %208 = sbr.rel (%p206) target = $region36
      $region35: #{tpu_custom_call.1} parent=5 // pred_region
        // Predicated region
        $region37: #{tpu_custom_call.1} parent=35 // pred_check
          %p209 = pneg %p38
        $region38: #{tpu_custom_call.1} parent=35 // pred_check_branch
          %211 = sbr.rel (%p209) target = $region40
        $region39: #{tpu_custom_call.1} parent=35 // pred_region
          %s212 = sand.u32 %s28, 1
          %s213 = scalar_lea.sflag [#allocation6], %s212
          %s214 = sand.u32 %s28, 1
          %s215 = smul.addr %s214, 20
          %s216 = scalar_lea.vmem [#allocation5], %s215
          %s218 = ssub.s32 320, 320
          %219 = vsyncadd %s213, %s218
          %s220 = smul.addr %s18, 10
          %s221 = smul.addr %s220, 32
          %s222 = scalar_lea.hbm %s0, %s221
          %s224 = sshll.u32 %s216, 4
          %s225 = int_to_ptr.vmem [resolvable:$true] %s224
          %227 = dma.hbm_to_vmem [thread:$0]  %s222, 320, %s225, %s213
        $region40: #{tpu_custom_call.1} parent=35 // pred_fallthru
          _
      $region36: #{tpu_custom_call.1} parent=5 // pred_fallthru
        _
      %p228 = scmp.le.s32.totalorder 1, %s18
      %p229 = scmp.lt.s32.totalorder %s18, 3
      %p230 = pnand %p228, %p229
      %p231 = pneg %p230
      // Predicated region
      $region41: #{tpu_custom_call.1} parent=5 // pred_check
        _
      $region42: #{tpu_custom_call.1} parent=5 // pred_check_branch
        %233 = sbr.rel (%p230) target = $region44
      $region43: #{tpu_custom_call.1} parent=5 // pred_region
        %s234 = ssub.s32 %s18, 1
        %s235 = sand.u32 %s31, 1
        %s236 = scalar_lea.sflag [#allocation6], %s235
        %s237 = sand.u32 %s31, 1
        %s238 = smul.addr %s237, 20
        %s239 = scalar_lea.vmem [#allocation5], %s238
        // Predicated region
        $region45: #{tpu_custom_call.1} parent=43 // pred_check
          %p240 = pneg %p44
        $region46: #{tpu_custom_call.1} parent=43 // pred_check_branch
          %242 = sbr.rel (%p240) target = $region48
        $region47: #{tpu_custom_call.1} parent=43 // pred_region
          %243 = dma.done %s236, 320
        $region48: #{tpu_custom_call.1} parent=43 // pred_fallthru
          _
        %s244 = sand.u32 %s31, 1
        %s245 = scalar_lea.sflag [#allocation6], %s244
        %s246 = sand.u32 %s31, 1
        %s247 = smul.addr %s246, 20
        %s248 = scalar_lea.vmem [#allocation5], %s247
        %p249 = pneg %p44
        %p250 = pneg %p41
        %p251 = pneg %p65
        %p252 = pneg %p62
        %p253 = pneg %p86
        %p254 = pneg %p83
        %p255 = pneg %p107
        %p256 = pneg %p104
        %p257 = pneg %p128
        %p258 = pneg %p125
        %p259 = pneg %p149
        %p260 = pneg %p146
        %p261 = pneg %p175
        %p262 = pneg %p172
        %s263 = sand.u32 %s162, 1
        %s264 = scalar_lea.sflag [#allocation7], %s263
        %s265 = sand.u32 %s162, 1
        %s266 = smul.addr %s265, 64
        %s267 = scalar_lea.vmem [#allocation8], %s266
        %vm269 = vcmask 904192
        %270 = vst.msk [vmem:[#allocation3] sm:$0xf] %vm269, 0
        %vm271 = vcmask 1044152
        %vm272 = vcmask 572420
        %vm273 = vmor %vm272, %vm271
        %274 = vst.msk [vmem:[#allocation3 + $0x20] sm:$0xff] %vm273, 0
        %v275 = vld [vmem:[%s239] sm:$0xff]
        %v276 = vld [vmem:[%s239 + $0x8] sm:$0xff]
        %v279 = vcombine.high %v275, %v275
        %v281 = vunpack.c.l.s4 1983009808
        %v282 = vunpack.c.0.s8 %v281
        %v283 = vlaneseq
        %v284 = vshrl.u32 %v283, 7
        %v285 = vsub.s32 %v282, %v284
        %v286 = vrot.slane %v275, %v285
        %v288 = vunpack.c.l.s4 1983009808
        %v289 = vunpack.c.0.s8 %v288
        %v290 = vlaneseq
        %v291 = vshrl.u32 %v290, 7
        %v292 = vsub.s32 %v289, %v291
        %v293 = vrot.slane %v279, %v292
        %v294 = vcombine.high %v276, %v276
        %v296 = vunpack.c.l.s4 1983009808
        %v297 = vunpack.c.0.s8 %v296
        %v298 = vlaneseq
        %v299 = vshrl.u32 %v298, 7
        %v300 = vsub.s32 %v297, %v299
        %v301 = vrot.slane %v276, %v300
        %v303 = vunpack.c.l.s4 1983009808
        %v304 = vunpack.c.0.s8 %v303
        %v305 = vlaneseq
        %v306 = vshrl.u32 %v305, 7
        %v307 = vsub.s32 %v304, %v306
        %v308 = vrot.slane %v294, %v307
        %313 = vst [vmem:[#allocation2] sm:$0x33] %v286
        %314 = vst [vmem:[#allocation2 + $0x8] sm:$0x33] %v293
        %315 = vst [vmem:[#allocation2 + $0x10] sm:$0x33] %v301
        %vm316 = vcmask 1041408
        %vm317 = vcmask 848900
        %vm318 = vmor %vm317, %vm316
        %319 = vst.msk [vmem:[#allocation2 + $0x18] sm:$0x33] %vm318, %v308
        %v320 = vld [vmem:[%s239] sm:$0xff]
        %v321 = vld [vmem:[%s239 + $0x8] sm:$0xff]
        %v324 = vcombine.low %v320, %v320
        %v326 = vunpack.c.l.s4 1983009808
        %v327 = vunpack.c.0.s8 %v326
        %v328 = vlaneseq
        %v329 = vshrl.u32 %v328, 7
        %v330 = vsub.s32 %v327, %v329
        %v331 = vrot.slane %v324, %v330
        %v333 = vunpack.c.l.s4 1983009808
        %v334 = vunpack.c.0.s8 %v333
        %v335 = vlaneseq
        %v336 = vshrl.u32 %v335, 7
        %v337 = vsub.s32 %v334, %v336
        %v338 = vrot.slane %v320, %v337
        %v339 = vcombine.low %v321, %v321
        %v341 = vunpack.c.l.s4 1983009808
        %v342 = vunpack.c.0.s8 %v341
        %v343 = vlaneseq
        %v344 = vshrl.u32 %v343, 7
        %v345 = vsub.s32 %v342, %v344
        %v346 = vrot.slane %v339, %v345
        %v348 = vunpack.c.l.s4 1983009808
        %v349 = vunpack.c.0.s8 %v348
        %v350 = vlaneseq
        %v351 = vshrl.u32 %v350, 7
        %v352 = vsub.s32 %v349, %v351
        %v353 = vrot.slane %v321, %v352
        %354 = vrot.lane.b32.xlu0 %v331, 127
        %v355 = vpop.permute.xlu0 %354
        %356 = vrot.lane.b32.xlu0 %v338, 127
        %v357 = vpop.permute.xlu0 %356
        %358 = vrot.lane.b32.xlu0 %v346, 127
        %v359 = vpop.permute.xlu0 %358
        %360 = vrot.lane.b32.xlu0 %v353, 127
        %v361 = vpop.permute.xlu0 %360
        %v362 = vrot.slane %v355, 4
        %v363 = vrot.slane %v357, 4
        %v364 = vrot.slane %v359, 4
        %v365 = vrot.slane %v361, 4
        %vm366 = vcmask 1043456
        %v367 = vsel %vm366, %v362, %v363
        %vm368 = vcmask 1039360
        %v369 = vsel %vm368, %v355, %v367
        %v370 = vsel %vm366, %v363, %v364
        %v371 = vsel %vm368, %v357, %v370
        %v372 = vsel %vm366, %v364, %v365
        %v373 = vsel %vm368, %v359, %v372
        %v374 = vsel %vm368, %v361, %v365
        %379 = vst [vmem:[#allocation2] sm:$0xcc] %v369
        %380 = vst [vmem:[#allocation2 + $0x8] sm:$0xcc] %v371
        %381 = vst [vmem:[#allocation2 + $0x10] sm:$0xcc] %v373
        %vm382 = vcmask 1043458
        %vm383 = vcmask 850950
        %vm384 = vmor %vm383, %vm382
        %385 = vst.msk [vmem:[#allocation2 + $0x18] sm:$0xcc] %vm384, %v374
        %v386 = vld [vmem:[%s239] sm:$0xff]
        %v387 = vld [vmem:[%s239 + $0x8] sm:$0xff]
        %v390 = vcombine.high %v386, %v386
        %v392 = vunpack.c.l.s4 1983009808
        %v393 = vunpack.c.0.s8 %v392
        %v394 = vlaneseq
        %v395 = vshrl.u32 %v394, 7
        %v396 = vsub.s32 %v393, %v395
        %v397 = vrot.slane %v386, %v396
        %v399 = vunpack.c.l.s4 1983009808
        %v400 = vunpack.c.0.s8 %v399
        %v401 = vlaneseq
        %v402 = vshrl.u32 %v401, 7
        %v403 = vsub.s32 %v400, %v402
        %v404 = vrot.slane %v390, %v403
        %v405 = vcombine.high %v387, %v387
        %v407 = vunpack.c.l.s4 1983009808
        %v408 = vunpack.c.0.s8 %v407
        %v409 = vlaneseq
        %v410 = vshrl.u32 %v409, 7
        %v411 = vsub.s32 %v408, %v410
        %v412 = vrot.slane %v387, %v411
        %v414 = vunpack.c.l.s4 1983009808
        %v415 = vunpack.c.0.s8 %v414
        %v416 = vlaneseq
        %v417 = vshrl.u32 %v416, 7
        %v418 = vsub.s32 %v415, %v417
        %v419 = vrot.slane %v405, %v418
        %420 = vrot.lane.b32.xlu0 %v397, 126
        %v421 = vpop.permute.xlu0 %420
        %422 = vrot.lane.b32.xlu0 %v404, 126
        %v423 = vpop.permute.xlu0 %422
        %424 = vrot.lane.b32.xlu0 %v412, 126
        %v425 = vpop.permute.xlu0 %424
        %426 = vrot.lane.b32.xlu0 %v419, 126
        %v427 = vpop.permute.xlu0 %426
        %v428 = vrot.slane %v421, 4
        %v429 = vrot.slane %v423, 4
        %v430 = vrot.slane %v425, 4
        %v431 = vrot.slane %v427, 4
        %v432 = vsel %vm366, %v428, %v429
        %vm433 = vcmask 1031168
        %v434 = vsel %vm433, %v421, %v432
        %v435 = vsel %vm366, %v429, %v430
        %v436 = vsel %vm433, %v423, %v435
        %v437 = vsel %vm366, %v430, %v431
        %v438 = vsel %vm433, %v425, %v437
        %v439 = vsel %vm433, %v427, %v431
        %444 = vst [vmem:[#allocation2 + $0x20] sm:$0x33] %v434
        %445 = vst [vmem:[#allocation2 + $0x28] sm:$0x33] %v436
        %446 = vst [vmem:[#allocation2 + $0x30] sm:$0x33] %v438
        %447 = vst.msk [vmem:[#allocation2 + $0x38] sm:$0x33] %vm318, %v439
        %v448 = vld [vmem:[%s239] sm:$0xff]
        %v449 = vld [vmem:[%s239 + $0x8] sm:$0xff]
        %v452 = vcombine.low %v448, %v448
        %v454 = vunpack.c.l.s4 1983009808
        %v455 = vunpack.c.0.s8 %v454
        %v456 = vlaneseq
        %v457 = vshrl.u32 %v456, 7
        %v458 = vsub.s32 %v455, %v457
        %v459 = vrot.slane %v452, %v458
        %v461 = vunpack.c.l.s4 1983009808
        %v462 = vunpack.c.0.s8 %v461
        %v463 = vlaneseq
        %v464 = vshrl.u32 %v463, 7
        %v465 = vsub.s32 %v462, %v464
        %v466 = vrot.slane %v448, %v465
        %v467 = vcombine.low %v449, %v449
        %v469 = vunpack.c.l.s4 1983009808
        %v470 = vunpack.c.0.s8 %v469
        %v471 = vlaneseq
        %v472 = vshrl.u32 %v471, 7
        %v473 = vsub.s32 %v470, %v472
        %v474 = vrot.slane %v467, %v473
        %v476 = vunpack.c.l.s4 1983009808
        %v477 = vunpack.c.0.s8 %v476
        %v478 = vlaneseq
        %v479 = vshrl.u32 %v478, 7
        %v480 = vsub.s32 %v477, %v479
        %v481 = vrot.slane %v449, %v480
        %482 = vrot.lane.b32.xlu0 %v459, 118
        %v483 = vpop.permute.xlu0 %482
        %484 = vrot.lane.b32.xlu0 %v466, 118
        %v485 = vpop.permute.xlu0 %484
        %486 = vrot.lane.b32.xlu0 %v474, 118
        %v487 = vpop.permute.xlu0 %486
        %488 = vrot.lane.b32.xlu0 %v481, 118
        %v489 = vpop.permute.xlu0 %488
        %v490 = vrot.slane %v483, 4
        %v491 = vrot.slane %v485, 4
        %v492 = vrot.slane %v487, 4
        %v493 = vrot.slane %v489, 4
        %v494 = vsel %vm366, %v490, %v491
        %vm495 = vcmask 965632
        %v496 = vsel %vm495, %v483, %v494
        %v497 = vsel %vm366, %v491, %v492
        %v498 = vsel %vm495, %v485, %v497
        %v499 = vsel %vm366, %v492, %v493
        %v500 = vsel %vm495, %v487, %v499
        %v501 = vsel %vm495, %v489, %v493
        %506 = vst [vmem:[#allocation2 + $0x20] sm:$0xcc] %v496
        %507 = vst [vmem:[#allocation2 + $0x28] sm:$0xcc] %v498
        %508 = vst [vmem:[#allocation2 + $0x30] sm:$0xcc] %v500
        %509 = vst.msk [vmem:[#allocation2 + $0x38] sm:$0xcc] %vm384, %v501
        %v510 = vld [vmem:[%s239] sm:$0xff]
        %v511 = vld [vmem:[%s239 + $0x8] sm:$0xff]
        %v514 = vcombine.high %v510, %v510
        %v516 = vunpack.c.l.s4 1983009808
        %v517 = vunpack.c.0.s8 %v516
        %v518 = vlaneseq
        %v519 = vshrl.u32 %v518, 7
        %v520 = vsub.s32 %v517, %v519
        %v521 = vrot.slane %v510, %v520
        %v523 = vunpack.c.l.s4 1983009808
        %v524 = vunpack.c.0.s8 %v523
        %v525 = vlaneseq
        %v526 = vshrl.u32 %v525, 7
        %v527 = vsub.s32 %v524, %v526
        %v528 = vrot.slane %v514, %v527
        %v529 = vcombine.high %v511, %v511
        %v531 = vunpack.c.l.s4 1983009808
        %v532 = vunpack.c.0.s8 %v531
        %v533 = vlaneseq
        %v534 = vshrl.u32 %v533, 7
        %v535 = vsub.s32 %v532, %v534
        %v536 = vrot.slane %v511, %v535
        %v538 = vunpack.c.l.s4 1983009808
        %v539 = vunpack.c.0.s8 %v538
        %v540 = vlaneseq
        %v541 = vshrl.u32 %v540, 7
        %v542 = vsub.s32 %v539, %v541
        %v543 = vrot.slane %v529, %v542
        %544 = vrot.lane.b32.xlu0 %v521, 117
        %v545 = vpop.permute.xlu0 %544
        %546 = vrot.lane.b32.xlu0 %v528, 117
        %v547 = vpop.permute.xlu0 %546
        %548 = vrot.lane.b32.xlu0 %v536, 117
        %v549 = vpop.permute.xlu0 %548
        %550 = vrot.lane.b32.xlu0 %v543, 117
        %v551 = vpop.permute.xlu0 %550
        %v552 = vrot.slane %v545, 4
        %v553 = vrot.slane %v547, 4
        %v554 = vrot.slane %v549, 4
        %v555 = vrot.slane %v551, 4
        %v556 = vsel %vm366, %v552, %v553
        %vm557 = vcmask 957440
        %v558 = vsel %vm557, %v545, %v556
        %v559 = vsel %vm366, %v553, %v554
        %v560 = vsel %vm557, %v547, %v559
        %v561 = vsel %vm366, %v554, %v555
        %v562 = vsel %vm557, %v549, %v561
        %v563 = vsel %vm557, %v551, %v555
        %568 = vst [vmem:[#allocation2 + $0x40] sm:$0x33] %v558
        %569 = vst [vmem:[#allocation2 + $0x48] sm:$0x33] %v560
        %570 = vst [vmem:[#allocation2 + $0x50] sm:$0x33] %v562
        %571 = vst.msk [vmem:[#allocation2 + $0x58] sm:$0x33] %vm318, %v563
        %v572 = vld [vmem:[%s239] sm:$0xff]
        %v573 = vld [vmem:[%s239 + $0x8] sm:$0xff]
        %v576 = vcombine.low %v572, %v572
        %v578 = vunpack.c.l.s4 1983009808
        %v579 = vunpack.c.0.s8 %v578
        %v580 = vlaneseq
        %v581 = vshrl.u32 %v580, 7
        %v582 = vsub.s32 %v579, %v581
        %v583 = vrot.slane %v576, %v582
        %v585 = vunpack.c.l.s4 1983009808
        %v586 = vunpack.c.0.s8 %v585
        %v587 = vlaneseq
        %v588 = vshrl.u32 %v587, 7
        %v589 = vsub.s32 %v586, %v588
        %v590 = vrot.slane %v572, %v589
        %v591 = vcombine.low %v573, %v573
        %v593 = vunpack.c.l.s4 1983009808
        %v594 = vunpack.c.0.s8 %v593
        %v595 = vlaneseq
        %v596 = vshrl.u32 %v595, 7
        %v597 = vsub.s32 %v594, %v596
        %v598 = vrot.slane %v591, %v597
        %v600 = vunpack.c.l.s4 1983009808
        %v601 = vunpack.c.0.s8 %v600
        %v602 = vlaneseq
        %v603 = vshrl.u32 %v602, 7
        %v604 = vsub.s32 %v601, %v603
        %v605 = vrot.slane %v573, %v604
        %606 = vrot.lane.b32.xlu0 %v583, 116
        %v607 = vpop.permute.xlu0 %606
        %608 = vrot.lane.b32.xlu0 %v590, 116
        %v609 = vpop.permute.xlu0 %608
        %610 = vrot.lane.b32.xlu0 %v598, 116
        %v611 = vpop.permute.xlu0 %610
        %612 = vrot.lane.b32.xlu0 %v605, 116
        %v613 = vpop.permute.xlu0 %612
        %v614 = vrot.slane %v607, 4
        %v615 = vrot.slane %v609, 4
        %v616 = vrot.slane %v611, 4
        %v617 = vrot.slane %v613, 4
        %v618 = vsel %vm366, %v614, %v615
        %vm619 = vcmask 949248
        %v620 = vsel %vm619, %v607, %v618
        %v621 = vsel %vm366, %v615, %v616
        %v622 = vsel %vm619, %v609, %v621
        %v623 = vsel %vm366, %v616, %v617
        %v624 = vsel %vm619, %v611, %v623
        %v625 = vsel %vm619, %v613, %v617
        %630 = vst [vmem:[#allocation2 + $0x40] sm:$0xcc] %v620
        %631 = vst [vmem:[#allocation2 + $0x48] sm:$0xcc] %v622
        %632 = vst [vmem:[#allocation2 + $0x50] sm:$0xcc] %v624
        %633 = vst.msk [vmem:[#allocation2 + $0x58] sm:$0xcc] %vm384, %v625
        %v634 = vld [vmem:[%s239] sm:$0xff]
        %v635 = vld [vmem:[%s239 + $0x8] sm:$0xff]
        %v638 = vcombine.high %v634, %v634
        %v640 = vunpack.c.l.s4 1983009808
        %v641 = vunpack.c.0.s8 %v640
        %v642 = vlaneseq
        %v643 = vshrl.u32 %v642, 7
        %v644 = vsub.s32 %v641, %v643
        %v645 = vrot.slane %v634, %v644
        %v647 = vunpack.c.l.s4 1983009808
        %v648 = vunpack.c.0.s8 %v647
        %v649 = vlaneseq
        %v650 = vshrl.u32 %v649, 7
        %v651 = vsub.s32 %v648, %v650
        %v652 = vrot.slane %v638, %v651
        %v653 = vcombine.high %v635, %v635
        %v655 = vunpack.c.l.s4 1983009808
        %v656 = vunpack.c.0.s8 %v655
        %v657 = vlaneseq
        %v658 = vshrl.u32 %v657, 7
        %v659 = vsub.s32 %v656, %v658
        %v660 = vrot.slane %v635, %v659
        %v662 = vunpack.c.l.s4 1983009808
        %v663 = vunpack.c.0.s8 %v662
        %v664 = vlaneseq
        %v665 = vshrl.u32 %v664, 7
        %v666 = vsub.s32 %v663, %v665
        %v667 = vrot.slane %v653, %v666
        %668 = vrot.lane.b32.xlu0 %v645, 108
        %v669 = vpop.permute.xlu0 %668
        %670 = vrot.lane.b32.xlu0 %v652, 108
        %v671 = vpop.permute.xlu0 %670
        %672 = vrot.lane.b32.xlu0 %v660, 108
        %v673 = vpop.permute.xlu0 %672
        %674 = vrot.lane.b32.xlu0 %v667, 108
        %v675 = vpop.permute.xlu0 %674
        %v676 = vrot.slane %v669, 4
        %v677 = vrot.slane %v671, 4
        %v678 = vrot.slane %v673, 4
        %v679 = vrot.slane %v675, 4
        %v680 = vsel %vm366, %v676, %v677
        %vm681 = vcmask 883712
        %v682 = vsel %vm681, %v669, %v680
        %v683 = vsel %vm366, %v677, %v678
        %v684 = vsel %vm681, %v671, %v683
        %v685 = vsel %vm366, %v678, %v679
        %v686 = vsel %vm681, %v673, %v685
        %v687 = vsel %vm681, %v675, %v679
        %692 = vst [vmem:[#allocation2 + $0x60] sm:$0x33] %v682
        %693 = vst [vmem:[#allocation2 + $0x68] sm:$0x33] %v684
        %694 = vst [vmem:[#allocation2 + $0x70] sm:$0x33] %v686
        %695 = vst.msk [vmem:[#allocation2 + $0x78] sm:$0x33] %vm318, %v687
        %v696 = vld [vmem:[%s239] sm:$0xff]
        %v697 = vld [vmem:[%s239 + $0x8] sm:$0xff]
        %v700 = vcombine.low %v696, %v696
        %v702 = vunpack.c.l.s4 1983009808
        %v703 = vunpack.c.0.s8 %v702
        %v704 = vlaneseq
        %v705 = vshrl.u32 %v704, 7
        %v706 = vsub.s32 %v703, %v705
        %v707 = vrot.slane %v700, %v706
        %v709 = vunpack.c.l.s4 1983009808
        %v710 = vunpack.c.0.s8 %v709
        %v711 = vlaneseq
        %v712 = vshrl.u32 %v711, 7
        %v713 = vsub.s32 %v710, %v712
        %v714 = vrot.slane %v696, %v713
        %v715 = vcombine.low %v697, %v697
        %v717 = vunpack.c.l.s4 1983009808
        %v718 = vunpack.c.0.s8 %v717
        %v719 = vlaneseq
        %v720 = vshrl.u32 %v719, 7
        %v721 = vsub.s32 %v718, %v720
        %v722 = vrot.slane %v715, %v721
        %v724 = vunpack.c.l.s4 1983009808
        %v725 = vunpack.c.0.s8 %v724
        %v726 = vlaneseq
        %v727 = vshrl.u32 %v726, 7
        %v728 = vsub.s32 %v725, %v727
        %v729 = vrot.slane %v697, %v728
        %730 = vrot.lane.b32.xlu0 %v707, 107
        %v731 = vpop.permute.xlu0 %730
        %732 = vrot.lane.b32.xlu0 %v714, 107
        %v733 = vpop.permute.xlu0 %732
        %734 = vrot.lane.b32.xlu0 %v722, 107
        %v735 = vpop.permute.xlu0 %734
        %736 = vrot.lane.b32.xlu0 %v729, 107
        %v737 = vpop.permute.xlu0 %736
        %v738 = vrot.slane %v731, 4
        %v739 = vrot.slane %v733, 4
        %v740 = vrot.slane %v735, 4
        %v741 = vrot.slane %v737, 4
        %v742 = vsel %vm366, %v738, %v739
        %vm743 = vcmask 875520
        %v744 = vsel %vm743, %v731, %v742
        %v745 = vsel %vm366, %v739, %v740
        %v746 = vsel %vm743, %v733, %v745
        %v747 = vsel %vm366, %v740, %v741
        %v748 = vsel %vm743, %v735, %v747
        %v749 = vsel %vm743, %v737, %v741
        %754 = vst [vmem:[#allocation2 + $0x60] sm:$0xcc] %v744
        %755 = vst [vmem:[#allocation2 + $0x68] sm:$0xcc] %v746
        %756 = vst [vmem:[#allocation2 + $0x70] sm:$0xcc] %v748
        %757 = vst.msk [vmem:[#allocation2 + $0x78] sm:$0xcc] %vm384, %v749
        %v758 = vld [vmem:[%s239] sm:$0xff]
        %v759 = vld [vmem:[%s239 + $0x8] sm:$0xff]
        %v762 = vcombine.high %v758, %v758
        %v764 = vunpack.c.l.s4 1983009808
        %v765 = vunpack.c.0.s8 %v764
        %v766 = vlaneseq
        %v767 = vshrl.u32 %v766, 7
        %v768 = vsub.s32 %v765, %v767
        %v769 = vrot.slane %v758, %v768
        %v771 = vunpack.c.l.s4 1983009808
        %v772 = vunpack.c.0.s8 %v771
        %v773 = vlaneseq
        %v774 = vshrl.u32 %v773, 7
        %v775 = vsub.s32 %v772, %v774
        %v776 = vrot.slane %v762, %v775
        %v777 = vcombine.high %v759, %v759
        %v779 = vunpack.c.l.s4 1983009808
        %v780 = vunpack.c.0.s8 %v779
        %v781 = vlaneseq
        %v782 = vshrl.u32 %v781, 7
        %v783 = vsub.s32 %v780, %v782
        %v784 = vrot.slane %v759, %v783
        %v786 = vunpack.c.l.s4 1983009808
        %v787 = vunpack.c.0.s8 %v786
        %v788 = vlaneseq
        %v789 = vshrl.u32 %v788, 7
        %v790 = vsub.s32 %v787, %v789
        %v791 = vrot.slane %v777, %v790
        %792 = vrot.lane.b32.xlu0 %v769, 106
        %v793 = vpop.permute.xlu0 %792
        %794 = vrot.lane.b32.xlu0 %v776, 106
        %v795 = vpop.permute.xlu0 %794
        %796 = vrot.lane.b32.xlu0 %v784, 106
        %v797 = vpop.permute.xlu0 %796
        %798 = vrot.lane.b32.xlu0 %v791, 106
        %v799 = vpop.permute.xlu0 %798
        %v800 = vrot.slane %v793, 4
        %v801 = vrot.slane %v795, 4
        %v802 = vrot.slane %v797, 4
        %v803 = vrot.slane %v799, 4
        %v804 = vsel %vm366, %v800, %v801
        %vm805 = vcmask 867328
        %v806 = vsel %vm805, %v793, %v804
        %v807 = vsel %vm366, %v801, %v802
        %v808 = vsel %vm805, %v795, %v807
        %v809 = vsel %vm366, %v802, %v803
        %v810 = vsel %vm805, %v797, %v809
        %v811 = vsel %vm805, %v799, %v803
        %816 = vst [vmem:[#allocation2 + $0x80] sm:$0x33] %v806
        %817 = vst [vmem:[#allocation2 + $0x88] sm:$0x33] %v808
        %818 = vst [vmem:[#allocation2 + $0x90] sm:$0x33] %v810
        %819 = vst.msk [vmem:[#allocation2 + $0x98] sm:$0x33] %vm318, %v811
        %v820 = vld [vmem:[%s239] sm:$0xff]
        %v821 = vld [vmem:[%s239 + $0x8] sm:$0xff]
        %v822 = vld [vmem:[%s239 + $0x10] sm:$0x3]
        %v826 = vcombine.low %v820, %v820
        %v828 = vunpack.c.l.s4 1983009808
        %v829 = vunpack.c.0.s8 %v828
        %v830 = vlaneseq
        %v831 = vshrl.u32 %v830, 7
        %v832 = vsub.s32 %v829, %v831
        %v833 = vrot.slane %v826, %v832
        %v835 = vunpack.c.l.s4 1983009808
        %v836 = vunpack.c.0.s8 %v835
        %v837 = vlaneseq
        %v838 = vshrl.u32 %v837, 7
        %v839 = vsub.s32 %v836, %v838
        %v840 = vrot.slane %v820, %v839
        %v841 = vcombine.low %v821, %v821
        %v843 = vunpack.c.l.s4 1983009808
        %v844 = vunpack.c.0.s8 %v843
        %v845 = vlaneseq
        %v846 = vshrl.u32 %v845, 7
        %v847 = vsub.s32 %v844, %v846
        %v848 = vrot.slane %v841, %v847
        %v850 = vunpack.c.l.s4 1983009808
        %v851 = vunpack.c.0.s8 %v850
        %v852 = vlaneseq
        %v853 = vshrl.u32 %v852, 7
        %v854 = vsub.s32 %v851, %v853
        %v855 = vrot.slane %v821, %v854
        %v856 = vcombine.low %v822, %v822
        %v858 = vunpack.c.l.s4 1983009808
        %v859 = vunpack.c.0.s8 %v858
        %v860 = vlaneseq
        %v861 = vshrl.u32 %v860, 7
        %v862 = vsub.s32 %v859, %v861
        %v863 = vrot.slane %v856, %v862
        %864 = vrot.lane.b32.xlu0 %v833, 28
        %v865 = vpop.permute.xlu0 %864
        %866 = vrot.lane.b32.xlu0 %v840, 28
        %v867 = vpop.permute.xlu0 %866
        %868 = vrot.lane.b32.xlu0 %v848, 28
        %v869 = vpop.permute.xlu0 %868
        %870 = vrot.lane.b32.xlu0 %v855, 28
        %v871 = vpop.permute.xlu0 %870
        %872 = vrot.lane.b32.xlu0 %v863, 28
        %v873 = vpop.permute.xlu0 %872
        %v874 = vrot.slane %v865, 4
        %v875 = vrot.slane %v867, 4
        %v876 = vrot.slane %v869, 4
        %v877 = vrot.slane %v871, 4
        %v878 = vrot.slane %v873, 4
        %v879 = vsel %vm366, %v874, %v875
        %vm880 = vcmask 228352
        %v881 = vsel %vm880, %v865, %v879
        %v882 = vsel %vm366, %v875, %v876
        %v883 = vsel %vm880, %v867, %v882
        %v884 = vsel %vm366, %v876, %v877
        %v885 = vsel %vm880, %v869, %v884
        %v886 = vsel %vm366, %v877, %v878
        %v887 = vsel %vm880, %v871, %v886
        %892 = vst [vmem:[#allocation2 + $0x80] sm:$0xcc] %v881
        %893 = vst [vmem:[#allocation2 + $0x88] sm:$0xcc] %v883
        %894 = vst [vmem:[#allocation2 + $0x90] sm:$0xcc] %v885
        %895 = vst.msk [vmem:[#allocation2 + $0x98] sm:$0xcc] %vm384, %v887
        %v896 = vld [vmem:[%s239] sm:$0xff]
        %v897 = vld [vmem:[%s239 + $0x8] sm:$0xff]
        %v898 = vld [vmem:[%s239 + $0x10] sm:$0x3]
        %v902 = vcombine.high %v896, %v896
        %v904 = vunpack.c.l.s4 1983009808
        %v905 = vunpack.c.0.s8 %v904
        %v906 = vlaneseq
        %v907 = vshrl.u32 %v906, 7
        %v908 = vsub.s32 %v905, %v907
        %v909 = vrot.slane %v896, %v908
        %v911 = vunpack.c.l.s4 1983009808
        %v912 = vunpack.c.0.s8 %v911
        %v913 = vlaneseq
        %v914 = vshrl.u32 %v913, 7
        %v915 = vsub.s32 %v912, %v914
        %v916 = vrot.slane %v902, %v915
        %v917 = vcombine.high %v897, %v897
        %v919 = vunpack.c.l.s4 1983009808
        %v920 = vunpack.c.0.s8 %v919
        %v921 = vlaneseq
        %v922 = vshrl.u32 %v921, 7
        %v923 = vsub.s32 %v920, %v922
        %v924 = vrot.slane %v897, %v923
        %v926 = vunpack.c.l.s4 1983009808
        %v927 = vunpack.c.0.s8 %v926
        %v928 = vlaneseq
        %v929 = vshrl.u32 %v928, 7
        %v930 = vsub.s32 %v927, %v929
        %v931 = vrot.slane %v917, %v930
        %v933 = vunpack.c.l.s4 1983009808
        %v934 = vunpack.c.0.s8 %v933
        %v935 = vlaneseq
        %v936 = vshrl.u32 %v935, 7
        %v937 = vsub.s32 %v934, %v936
        %v938 = vrot.slane %v898, %v937
        %939 = vrot.lane.b32.xlu0 %v909, 27
        %v940 = vpop.permute.xlu0 %939
        %941 = vrot.lane.b32.xlu0 %v916, 27
        %v942 = vpop.permute.xlu0 %941
        %943 = vrot.lane.b32.xlu0 %v924, 27
        %v944 = vpop.permute.xlu0 %943
        %945 = vrot.lane.b32.xlu0 %v931, 27
        %v946 = vpop.permute.xlu0 %945
        %947 = vrot.lane.b32.xlu0 %v938, 27
        %v948 = vpop.permute.xlu0 %947
        %v949 = vrot.slane %v940, 4
        %v950 = vrot.slane %v942, 4
        %v951 = vrot.slane %v944, 4
        %v952 = vrot.slane %v946, 4
        %v953 = vrot.slane %v948, 4
        %v954 = vsel %vm366, %v949, %v950
        %vm955 = vcmask 220160
        %v956 = vsel %vm955, %v940, %v954
        %v957 = vsel %vm366, %v950, %v951
        %v958 = vsel %vm955, %v942, %v957
        %v959 = vsel %vm366, %v951, %v952
        %v960 = vsel %vm955, %v944, %v959
        %v961 = vsel %vm366, %v952, %v953
        %v962 = vsel %vm955, %v946, %v961
        %967 = vst [vmem:[#allocation2 + $0xa0] sm:$0x33] %v956
        %968 = vst [vmem:[#allocation2 + $0xa8] sm:$0x33] %v958
        %969 = vst [vmem:[#allocation2 + $0xb0] sm:$0x33] %v960
        %970 = vst.msk [vmem:[#allocation2 + $0xb8] sm:$0x33] %vm318, %v962
        %v971 = vld [vmem:[%s239] sm:$0xff]
        %v972 = vld [vmem:[%s239 + $0x8] sm:$0xff]
        %v973 = vld [vmem:[%s239 + $0x10] sm:$0x3]
        %v977 = vcombine.low %v971, %v971
        %v979 = vunpack.c.l.s4 1983009808
        %v980 = vunpack.c.0.s8 %v979
        %v981 = vlaneseq
        %v982 = vshrl.u32 %v981, 7
        %v983 = vsub.s32 %v980, %v982
        %v984 = vrot.slane %v977, %v983
        %v986 = vunpack.c.l.s4 1983009808
        %v987 = vunpack.c.0.s8 %v986
        %v988 = vlaneseq
        %v989 = vshrl.u32 %v988, 7
        %v990 = vsub.s32 %v987, %v989
        %v991 = vrot.slane %v971, %v990
        %v992 = vcombine.low %v972, %v972
        %v994 = vunpack.c.l.s4 1983009808
        %v995 = vunpack.c.0.s8 %v994
        %v996 = vlaneseq
        %v997 = vshrl.u32 %v996, 7
        %v998 = vsub.s32 %v995, %v997
        %v999 = vrot.slane %v992, %v998
        %v1001 = vunpack.c.l.s4 1983009808
        %v1002 = vunpack.c.0.s8 %v1001
        %v1003 = vlaneseq
        %v1004 = vshrl.u32 %v1003, 7
        %v1005 = vsub.s32 %v1002, %v1004
        %v1006 = vrot.slane %v972, %v1005
        %v1007 = vcombine.low %v973, %v973
        %v1009 = vunpack.c.l.s4 1983009808
        %v1010 = vunpack.c.0.s8 %v1009
        %v1011 = vlaneseq
        %v1012 = vshrl.u32 %v1011, 7
        %v1013 = vsub.s32 %v1010, %v1012
        %v1014 = vrot.slane %v1007, %v1013
        %1015 = vrot.lane.b32.xlu0 %v984, 26
        %v1016 = vpop.permute.xlu0 %1015
        %1017 = vrot.lane.b32.xlu0 %v991, 26
        %v1018 = vpop.permute.xlu0 %1017
        %1019 = vrot.lane.b32.xlu0 %v999, 26
        %v1020 = vpop.permute.xlu0 %1019
        %1021 = vrot.lane.b32.xlu0 %v1006, 26
        %v1022 = vpop.permute.xlu0 %1021
        %1023 = vrot.lane.b32.xlu0 %v1014, 26
        %v1024 = vpop.permute.xlu0 %1023
        %v1025 = vrot.slane %v1016, 4
        %v1026 = vrot.slane %v1018, 4
        %v1027 = vrot.slane %v1020, 4
        %v1028 = vrot.slane %v1022, 4
        %v1029 = vrot.slane %v1024, 4
        %v1030 = vsel %vm366, %v1025, %v1026
        %vm1031 = vcmask 211968
        %v1032 = vsel %vm1031, %v1016, %v1030
        %v1033 = vsel %vm366, %v1026, %v1027
        %v1034 = vsel %vm1031, %v1018, %v1033
        %v1035 = vsel %vm366, %v1027, %v1028
        %v1036 = vsel %vm1031, %v1020, %v1035
        %v1037 = vsel %vm366, %v1028, %v1029
        %v1038 = vsel %vm1031, %v1022, %v1037
        %1043 = vst [vmem:[#allocation2 + $0xa0] sm:$0xcc] %v1032
        %1044 = vst [vmem:[#allocation2 + $0xa8] sm:$0xcc] %v1034
        %1045 = vst [vmem:[#allocation2 + $0xb0] sm:$0xcc] %v1036
        %1046 = vst.msk [vmem:[#allocation2 + $0xb8] sm:$0xcc] %vm384, %v1038
        %v1047 = vld [vmem:[%s239] sm:$0xff]
        %v1048 = vld [vmem:[%s239 + $0x8] sm:$0xff]
        %v1049 = vld [vmem:[%s239 + $0x10] sm:$0x3]
        %v1053 = vcombine.high %v1047, %v1047
        %v1055 = vunpack.c.l.s4 1983009808
        %v1056 = vunpack.c.0.s8 %v1055
        %v1057 = vlaneseq
        %v1058 = vshrl.u32 %v1057, 7
        %v1059 = vsub.s32 %v1056, %v1058
        %v1060 = vrot.slane %v1047, %v1059
        %v1062 = vunpack.c.l.s4 1983009808
        %v1063 = vunpack.c.0.s8 %v1062
        %v1064 = vlaneseq
        %v1065 = vshrl.u32 %v1064, 7
        %v1066 = vsub.s32 %v1063, %v1065
        %v1067 = vrot.slane %v1053, %v1066
        %v1068 = vcombine.high %v1048, %v1048
        %v1070 = vunpack.c.l.s4 1983009808
        %v1071 = vunpack.c.0.s8 %v1070
        %v1072 = vlaneseq
        %v1073 = vshrl.u32 %v1072, 7
        %v1074 = vsub.s32 %v1071, %v1073
        %v1075 = vrot.slane %v1048, %v1074
        %v1077 = vunpack.c.l.s4 1983009808
        %v1078 = vunpack.c.0.s8 %v1077
        %v1079 = vlaneseq
        %v1080 = vshrl.u32 %v1079, 7
        %v1081 = vsub.s32 %v1078, %v1080
        %v1082 = vrot.slane %v1068, %v1081
        %v1084 = vunpack.c.l.s4 1983009808
        %v1085 = vunpack.c.0.s8 %v1084
        %v1086 = vlaneseq
        %v1087 = vshrl.u32 %v1086, 7
        %v1088 = vsub.s32 %v1085, %v1087
        %v1089 = vrot.slane %v1049, %v1088
        %1090 = vrot.lane.b32.xlu0 %v1060, 18
        %v1091 = vpop.permute.xlu0 %1090
        %1092 = vrot.lane.b32.xlu0 %v1067, 18
        %v1093 = vpop.permute.xlu0 %1092
        %1094 = vrot.lane.b32.xlu0 %v1075, 18
        %v1095 = vpop.permute.xlu0 %1094
        %1096 = vrot.lane.b32.xlu0 %v1082, 18
        %v1097 = vpop.permute.xlu0 %1096
        %1098 = vrot.lane.b32.xlu0 %v1089, 18
        %v1099 = vpop.permute.xlu0 %1098
        %v1100 = vrot.slane %v1091, 4
        %v1101 = vrot.slane %v1093, 4
        %v1102 = vrot.slane %v1095, 4
        %v1103 = vrot.slane %v1097, 4
        %v1104 = vrot.slane %v1099, 4
        %v1105 = vsel %vm366, %v1100, %v1101
        %vm1106 = vcmask 146432
        %v1107 = vsel %vm1106, %v1091, %v1105
        %v1108 = vsel %vm366, %v1101, %v1102
        %v1109 = vsel %vm1106, %v1093, %v1108
        %v1110 = vsel %vm366, %v1102, %v1103
        %v1111 = vsel %vm1106, %v1095, %v1110
        %v1112 = vsel %vm366, %v1103, %v1104
        %v1113 = vsel %vm1106, %v1097, %v1112
        %1118 = vst [vmem:[#allocation2 + $0xc0] sm:$0x33] %v1107
        %1119 = vst [vmem:[#allocation2 + $0xc8] sm:$0x33] %v1109
        %1120 = vst [vmem:[#allocation2 + $0xd0] sm:$0x33] %v1111
        %1121 = vst.msk [vmem:[#allocation2 + $0xd8] sm:$0x33] %vm318, %v1113
        %v1122 = vld [vmem:[%s239] sm:$0xff]
        %v1123 = vld [vmem:[%s239 + $0x8] sm:$0xff]
        %v1124 = vld [vmem:[%s239 + $0x10] sm:$0x3]
        %v1128 = vcombine.low %v1122, %v1122
        %v1130 = vunpack.c.l.s4 1983009808
        %v1131 = vunpack.c.0.s8 %v1130
        %v1132 = vlaneseq
        %v1133 = vshrl.u32 %v1132, 7
        %v1134 = vsub.s32 %v1131, %v1133
        %v1135 = vrot.slane %v1128, %v1134
        %v1137 = vunpack.c.l.s4 1983009808
        %v1138 = vunpack.c.0.s8 %v1137
        %v1139 = vlaneseq
        %v1140 = vshrl.u32 %v1139, 7
        %v1141 = vsub.s32 %v1138, %v1140
        %v1142 = vrot.slane %v1122, %v1141
        %v1143 = vcombine.low %v1123, %v1123
        %v1145 = vunpack.c.l.s4 1983009808
        %v1146 = vunpack.c.0.s8 %v1145
        %v1147 = vlaneseq
        %v1148 = vshrl.u32 %v1147, 7
        %v1149 = vsub.s32 %v1146, %v1148
        %v1150 = vrot.slane %v1143, %v1149
        %v1152 = vunpack.c.l.s4 1983009808
        %v1153 = vunpack.c.0.s8 %v1152
        %v1154 = vlaneseq
        %v1155 = vshrl.u32 %v1154, 7
        %v1156 = vsub.s32 %v1153, %v1155
        %v1157 = vrot.slane %v1123, %v1156
        %v1158 = vcombine.low %v1124, %v1124
        %v1160 = vunpack.c.l.s4 1983009808
        %v1161 = vunpack.c.0.s8 %v1160
        %v1162 = vlaneseq
        %v1163 = vshrl.u32 %v1162, 7
        %v1164 = vsub.s32 %v1161, %v1163
        %v1165 = vrot.slane %v1158, %v1164
        %1166 = vrot.lane.b32.xlu0 %v1135, 17
        %v1167 = vpop.permute.xlu0 %1166
        %1168 = vrot.lane.b32.xlu0 %v1142, 17
        %v1169 = vpop.permute.xlu0 %1168
        %1170 = vrot.lane.b32.xlu0 %v1150, 17
        %v1171 = vpop.permute.xlu0 %1170
        %1172 = vrot.lane.b32.xlu0 %v1157, 17
        %v1173 = vpop.permute.xlu0 %1172
        %1174 = vrot.lane.b32.xlu0 %v1165, 17
        %v1175 = vpop.permute.xlu0 %1174
        %v1176 = vrot.slane %v1167, 4
        %v1177 = vrot.slane %v1169, 4
        %v1178 = vrot.slane %v1171, 4
        %v1179 = vrot.slane %v1173, 4
        %v1180 = vrot.slane %v1175, 4
        %v1181 = vsel %vm366, %v1176, %v1177
        %vm1182 = vcmask 138240
        %v1183 = vsel %vm1182, %v1167, %v1181
        %v1184 = vsel %vm366, %v1177, %v1178
        %v1185 = vsel %vm1182, %v1169, %v1184
        %v1186 = vsel %vm366, %v1178, %v1179
        %v1187 = vsel %vm1182, %v1171, %v1186
        %v1188 = vsel %vm366, %v1179, %v1180
        %v1189 = vsel %vm1182, %v1173, %v1188
        %1194 = vst [vmem:[#allocation2 + $0xc0] sm:$0xcc] %v1183
        %1195 = vst [vmem:[#allocation2 + $0xc8] sm:$0xcc] %v1185
        %1196 = vst [vmem:[#allocation2 + $0xd0] sm:$0xcc] %v1187
        %1197 = vst.msk [vmem:[#allocation2 + $0xd8] sm:$0xcc] %vm384, %v1189
        %v1198 = vld [vmem:[%s239] sm:$0xff]
        %v1199 = vld [vmem:[%s239 + $0x8] sm:$0xff]
        %v1200 = vld [vmem:[%s239 + $0x10] sm:$0x3]
        %v1204 = vcombine.high %v1198, %v1198
        %v1206 = vunpack.c.l.s4 1983009808
        %v1207 = vunpack.c.0.s8 %v1206
        %v1208 = vlaneseq
        %v1209 = vshrl.u32 %v1208, 7
        %v1210 = vsub.s32 %v1207, %v1209
        %v1211 = vrot.slane %v1198, %v1210
        %v1213 = vunpack.c.l.s4 1983009808
        %v1214 = vunpack.c.0.s8 %v1213
        %v1215 = vlaneseq
        %v1216 = vshrl.u32 %v1215, 7
        %v1217 = vsub.s32 %v1214, %v1216
        %v1218 = vrot.slane %v1204, %v1217
        %v1219 = vcombine.high %v1199, %v1199
        %v1221 = vunpack.c.l.s4 1983009808
        %v1222 = vunpack.c.0.s8 %v1221
        %v1223 = vlaneseq
        %v1224 = vshrl.u32 %v1223, 7
        %v1225 = vsub.s32 %v1222, %v1224
        %v1226 = vrot.slane %v1199, %v1225
        %v1228 = vunpack.c.l.s4 1983009808
        %v1229 = vunpack.c.0.s8 %v1228
        %v1230 = vlaneseq
        %v1231 = vshrl.u32 %v1230, 7
        %v1232 = vsub.s32 %v1229, %v1231
        %v1233 = vrot.slane %v1219, %v1232
        %v1235 = vunpack.c.l.s4 1983009808
        %v1236 = vunpack.c.0.s8 %v1235
        %v1237 = vlaneseq
        %v1238 = vshrl.u32 %v1237, 7
        %v1239 = vsub.s32 %v1236, %v1238
        %v1240 = vrot.slane %v1200, %v1239
        %1241 = vrot.lane.b32.xlu0 %v1211, 16
        %v1242 = vpop.permute.xlu0 %1241
        %1243 = vrot.lane.b32.xlu0 %v1218, 16
        %v1244 = vpop.permute.xlu0 %1243
        %1245 = vrot.lane.b32.xlu0 %v1226, 16
        %v1246 = vpop.permute.xlu0 %1245
        %1247 = vrot.lane.b32.xlu0 %v1233, 16
        %v1248 = vpop.permute.xlu0 %1247
        %1249 = vrot.lane.b32.xlu0 %v1240, 16
        %v1250 = vpop.permute.xlu0 %1249
        %v1251 = vrot.slane %v1242, 4
        %v1252 = vrot.slane %v1244, 4
        %v1253 = vrot.slane %v1246, 4
        %v1254 = vrot.slane %v1248, 4
        %v1255 = vrot.slane %v1250, 4
        %v1256 = vsel %vm366, %v1251, %v1252
        %vm1257 = vcmask 130048
        %v1258 = vsel %vm1257, %v1242, %v1256
        %v1259 = vsel %vm366, %v1252, %v1253
        %v1260 = vsel %vm1257, %v1244, %v1259
        %v1261 = vsel %vm366, %v1253, %v1254
        %v1262 = vsel %vm1257, %v1246, %v1261
        %v1263 = vsel %vm366, %v1254, %v1255
        %v1264 = vsel %vm1257, %v1248, %v1263
        %1269 = vst [vmem:[#allocation2 + $0xe0] sm:$0x33] %v1258
        %1270 = vst [vmem:[#allocation2 + $0xe8] sm:$0x33] %v1260
        %1271 = vst [vmem:[#allocation2 + $0xf0] sm:$0x33] %v1262
        %1272 = vst.msk [vmem:[#allocation2 + $0xf8] sm:$0x33] %vm318, %v1264
        %v1273 = vld [vmem:[%s239] sm:$0xff]
        %v1274 = vld [vmem:[%s239 + $0x8] sm:$0xff]
        %v1275 = vld [vmem:[%s239 + $0x10] sm:$0x3]
        %v1279 = vcombine.low %v1273, %v1273
        %v1281 = vunpack.c.l.s4 1983009808
        %v1282 = vunpack.c.0.s8 %v1281
        %v1283 = vlaneseq
        %v1284 = vshrl.u32 %v1283, 7
        %v1285 = vsub.s32 %v1282, %v1284
        %v1286 = vrot.slane %v1279, %v1285
        %v1288 = vunpack.c.l.s4 1983009808
        %v1289 = vunpack.c.0.s8 %v1288
        %v1290 = vlaneseq
        %v1291 = vshrl.u32 %v1290, 7
        %v1292 = vsub.s32 %v1289, %v1291
        %v1293 = vrot.slane %v1273, %v1292
        %v1294 = vcombine.low %v1274, %v1274
        %v1296 = vunpack.c.l.s4 1983009808
        %v1297 = vunpack.c.0.s8 %v1296
        %v1298 = vlaneseq
        %v1299 = vshrl.u32 %v1298, 7
        %v1300 = vsub.s32 %v1297, %v1299
        %v1301 = vrot.slane %v1294, %v1300
        %v1303 = vunpack.c.l.s4 1983009808
        %v1304 = vunpack.c.0.s8 %v1303
        %v1305 = vlaneseq
        %v1306 = vshrl.u32 %v1305, 7
        %v1307 = vsub.s32 %v1304, %v1306
        %v1308 = vrot.slane %v1274, %v1307
        %v1309 = vcombine.low %v1275, %v1275
        %v1311 = vunpack.c.l.s4 1983009808
        %v1312 = vunpack.c.0.s8 %v1311
        %v1313 = vlaneseq
        %v1314 = vshrl.u32 %v1313, 7
        %v1315 = vsub.s32 %v1312, %v1314
        %v1316 = vrot.slane %v1309, %v1315
        %1317 = vrot.lane.b32.xlu0 %v1286, 8
        %v1318 = vpop.permute.xlu0 %1317
        %1319 = vrot.lane.b32.xlu0 %v1293, 8
        %v1320 = vpop.permute.xlu0 %1319
        %1321 = vrot.lane.b32.xlu0 %v1301, 8
        %v1322 = vpop.permute.xlu0 %1321
        %1323 = vrot.lane.b32.xlu0 %v1308, 8
        %v1324 = vpop.permute.xlu0 %1323
        %1325 = vrot.lane.b32.xlu0 %v1316, 8
        %v1326 = vpop.permute.xlu0 %1325
        %v1327 = vrot.slane %v1318, 4
        %v1328 = vrot.slane %v1320, 4
        %v1329 = vrot.slane %v1322, 4
        %v1330 = vrot.slane %v1324, 4
        %v1331 = vrot.slane %v1326, 4
        %v1332 = vsel %vm366, %v1327, %v1328
        %vm1333 = vcmask 64512
        %v1334 = vsel %vm1333, %v1318, %v1332
        %v1335 = vsel %vm366, %v1328, %v1329
        %v1336 = vsel %vm1333, %v1320, %v1335
        %v1337 = vsel %vm366, %v1329, %v1330
        %v1338 = vsel %vm1333, %v1322, %v1337
        %v1339 = vsel %vm366, %v1330, %v1331
        %v1340 = vsel %vm1333, %v1324, %v1339
        %1345 = vst [vmem:[#allocation2 + $0xe0] sm:$0xcc] %v1334
        %1346 = vst [vmem:[#allocation2 + $0xe8] sm:$0xcc] %v1336
        %1347 = vst [vmem:[#allocation2 + $0xf0] sm:$0xcc] %v1338
        %1348 = vst.msk [vmem:[#allocation2 + $0xf8] sm:$0xcc] %vm384, %v1340
        %v1349 = vld [vmem:[%s239] sm:$0xff]
        %v1350 = vld [vmem:[%s239 + $0x8] sm:$0xff]
        %v1351 = vld [vmem:[%s239 + $0x10] sm:$0x3]
        %v1355 = vcombine.high %v1349, %v1349
        %v1357 = vunpack.c.l.s4 1983009808
        %v1358 = vunpack.c.0.s8 %v1357
        %v1359 = vlaneseq
        %v1360 = vshrl.u32 %v1359, 7
        %v1361 = vsub.s32 %v1358, %v1360
        %v1362 = vrot.slane %v1349, %v1361
        %v1364 = vunpack.c.l.s4 1983009808
        %v1365 = vunpack.c.0.s8 %v1364
        %v1366 = vlaneseq
        %v1367 = vshrl.u32 %v1366, 7
        %v1368 = vsub.s32 %v1365, %v1367
        %v1369 = vrot.slane %v1355, %v1368
        %v1370 = vcombine.high %v1350, %v1350
        %v1372 = vunpack.c.l.s4 1983009808
        %v1373 = vunpack.c.0.s8 %v1372
        %v1374 = vlaneseq
        %v1375 = vshrl.u32 %v1374, 7
        %v1376 = vsub.s32 %v1373, %v1375
        %v1377 = vrot.slane %v1350, %v1376
        %v1379 = vunpack.c.l.s4 1983009808
        %v1380 = vunpack.c.0.s8 %v1379
        %v1381 = vlaneseq
        %v1382 = vshrl.u32 %v1381, 7
        %v1383 = vsub.s32 %v1380, %v1382
        %v1384 = vrot.slane %v1370, %v1383
        %v1386 = vunpack.c.l.s4 1983009808
        %v1387 = vunpack.c.0.s8 %v1386
        %v1388 = vlaneseq
        %v1389 = vshrl.u32 %v1388, 7
        %v1390 = vsub.s32 %v1387, %v1389
        %v1391 = vrot.slane %v1351, %v1390
        %1392 = vrot.lane.b32.xlu0 %v1362, 7
        %v1393 = vpop.permute.xlu0 %1392
        %1394 = vrot.lane.b32.xlu0 %v1369, 7
        %v1395 = vpop.permute.xlu0 %1394
        %1396 = vrot.lane.b32.xlu0 %v1377, 7
        %v1397 = vpop.permute.xlu0 %1396
        %1398 = vrot.lane.b32.xlu0 %v1384, 7
        %v1399 = vpop.permute.xlu0 %1398
        %1400 = vrot.lane.b32.xlu0 %v1391, 7
        %v1401 = vpop.permute.xlu0 %1400
        %v1402 = vrot.slane %v1393, 4
        %v1403 = vrot.slane %v1395, 4
        %v1404 = vrot.slane %v1397, 4
        %v1405 = vrot.slane %v1399, 4
        %v1406 = vrot.slane %v1401, 4
        %v1407 = vsel %vm366, %v1402, %v1403
        %vm1408 = vcmask 56320
        %v1409 = vsel %vm1408, %v1393, %v1407
        %v1410 = vsel %vm366, %v1403, %v1404
        %v1411 = vsel %vm1408, %v1395, %v1410
        %v1412 = vsel %vm366, %v1404, %v1405
        %v1413 = vsel %vm1408, %v1397, %v1412
        %v1414 = vsel %vm366, %v1405, %v1406
        %v1415 = vsel %vm1408, %v1399, %v1414
        %1420 = vst [vmem:[#allocation2 + $0x100] sm:$0x33] %v1409
        %1421 = vst [vmem:[#allocation2 + $0x108] sm:$0x33] %v1411
        %1422 = vst [vmem:[#allocation2 + $0x110] sm:$0x33] %v1413
        %1423 = vst.msk [vmem:[#allocation2 + $0x118] sm:$0x33] %vm318, %v1415
        %v1424 = vld [vmem:[%s239] sm:$0xff]
        %v1425 = vld [vmem:[%s239 + $0x8] sm:$0xff]
        %v1426 = vld [vmem:[%s239 + $0x10] sm:$0x3]
        %v1430 = vcombine.low %v1424, %v1424
        %v1432 = vunpack.c.l.s4 1983009808
        %v1433 = vunpack.c.0.s8 %v1432
        %v1434 = vlaneseq
        %v1435 = vshrl.u32 %v1434, 7
        %v1436 = vsub.s32 %v1433, %v1435
        %v1437 = vrot.slane %v1430, %v1436
        %v1439 = vunpack.c.l.s4 1983009808
        %v1440 = vunpack.c.0.s8 %v1439
        %v1441 = vlaneseq
        %v1442 = vshrl.u32 %v1441, 7
        %v1443 = vsub.s32 %v1440, %v1442
        %v1444 = vrot.slane %v1424, %v1443
        %v1445 = vcombine.low %v1425, %v1425
        %v1447 = vunpack.c.l.s4 1983009808
        %v1448 = vunpack.c.0.s8 %v1447
        %v1449 = vlaneseq
        %v1450 = vshrl.u32 %v1449, 7
        %v1451 = vsub.s32 %v1448, %v1450
        %v1452 = vrot.slane %v1445, %v1451
        %v1454 = vunpack.c.l.s4 1983009808
        %v1455 = vunpack.c.0.s8 %v1454
        %v1456 = vlaneseq
        %v1457 = vshrl.u32 %v1456, 7
        %v1458 = vsub.s32 %v1455, %v1457
        %v1459 = vrot.slane %v1425, %v1458
        %v1460 = vcombine.low %v1426, %v1426
        %v1462 = vunpack.c.l.s4 1983009808
        %v1463 = vunpack.c.0.s8 %v1462
        %v1464 = vlaneseq
        %v1465 = vshrl.u32 %v1464, 7
        %v1466 = vsub.s32 %v1463, %v1465
        %v1467 = vrot.slane %v1460, %v1466
        %1468 = vrot.lane.b32.xlu0 %v1437, 6
        %v1469 = vpop.permute.xlu0 %1468
        %1470 = vrot.lane.b32.xlu0 %v1444, 6
        %v1471 = vpop.permute.xlu0 %1470
        %1472 = vrot.lane.b32.xlu0 %v1452, 6
        %v1473 = vpop.permute.xlu0 %1472
        %1474 = vrot.lane.b32.xlu0 %v1459, 6
        %v1475 = vpop.permute.xlu0 %1474
        %1476 = vrot.lane.b32.xlu0 %v1467, 6
        %v1477 = vpop.permute.xlu0 %1476
        %v1478 = vrot.slane %v1469, 4
        %v1479 = vrot.slane %v1471, 4
        %v1480 = vrot.slane %v1473, 4
        %v1481 = vrot.slane %v1475, 4
        %v1482 = vrot.slane %v1477, 4
        %v1483 = vsel %vm366, %v1478, %v1479
        %vm1484 = vcmask 48128
        %v1485 = vsel %vm1484, %v1469, %v1483
        %v1486 = vsel %vm366, %v1479, %v1480
        %v1487 = vsel %vm1484, %v1471, %v1486
        %v1488 = vsel %vm366, %v1480, %v1481
        %v1489 = vsel %vm1484, %v1473, %v1488
        %v1490 = vsel %vm366, %v1481, %v1482
        %v1491 = vsel %vm1484, %v1475, %v1490
        %1496 = vst [vmem:[#allocation2 + $0x100] sm:$0xcc] %v1485
        %1497 = vst [vmem:[#allocation2 + $0x108] sm:$0xcc] %v1487
        %1498 = vst [vmem:[#allocation2 + $0x110] sm:$0xcc] %v1489
        %1499 = vst.msk [vmem:[#allocation2 + $0x118] sm:$0xcc] %vm384, %v1491
        %v1500 = vld [vmem:[%s239 + $0x2] sm:$0xff]
        %v1501 = vld [vmem:[%s239 + $0xa] sm:$0xff]
        %v1502 = vld [vmem:[%s239 + $0x12] sm:$0x3]
        %v1506 = vcombine.high %v1500, %v1500
        %v1508 = vunpack.c.l.s4 1983009808
        %v1509 = vunpack.c.0.s8 %v1508
        %v1510 = vlaneseq
        %v1511 = vshrl.u32 %v1510, 7
        %v1512 = vsub.s32 %v1509, %v1511
        %v1513 = vrot.slane %v1500, %v1512
        %v1515 = vunpack.c.l.s4 1983009808
        %v1516 = vunpack.c.0.s8 %v1515
        %v1517 = vlaneseq
        %v1518 = vshrl.u32 %v1517, 7
        %v1519 = vsub.s32 %v1516, %v1518
        %v1520 = vrot.slane %v1506, %v1519
        %v1521 = vcombine.high %v1501, %v1501
        %v1523 = vunpack.c.l.s4 1983009808
        %v1524 = vunpack.c.0.s8 %v1523
        %v1525 = vlaneseq
        %v1526 = vshrl.u32 %v1525, 7
        %v1527 = vsub.s32 %v1524, %v1526
        %v1528 = vrot.slane %v1501, %v1527
        %v1530 = vunpack.c.l.s4 1983009808
        %v1531 = vunpack.c.0.s8 %v1530
        %v1532 = vlaneseq
        %v1533 = vshrl.u32 %v1532, 7
        %v1534 = vsub.s32 %v1531, %v1533
        %v1535 = vrot.slane %v1521, %v1534
        %v1537 = vunpack.c.l.s4 1983009808
        %v1538 = vunpack.c.0.s8 %v1537
        %v1539 = vlaneseq
        %v1540 = vshrl.u32 %v1539, 7
        %v1541 = vsub.s32 %v1538, %v1540
        %v1542 = vrot.slane %v1502, %v1541
        %1543 = vrot.lane.b32.xlu0 %v1513, 56
        %v1544 = vpop.permute.xlu0 %1543
        %1545 = vrot.lane.b32.xlu0 %v1520, 56
        %v1546 = vpop.permute.xlu0 %1545
        %1547 = vrot.lane.b32.xlu0 %v1528, 56
        %v1548 = vpop.permute.xlu0 %1547
        %1549 = vrot.lane.b32.xlu0 %v1535, 56
        %v1550 = vpop.permute.xlu0 %1549
        %1551 = vrot.lane.b32.xlu0 %v1542, 56
        %v1552 = vpop.permute.xlu0 %1551
        %v1553 = vrot.slane %v1544, 4
        %v1554 = vrot.slane %v1546, 4
        %v1555 = vrot.slane %v1548, 4
        %v1556 = vrot.slane %v1550, 4
        %v1557 = vrot.slane %v1552, 4
        %v1558 = vsel %vm366, %v1553, %v1554
        %vm1559 = vcmask 457728
        %v1560 = vsel %vm1559, %v1544, %v1558
        %v1561 = vsel %vm366, %v1554, %v1555
        %v1562 = vsel %vm1559, %v1546, %v1561
        %v1563 = vsel %vm366, %v1555, %v1556
        %v1564 = vsel %vm1559, %v1548, %v1563
        %v1565 = vsel %vm366, %v1556, %v1557
        %v1566 = vsel %vm1559, %v1550, %v1565
        %1571 = vst [vmem:[#allocation2 + $0x120] sm:$0x33] %v1560
        %1572 = vst [vmem:[#allocation2 + $0x128] sm:$0x33] %v1562
        %1573 = vst [vmem:[#allocation2 + $0x130] sm:$0x33] %v1564
        %1574 = vst.msk [vmem:[#allocation2 + $0x138] sm:$0x33] %vm318, %v1566
        %v1575 = vld [vmem:[%s239 + $0x2] sm:$0xff]
        %v1576 = vld [vmem:[%s239 + $0xa] sm:$0xff]
        %v1577 = vld [vmem:[%s239 + $0x12] sm:$0x3]
        %v1581 = vcombine.low %v1575, %v1575
        %v1583 = vunpack.c.l.s4 1983009808
        %v1584 = vunpack.c.0.s8 %v1583
        %v1585 = vlaneseq
        %v1586 = vshrl.u32 %v1585, 7
        %v1587 = vsub.s32 %v1584, %v1586
        %v1588 = vrot.slane %v1581, %v1587
        %v1590 = vunpack.c.l.s4 1983009808
        %v1591 = vunpack.c.0.s8 %v1590
        %v1592 = vlaneseq
        %v1593 = vshrl.u32 %v1592, 7
        %v1594 = vsub.s32 %v1591, %v1593
        %v1595 = vrot.slane %v1575, %v1594
        %v1596 = vcombine.low %v1576, %v1576
        %v1598 = vunpack.c.l.s4 1983009808
        %v1599 = vunpack.c.0.s8 %v1598
        %v1600 = vlaneseq
        %v1601 = vshrl.u32 %v1600, 7
        %v1602 = vsub.s32 %v1599, %v1601
        %v1603 = vrot.slane %v1596, %v1602
        %v1605 = vunpack.c.l.s4 1983009808
        %v1606 = vunpack.c.0.s8 %v1605
        %v1607 = vlaneseq
        %v1608 = vshrl.u32 %v1607, 7
        %v1609 = vsub.s32 %v1606, %v1608
        %v1610 = vrot.slane %v1576, %v1609
        %v1611 = vcombine.low %v1577, %v1577
        %v1613 = vunpack.c.l.s4 1983009808
        %v1614 = vunpack.c.0.s8 %v1613
        %v1615 = vlaneseq
        %v1616 = vshrl.u32 %v1615, 7
        %v1617 = vsub.s32 %v1614, %v1616
        %v1618 = vrot.slane %v1611, %v1617
        %1619 = vrot.lane.b32.xlu0 %v1588, 55
        %v1620 = vpop.permute.xlu0 %1619
        %1621 = vrot.lane.b32.xlu0 %v1595, 55
        %v1622 = vpop.permute.xlu0 %1621
        %1623 = vrot.lane.b32.xlu0 %v1603, 55
        %v1624 = vpop.permute.xlu0 %1623
        %1625 = vrot.lane.b32.xlu0 %v1610, 55
        %v1626 = vpop.permute.xlu0 %1625
        %1627 = vrot.lane.b32.xlu0 %v1618, 55
        %v1628 = vpop.permute.xlu0 %1627
        %v1629 = vrot.slane %v1620, 4
        %v1630 = vrot.slane %v1622, 4
        %v1631 = vrot.slane %v1624, 4
        %v1632 = vrot.slane %v1626, 4
        %v1633 = vrot.slane %v1628, 4
        %v1634 = vsel %vm366, %v1629, %v1630
        %vm1635 = vcmask 449536
        %v1636 = vsel %vm1635, %v1620, %v1634
        %v1637 = vsel %vm366, %v1630, %v1631
        %v1638 = vsel %vm1635, %v1622, %v1637
        %v1639 = vsel %vm366, %v1631, %v1632
        %v1640 = vsel %vm1635, %v1624, %v1639
        %v1641 = vsel %vm366, %v1632, %v1633
        %v1642 = vsel %vm1635, %v1626, %v1641
        %1647 = vst [vmem:[#allocation2 + $0x120] sm:$0xcc] %v1636
        %1648 = vst [vmem:[#allocation2 + $0x128] sm:$0xcc] %v1638
        %1649 = vst [vmem:[#allocation2 + $0x130] sm:$0xcc] %v1640
        %1650 = vst.msk [vmem:[#allocation2 + $0x138] sm:$0xcc] %vm384, %v1642
        %v1651 = vld [vmem:[%s239 + $0x2] sm:$0xff]
        %v1652 = vld [vmem:[%s239 + $0xa] sm:$0xff]
        %v1653 = vld [vmem:[%s239 + $0x12] sm:$0x3]
        %v1657 = vcombine.high %v1651, %v1651
        %v1659 = vunpack.c.l.s4 1983009808
        %v1660 = vunpack.c.0.s8 %v1659
        %v1661 = vlaneseq
        %v1662 = vshrl.u32 %v1661, 7
        %v1663 = vsub.s32 %v1660, %v1662
        %v1664 = vrot.slane %v1651, %v1663
        %v1666 = vunpack.c.l.s4 1983009808
        %v1667 = vunpack.c.0.s8 %v1666
        %v1668 = vlaneseq
        %v1669 = vshrl.u32 %v1668, 7
        %v1670 = vsub.s32 %v1667, %v1669
        %v1671 = vrot.slane %v1657, %v1670
        %v1672 = vcombine.high %v1652, %v1652
        %v1674 = vunpack.c.l.s4 1983009808
        %v1675 = vunpack.c.0.s8 %v1674
        %v1676 = vlaneseq
        %v1677 = vshrl.u32 %v1676, 7
        %v1678 = vsub.s32 %v1675, %v1677
        %v1679 = vrot.slane %v1652, %v1678
        %v1681 = vunpack.c.l.s4 1983009808
        %v1682 = vunpack.c.0.s8 %v1681
        %v1683 = vlaneseq
        %v1684 = vshrl.u32 %v1683, 7
        %v1685 = vsub.s32 %v1682, %v1684
        %v1686 = vrot.slane %v1672, %v1685
        %v1688 = vunpack.c.l.s4 1983009808
        %v1689 = vunpack.c.0.s8 %v1688
        %v1690 = vlaneseq
        %v1691 = vshrl.u32 %v1690, 7
        %v1692 = vsub.s32 %v1689, %v1691
        %v1693 = vrot.slane %v1653, %v1692
        %1694 = vrot.lane.b32.xlu0 %v1664, 54
        %v1695 = vpop.permute.xlu0 %1694
        %1696 = vrot.lane.b32.xlu0 %v1671, 54
        %v1697 = vpop.permute.xlu0 %1696
        %1698 = vrot.lane.b32.xlu0 %v1679, 54
        %v1699 = vpop.permute.xlu0 %1698
        %1700 = vrot.lane.b32.xlu0 %v1686, 54
        %v1701 = vpop.permute.xlu0 %1700
        %1702 = vrot.lane.b32.xlu0 %v1693, 54
        %v1703 = vpop.permute.xlu0 %1702
        %v1704 = vrot.slane %v1695, 4
        %v1705 = vrot.slane %v1697, 4
        %v1706 = vrot.slane %v1699, 4
        %v1707 = vrot.slane %v1701, 4
        %v1708 = vrot.slane %v1703, 4
        %v1709 = vsel %vm366, %v1704, %v1705
        %vm1710 = vcmask 441344
        %v1711 = vsel %vm1710, %v1695, %v1709
        %v1712 = vsel %vm366, %v1705, %v1706
        %v1713 = vsel %vm1710, %v1697, %v1712
        %v1714 = vsel %vm366, %v1706, %v1707
        %v1715 = vsel %vm1710, %v1699, %v1714
        %v1716 = vsel %vm366, %v1707, %v1708
        %v1717 = vsel %vm1710, %v1701, %v1716
        %1722 = vst [vmem:[#allocation2 + $0x140] sm:$0x33] %v1711
        %1723 = vst [vmem:[#allocation2 + $0x148] sm:$0x33] %v1713
        %1724 = vst [vmem:[#allocation2 + $0x150] sm:$0x33] %v1715
        %1725 = vst.msk [vmem:[#allocation2 + $0x158] sm:$0x33] %vm318, %v1717
        %v1726 = vld [vmem:[%s239 + $0x2] sm:$0xff]
        %v1727 = vld [vmem:[%s239 + $0xa] sm:$0xff]
        %v1728 = vld [vmem:[%s239 + $0x12] sm:$0x3]
        %v1732 = vcombine.low %v1726, %v1726
        %v1734 = vunpack.c.l.s4 1983009808
        %v1735 = vunpack.c.0.s8 %v1734
        %v1736 = vlaneseq
        %v1737 = vshrl.u32 %v1736, 7
        %v1738 = vsub.s32 %v1735, %v1737
        %v1739 = vrot.slane %v1732, %v1738
        %v1741 = vunpack.c.l.s4 1983009808
        %v1742 = vunpack.c.0.s8 %v1741
        %v1743 = vlaneseq
        %v1744 = vshrl.u32 %v1743, 7
        %v1745 = vsub.s32 %v1742, %v1744
        %v1746 = vrot.slane %v1726, %v1745
        %v1747 = vcombine.low %v1727, %v1727
        %v1749 = vunpack.c.l.s4 1983009808
        %v1750 = vunpack.c.0.s8 %v1749
        %v1751 = vlaneseq
        %v1752 = vshrl.u32 %v1751, 7
        %v1753 = vsub.s32 %v1750, %v1752
        %v1754 = vrot.slane %v1747, %v1753
        %v1756 = vunpack.c.l.s4 1983009808
        %v1757 = vunpack.c.0.s8 %v1756
        %v1758 = vlaneseq
        %v1759 = vshrl.u32 %v1758, 7
        %v1760 = vsub.s32 %v1757, %v1759
        %v1761 = vrot.slane %v1727, %v1760
        %v1762 = vcombine.low %v1728, %v1728
        %v1764 = vunpack.c.l.s4 1983009808
        %v1765 = vunpack.c.0.s8 %v1764
        %v1766 = vlaneseq
        %v1767 = vshrl.u32 %v1766, 7
        %v1768 = vsub.s32 %v1765, %v1767
        %v1769 = vrot.slane %v1762, %v1768
        %1770 = vrot.lane.b32.xlu0 %v1739, 46
        %v1771 = vpop.permute.xlu0 %1770
        %1772 = vrot.lane.b32.xlu0 %v1746, 46
        %v1773 = vpop.permute.xlu0 %1772
        %1774 = vrot.lane.b32.xlu0 %v1754, 46
        %v1775 = vpop.permute.xlu0 %1774
        %1776 = vrot.lane.b32.xlu0 %v1761, 46
        %v1777 = vpop.permute.xlu0 %1776
        %1778 = vrot.lane.b32.xlu0 %v1769, 46
        %v1779 = vpop.permute.xlu0 %1778
        %v1780 = vrot.slane %v1771, 4
        %v1781 = vrot.slane %v1773, 4
        %v1782 = vrot.slane %v1775, 4
        %v1783 = vrot.slane %v1777, 4
        %v1784 = vrot.slane %v1779, 4
        %v1785 = vsel %vm366, %v1780, %v1781
        %vm1786 = vcmask 375808
        %v1787 = vsel %vm1786, %v1771, %v1785
        %v1788 = vsel %vm366, %v1781, %v1782
        %v1789 = vsel %vm1786, %v1773, %v1788
        %v1790 = vsel %vm366, %v1782, %v1783
        %v1791 = vsel %vm1786, %v1775, %v1790
        %v1792 = vsel %vm366, %v1783, %v1784
        %v1793 = vsel %vm1786, %v1777, %v1792
        %1798 = vst [vmem:[#allocation2 + $0x140] sm:$0xcc] %v1787
        %1799 = vst [vmem:[#allocation2 + $0x148] sm:$0xcc] %v1789
        %1800 = vst [vmem:[#allocation2 + $0x150] sm:$0xcc] %v1791
        %1801 = vst.msk [vmem:[#allocation2 + $0x158] sm:$0xcc] %vm384, %v1793
        %v1802 = vld [vmem:[%s239 + $0x2] sm:$0xff]
        %v1803 = vld [vmem:[%s239 + $0xa] sm:$0xff]
        %v1804 = vld [vmem:[%s239 + $0x12] sm:$0x3]
        %v1808 = vcombine.high %v1802, %v1802
        %v1810 = vunpack.c.l.s4 1983009808
        %v1811 = vunpack.c.0.s8 %v1810
        %v1812 = vlaneseq
        %v1813 = vshrl.u32 %v1812, 7
        %v1814 = vsub.s32 %v1811, %v1813
        %v1815 = vrot.slane %v1802, %v1814
        %v1817 = vunpack.c.l.s4 1983009808
        %v1818 = vunpack.c.0.s8 %v1817
        %v1819 = vlaneseq
        %v1820 = vshrl.u32 %v1819, 7
        %v1821 = vsub.s32 %v1818, %v1820
        %v1822 = vrot.slane %v1808, %v1821
        %v1823 = vcombine.high %v1803, %v1803
        %v1825 = vunpack.c.l.s4 1983009808
        %v1826 = vunpack.c.0.s8 %v1825
        %v1827 = vlaneseq
        %v1828 = vshrl.u32 %v1827, 7
        %v1829 = vsub.s32 %v1826, %v1828
        %v1830 = vrot.slane %v1803, %v1829
        %v1832 = vunpack.c.l.s4 1983009808
        %v1833 = vunpack.c.0.s8 %v1832
        %v1834 = vlaneseq
        %v1835 = vshrl.u32 %v1834, 7
        %v1836 = vsub.s32 %v1833, %v1835
        %v1837 = vrot.slane %v1823, %v1836
        %v1839 = vunpack.c.l.s4 1983009808
        %v1840 = vunpack.c.0.s8 %v1839
        %v1841 = vlaneseq
        %v1842 = vshrl.u32 %v1841, 7
        %v1843 = vsub.s32 %v1840, %v1842
        %v1844 = vrot.slane %v1804, %v1843
        %1845 = vrot.lane.b32.xlu0 %v1815, 45
        %v1846 = vpop.permute.xlu0 %1845
        %1847 = vrot.lane.b32.xlu0 %v1822, 45
        %v1848 = vpop.permute.xlu0 %1847
        %1849 = vrot.lane.b32.xlu0 %v1830, 45
        %v1850 = vpop.permute.xlu0 %1849
        %1851 = vrot.lane.b32.xlu0 %v1837, 45
        %v1852 = vpop.permute.xlu0 %1851
        %1853 = vrot.lane.b32.xlu0 %v1844, 45
        %v1854 = vpop.permute.xlu0 %1853
        %v1855 = vrot.slane %v1846, 4
        %v1856 = vrot.slane %v1848, 4
        %v1857 = vrot.slane %v1850, 4
        %v1858 = vrot.slane %v1852, 4
        %v1859 = vrot.slane %v1854, 4
        %v1860 = vsel %vm366, %v1855, %v1856
        %vm1861 = vcmask 367616
        %v1862 = vsel %vm1861, %v1846, %v1860
        %v1863 = vsel %vm366, %v1856, %v1857
        %v1864 = vsel %vm1861, %v1848, %v1863
        %v1865 = vsel %vm366, %v1857, %v1858
        %v1866 = vsel %vm1861, %v1850, %v1865
        %v1867 = vsel %vm366, %v1858, %v1859
        %v1868 = vsel %vm1861, %v1852, %v1867
        %1873 = vst [vmem:[#allocation2 + $0x160] sm:$0x33] %v1862
        %1874 = vst [vmem:[#allocation2 + $0x168] sm:$0x33] %v1864
        %1875 = vst [vmem:[#allocation2 + $0x170] sm:$0x33] %v1866
        %1876 = vst.msk [vmem:[#allocation2 + $0x178] sm:$0x33] %vm318, %v1868
        %v1877 = vld [vmem:[%s239 + $0x2] sm:$0xff]
        %v1878 = vld [vmem:[%s239 + $0xa] sm:$0xff]
        %v1879 = vld [vmem:[%s239 + $0x12] sm:$0x3]
        %v1883 = vcombine.low %v1877, %v1877
        %v1885 = vunpack.c.l.s4 1983009808
        %v1886 = vunpack.c.0.s8 %v1885
        %v1887 = vlaneseq
        %v1888 = vshrl.u32 %v1887, 7
        %v1889 = vsub.s32 %v1886, %v1888
        %v1890 = vrot.slane %v1883, %v1889
        %v1892 = vunpack.c.l.s4 1983009808
        %v1893 = vunpack.c.0.s8 %v1892
        %v1894 = vlaneseq
        %v1895 = vshrl.u32 %v1894, 7
        %v1896 = vsub.s32 %v1893, %v1895
        %v1897 = vrot.slane %v1877, %v1896
        %v1898 = vcombine.low %v1878, %v1878
        %v1900 = vunpack.c.l.s4 1983009808
        %v1901 = vunpack.c.0.s8 %v1900
        %v1902 = vlaneseq
        %v1903 = vshrl.u32 %v1902, 7
        %v1904 = vsub.s32 %v1901, %v1903
        %v1905 = vrot.slane %v1898, %v1904
        %v1907 = vunpack.c.l.s4 1983009808
        %v1908 = vunpack.c.0.s8 %v1907
        %v1909 = vlaneseq
        %v1910 = vshrl.u32 %v1909, 7
        %v1911 = vsub.s32 %v1908, %v1910
        %v1912 = vrot.slane %v1878, %v1911
        %v1913 = vcombine.low %v1879, %v1879
        %v1915 = vunpack.c.l.s4 1983009808
        %v1916 = vunpack.c.0.s8 %v1915
        %v1917 = vlaneseq
        %v1918 = vshrl.u32 %v1917, 7
        %v1919 = vsub.s32 %v1916, %v1918
        %v1920 = vrot.slane %v1913, %v1919
        %1921 = vrot.lane.b32.xlu0 %v1890, 44
        %v1922 = vpop.permute.xlu0 %1921
        %1923 = vrot.lane.b32.xlu0 %v1897, 44
        %v1924 = vpop.permute.xlu0 %1923
        %1925 = vrot.lane.b32.xlu0 %v1905, 44
        %v1926 = vpop.permute.xlu0 %1925
        %1927 = vrot.lane.b32.xlu0 %v1912, 44
        %v1928 = vpop.permute.xlu0 %1927
        %1929 = vrot.lane.b32.xlu0 %v1920, 44
        %v1930 = vpop.permute.xlu0 %1929
        %v1931 = vrot.slane %v1922, 4
        %v1932 = vrot.slane %v1924, 4
        %v1933 = vrot.slane %v1926, 4
        %v1934 = vrot.slane %v1928, 4
        %v1935 = vrot.slane %v1930, 4
        %v1936 = vsel %vm366, %v1931, %v1932
        %vm1937 = vcmask 359424
        %v1938 = vsel %vm1937, %v1922, %v1936
        %v1939 = vsel %vm366, %v1932, %v1933
        %v1940 = vsel %vm1937, %v1924, %v1939
        %v1941 = vsel %vm366, %v1933, %v1934
        %v1942 = vsel %vm1937, %v1926, %v1941
        %v1943 = vsel %vm366, %v1934, %v1935
        %v1944 = vsel %vm1937, %v1928, %v1943
        %1949 = vst [vmem:[#allocation2 + $0x160] sm:$0xcc] %v1938
        %1950 = vst [vmem:[#allocation2 + $0x168] sm:$0xcc] %v1940
        %1951 = vst [vmem:[#allocation2 + $0x170] sm:$0xcc] %v1942
        %1952 = vst.msk [vmem:[#allocation2 + $0x178] sm:$0xcc] %vm384, %v1944
        %v1953 = vld [vmem:[%s239 + $0x2] sm:$0xff]
        %v1954 = vld [vmem:[%s239 + $0xa] sm:$0xff]
        %v1955 = vld [vmem:[%s239 + $0x12] sm:$0x3]
        %v1959 = vcombine.high %v1953, %v1953
        %v1961 = vunpack.c.l.s4 1983009808
        %v1962 = vunpack.c.0.s8 %v1961
        %v1963 = vlaneseq
        %v1964 = vshrl.u32 %v1963, 7
        %v1965 = vsub.s32 %v1962, %v1964
        %v1966 = vrot.slane %v1953, %v1965
        %v1968 = vunpack.c.l.s4 1983009808
        %v1969 = vunpack.c.0.s8 %v1968
        %v1970 = vlaneseq
        %v1971 = vshrl.u32 %v1970, 7
        %v1972 = vsub.s32 %v1969, %v1971
        %v1973 = vrot.slane %v1959, %v1972
        %v1974 = vcombine.high %v1954, %v1954
        %v1976 = vunpack.c.l.s4 1983009808
        %v1977 = vunpack.c.0.s8 %v1976
        %v1978 = vlaneseq
        %v1979 = vshrl.u32 %v1978, 7
        %v1980 = vsub.s32 %v1977, %v1979
        %v1981 = vrot.slane %v1954, %v1980
        %v1983 = vunpack.c.l.s4 1983009808
        %v1984 = vunpack.c.0.s8 %v1983
        %v1985 = vlaneseq
        %v1986 = vshrl.u32 %v1985, 7
        %v1987 = vsub.s32 %v1984, %v1986
        %v1988 = vrot.slane %v1974, %v1987
        %v1990 = vunpack.c.l.s4 1983009808
        %v1991 = vunpack.c.0.s8 %v1990
        %v1992 = vlaneseq
        %v1993 = vshrl.u32 %v1992, 7
        %v1994 = vsub.s32 %v1991, %v1993
        %v1995 = vrot.slane %v1955, %v1994
        %1996 = vrot.lane.b32.xlu0 %v1966, 36
        %v1997 = vpop.permute.xlu0 %1996
        %1998 = vrot.lane.b32.xlu0 %v1973, 36
        %v1999 = vpop.permute.xlu0 %1998
        %2000 = vrot.lane.b32.xlu0 %v1981, 36
        %v2001 = vpop.permute.xlu0 %2000
        %2002 = vrot.lane.b32.xlu0 %v1988, 36
        %v2003 = vpop.permute.xlu0 %2002
        %2004 = vrot.lane.b32.xlu0 %v1995, 36
        %v2005 = vpop.permute.xlu0 %2004
        %v2006 = vrot.slane %v1997, 4
        %v2007 = vrot.slane %v1999, 4
        %v2008 = vrot.slane %v2001, 4
        %v2009 = vrot.slane %v2003, 4
        %v2010 = vrot.slane %v2005, 4
        %v2011 = vsel %vm366, %v2006, %v2007
        %vm2012 = vcmask 293888
        %v2013 = vsel %vm2012, %v1997, %v2011
        %v2014 = vsel %vm366, %v2007, %v2008
        %v2015 = vsel %vm2012, %v1999, %v2014
        %v2016 = vsel %vm366, %v2008, %v2009
        %v2017 = vsel %vm2012, %v2001, %v2016
        %v2018 = vsel %vm366, %v2009, %v2010
        %v2019 = vsel %vm2012, %v2003, %v2018
        %2024 = vst [vmem:[#allocation2 + $0x180] sm:$0x33] %v2013
        %2025 = vst [vmem:[#allocation2 + $0x188] sm:$0x33] %v2015
        %2026 = vst [vmem:[#allocation2 + $0x190] sm:$0x33] %v2017
        %2027 = vst.msk [vmem:[#allocation2 + $0x198] sm:$0x33] %vm318, %v2019
        %v2028 = vld [vmem:[%s239 + $0x2] sm:$0xff]
        %v2029 = vld [vmem:[%s239 + $0xa] sm:$0xff]
        %v2030 = vld [vmem:[%s239 + $0x12] sm:$0x3]
        %v2034 = vcombine.low %v2028, %v2028
        %v2036 = vunpack.c.l.s4 1983009808
        %v2037 = vunpack.c.0.s8 %v2036
        %v2038 = vlaneseq
        %v2039 = vshrl.u32 %v2038, 7
        %v2040 = vsub.s32 %v2037, %v2039
        %v2041 = vrot.slane %v2034, %v2040
        %v2043 = vunpack.c.l.s4 1983009808
        %v2044 = vunpack.c.0.s8 %v2043
        %v2045 = vlaneseq
        %v2046 = vshrl.u32 %v2045, 7
        %v2047 = vsub.s32 %v2044, %v2046
        %v2048 = vrot.slane %v2028, %v2047
        %v2049 = vcombine.low %v2029, %v2029
        %v2051 = vunpack.c.l.s4 1983009808
        %v2052 = vunpack.c.0.s8 %v2051
        %v2053 = vlaneseq
        %v2054 = vshrl.u32 %v2053, 7
        %v2055 = vsub.s32 %v2052, %v2054
        %v2056 = vrot.slane %v2049, %v2055
        %v2058 = vunpack.c.l.s4 1983009808
        %v2059 = vunpack.c.0.s8 %v2058
        %v2060 = vlaneseq
        %v2061 = vshrl.u32 %v2060, 7
        %v2062 = vsub.s32 %v2059, %v2061
        %v2063 = vrot.slane %v2029, %v2062
        %v2064 = vcombine.low %v2030, %v2030
        %v2066 = vunpack.c.l.s4 1983009808
        %v2067 = vunpack.c.0.s8 %v2066
        %v2068 = vlaneseq
        %v2069 = vshrl.u32 %v2068, 7
        %v2070 = vsub.s32 %v2067, %v2069
        %v2071 = vrot.slane %v2064, %v2070
        %2072 = vrot.lane.b32.xlu0 %v2041, 35
        %v2073 = vpop.permute.xlu0 %2072
        %2074 = vrot.lane.b32.xlu0 %v2048, 35
        %v2075 = vpop.permute.xlu0 %2074
        %2076 = vrot.lane.b32.xlu0 %v2056, 35
        %v2077 = vpop.permute.xlu0 %2076
        %2078 = vrot.lane.b32.xlu0 %v2063, 35
        %v2079 = vpop.permute.xlu0 %2078
        %2080 = vrot.lane.b32.xlu0 %v2071, 35
        %v2081 = vpop.permute.xlu0 %2080
        %v2082 = vrot.slane %v2073, 4
        %v2083 = vrot.slane %v2075, 4
        %v2084 = vrot.slane %v2077, 4
        %v2085 = vrot.slane %v2079, 4
        %v2086 = vrot.slane %v2081, 4
        %v2087 = vsel %vm366, %v2082, %v2083
        %vm2088 = vcmask 285696
        %v2089 = vsel %vm2088, %v2073, %v2087
        %v2090 = vsel %vm366, %v2083, %v2084
        %v2091 = vsel %vm2088, %v2075, %v2090
        %v2092 = vsel %vm366, %v2084, %v2085
        %v2093 = vsel %vm2088, %v2077, %v2092
        %v2094 = vsel %vm366, %v2085, %v2086
        %v2095 = vsel %vm2088, %v2079, %v2094
        %2100 = vst [vmem:[#allocation2 + $0x180] sm:$0xcc] %v2089
        %2101 = vst [vmem:[#allocation2 + $0x188] sm:$0xcc] %v2091
        %2102 = vst [vmem:[#allocation2 + $0x190] sm:$0xcc] %v2093
        %2103 = vst.msk [vmem:[#allocation2 + $0x198] sm:$0xcc] %vm384, %v2095
        %v2104 = vld [vmem:[%s239 + $0x2] sm:$0xff]
        %v2105 = vld [vmem:[%s239 + $0xa] sm:$0xff]
        %v2106 = vld [vmem:[%s239 + $0x12] sm:$0x3]
        %v2110 = vcombine.high %v2104, %v2104
        %v2112 = vunpack.c.l.s4 1983009808
        %v2113 = vunpack.c.0.s8 %v2112
        %v2114 = vlaneseq
        %v2115 = vshrl.u32 %v2114, 7
        %v2116 = vsub.s32 %v2113, %v2115
        %v2117 = vrot.slane %v2104, %v2116
        %v2119 = vunpack.c.l.s4 1983009808
        %v2120 = vunpack.c.0.s8 %v2119
        %v2121 = vlaneseq
        %v2122 = vshrl.u32 %v2121, 7
        %v2123 = vsub.s32 %v2120, %v2122
        %v2124 = vrot.slane %v2110, %v2123
        %v2125 = vcombine.high %v2105, %v2105
        %v2127 = vunpack.c.l.s4 1983009808
        %v2128 = vunpack.c.0.s8 %v2127
        %v2129 = vlaneseq
        %v2130 = vshrl.u32 %v2129, 7
        %v2131 = vsub.s32 %v2128, %v2130
        %v2132 = vrot.slane %v2105, %v2131
        %v2134 = vunpack.c.l.s4 1983009808
        %v2135 = vunpack.c.0.s8 %v2134
        %v2136 = vlaneseq
        %v2137 = vshrl.u32 %v2136, 7
        %v2138 = vsub.s32 %v2135, %v2137
        %v2139 = vrot.slane %v2125, %v2138
        %v2141 = vunpack.c.l.s4 1983009808
        %v2142 = vunpack.c.0.s8 %v2141
        %v2143 = vlaneseq
        %v2144 = vshrl.u32 %v2143, 7
        %v2145 = vsub.s32 %v2142, %v2144
        %v2146 = vrot.slane %v2106, %v2145
        %2147 = vrot.lane.b32.xlu0 %v2117, 34
        %v2148 = vpop.permute.xlu0 %2147
        %2149 = vrot.lane.b32.xlu0 %v2124, 34
        %v2150 = vpop.permute.xlu0 %2149
        %2151 = vrot.lane.b32.xlu0 %v2132, 34
        %v2152 = vpop.permute.xlu0 %2151
        %2153 = vrot.lane.b32.xlu0 %v2139, 34
        %v2154 = vpop.permute.xlu0 %2153
        %2155 = vrot.lane.b32.xlu0 %v2146, 34
        %v2156 = vpop.permute.xlu0 %2155
        %v2157 = vrot.slane %v2148, 4
        %v2158 = vrot.slane %v2150, 4
        %v2159 = vrot.slane %v2152, 4
        %v2160 = vrot.slane %v2154, 4
        %v2161 = vrot.slane %v2156, 4
        %v2162 = vsel %vm366, %v2157, %v2158
        %vm2163 = vcmask 277504
        %v2164 = vsel %vm2163, %v2148, %v2162
        %v2165 = vsel %vm366, %v2158, %v2159
        %v2166 = vsel %vm2163, %v2150, %v2165
        %v2167 = vsel %vm366, %v2159, %v2160
        %v2168 = vsel %vm2163, %v2152, %v2167
        %v2169 = vsel %vm366, %v2160, %v2161
        %v2170 = vsel %vm2163, %v2154, %v2169
        %2175 = vst [vmem:[#allocation2 + $0x1a0] sm:$0x33] %v2164
        %2176 = vst [vmem:[#allocation2 + $0x1a8] sm:$0x33] %v2166
        %2177 = vst [vmem:[#allocation2 + $0x1b0] sm:$0x33] %v2168
        %2178 = vst.msk [vmem:[#allocation2 + $0x1b8] sm:$0x33] %vm318, %v2170
        %v2179 = vld [vmem:[%s1] sm:$0xf]
        %v2180 = vld [vmem:[#allocation2] sm:$0xff]
        %v2181 = vld [vmem:[#allocation2 + $0x8] sm:$0xff]
        %v2182 = vld [vmem:[#allocation2 + $0x10] sm:$0xff]
        %v2183 = vld [vmem:[#allocation2 + $0x18] sm:$0xff]
        %v2184 = vld [vmem:[#allocation2 + $0x20] sm:$0xff]
        %v2185 = vld [vmem:[#allocation2 + $0x28] sm:$0xff]
        %v2186 = vld [vmem:[#allocation2 + $0x30] sm:$0xff]
        %v2187 = vld [vmem:[#allocation2 + $0x38] sm:$0xff]
        %v2188 = vld [vmem:[#allocation2 + $0x40] sm:$0xff]
        %v2189 = vld [vmem:[#allocation2 + $0x48] sm:$0xff]
        %v2190 = vld [vmem:[#allocation2 + $0x50] sm:$0xff]
        %v2191 = vld [vmem:[#allocation2 + $0x58] sm:$0xff]
        %v2192 = vld [vmem:[#allocation2 + $0x60] sm:$0xff]
        %v2193 = vld [vmem:[#allocation2 + $0x68] sm:$0xff]
        %v2194 = vld [vmem:[#allocation2 + $0x70] sm:$0xff]
        %v2195 = vld [vmem:[#allocation2 + $0x78] sm:$0xff]
        %v2196 = vld [vmem:[#allocation2 + $0x80] sm:$0xff]
        %v2197 = vld [vmem:[#allocation2 + $0x88] sm:$0xff]
        %v2198 = vld [vmem:[#allocation2 + $0x90] sm:$0xff]
        %v2199 = vld [vmem:[#allocation2 + $0x98] sm:$0xff]
        %v2200 = vld [vmem:[#allocation2 + $0xa0] sm:$0xff]
        %v2201 = vld [vmem:[#allocation2 + $0xa8] sm:$0xff]
        %v2202 = vld [vmem:[#allocation2 + $0xb0] sm:$0xff]
        %v2203 = vld [vmem:[#allocation2 + $0xb8] sm:$0xff]
        %v2204 = vld [vmem:[#allocation2 + $0xc0] sm:$0xff]
        %v2205 = vld [vmem:[#allocation2 + $0xc8] sm:$0xff]
        %v2206 = vld [vmem:[#allocation2 + $0xd0] sm:$0xff]
        %v2207 = vld [vmem:[#allocation2 + $0xd8] sm:$0xff]
        %v2208 = vld [vmem:[#allocation2 + $0xe0] sm:$0xff]
        %v2209 = vld [vmem:[#allocation2 + $0xe8] sm:$0xff]
        %v2210 = vld [vmem:[#allocation2 + $0xf0] sm:$0xff]
        %v2211 = vld [vmem:[#allocation2 + $0xf8] sm:$0xff]
        %v2212 = vld [vmem:[#allocation2 + $0x100] sm:$0xff]
        %v2213 = vld [vmem:[#allocation2 + $0x108] sm:$0xff]
        %v2214 = vld [vmem:[#allocation2 + $0x110] sm:$0xff]
        %v2215 = vld [vmem:[#allocation2 + $0x118] sm:$0xff]
        %v2216 = vld [vmem:[#allocation2 + $0x120] sm:$0xff]
        %v2217 = vld [vmem:[#allocation2 + $0x128] sm:$0xff]
        %v2218 = vld [vmem:[#allocation2 + $0x130] sm:$0xff]
        %v2219 = vld [vmem:[#allocation2 + $0x138] sm:$0xff]
        %v2220 = vld [vmem:[#allocation2 + $0x140] sm:$0xff]
        %v2221 = vld [vmem:[#allocation2 + $0x148] sm:$0xff]
        %v2222 = vld [vmem:[#allocation2 + $0x150] sm:$0xff]
        %v2223 = vld [vmem:[#allocation2 + $0x158] sm:$0xff]
        %v2224 = vld [vmem:[#allocation2 + $0x160] sm:$0xff]
        %v2225 = vld [vmem:[#allocation2 + $0x168] sm:$0xff]
        %v2226 = vld [vmem:[#allocation2 + $0x170] sm:$0xff]
        %v2227 = vld [vmem:[#allocation2 + $0x178] sm:$0xff]
        %v2228 = vld [vmem:[#allocation2 + $0x180] sm:$0xff]
        %v2229 = vld [vmem:[#allocation2 + $0x188] sm:$0xff]
        %v2230 = vld [vmem:[#allocation2 + $0x190] sm:$0xff]
        %v2231 = vld [vmem:[#allocation2 + $0x198] sm:$0xff]
        %v2232 = vld [vmem:[#allocation2 + $0x1a0] sm:$0x33]
        %v2233 = vld [vmem:[#allocation2 + $0x1a8] sm:$0x33]
        %v2234 = vld [vmem:[#allocation2 + $0x1b0] sm:$0x33]
        %v2235 = vld [vmem:[#allocation2 + $0x1b8] sm:$0x33]
        %v2236 = vld [vmem:[%s2] sm:$0xff]
        %2238 = vset.pattern.permute.xlu0 0
        %2239 = vperm.xlu0 %2238, %v2236
        %v2240 = vpop.permute.xlu0 %2239
        %v2298 = vunpack.c.l.b16 %v2180
        %v2299 = vunpack.c.h.b16 %v2180
        %v2300 = vunpack.c.l.b16 %v2181
        %v2301 = vunpack.c.h.b16 %v2181
        %v2302 = vunpack.c.l.b16 %v2182
        %v2303 = vunpack.c.h.b16 %v2182
        %v2304 = vunpack.c.l.b16 %v2183
        %v2305 = vunpack.c.h.b16 %v2183
        %v2306 = vunpack.c.l.b16 %v2184
        %v2307 = vunpack.c.h.b16 %v2184
        %v2308 = vunpack.c.l.b16 %v2185
        %v2309 = vunpack.c.h.b16 %v2185
        %v2310 = vunpack.c.l.b16 %v2186
        %v2311 = vunpack.c.h.b16 %v2186
        %v2312 = vunpack.c.l.b16 %v2187
        %v2313 = vunpack.c.h.b16 %v2187
        %v2314 = vunpack.c.l.b16 %v2188
        %v2315 = vunpack.c.h.b16 %v2188
        %v2316 = vunpack.c.l.b16 %v2189
        %v2317 = vunpack.c.h.b16 %v2189
        %v2318 = vunpack.c.l.b16 %v2190
        %v2319 = vunpack.c.h.b16 %v2190
        %v2320 = vunpack.c.l.b16 %v2191
        %v2321 = vunpack.c.h.b16 %v2191
        %v2322 = vunpack.c.l.b16 %v2192
        %v2323 = vunpack.c.h.b16 %v2192
        %v2324 = vunpack.c.l.b16 %v2193
        %v2325 = vunpack.c.h.b16 %v2193
        %v2326 = vunpack.c.l.b16 %v2194
        %v2327 = vunpack.c.h.b16 %v2194
        %v2328 = vunpack.c.l.b16 %v2195
        %v2329 = vunpack.c.h.b16 %v2195
        %v2330 = vunpack.c.l.b16 %v2196
        %v2331 = vunpack.c.h.b16 %v2196
        %v2332 = vunpack.c.l.b16 %v2197
        %v2333 = vunpack.c.h.b16 %v2197
        %v2334 = vunpack.c.l.b16 %v2198
        %v2335 = vunpack.c.h.b16 %v2198
        %v2336 = vunpack.c.l.b16 %v2199
        %v2337 = vunpack.c.h.b16 %v2199
        %v2338 = vunpack.c.l.b16 %v2200
        %v2339 = vunpack.c.h.b16 %v2200
        %v2340 = vunpack.c.l.b16 %v2201
        %v2341 = vunpack.c.h.b16 %v2201
        %v2342 = vunpack.c.l.b16 %v2202
        %v2343 = vunpack.c.h.b16 %v2202
        %v2344 = vunpack.c.l.b16 %v2203
        %v2345 = vunpack.c.h.b16 %v2203
        %v2346 = vunpack.c.l.b16 %v2204
        %v2347 = vunpack.c.h.b16 %v2204
        %v2348 = vunpack.c.l.b16 %v2205
        %v2349 = vunpack.c.h.b16 %v2205
        %v2350 = vunpack.c.l.b16 %v2206
        %v2351 = vunpack.c.h.b16 %v2206
        %v2352 = vunpack.c.l.b16 %v2207
        %v2353 = vunpack.c.h.b16 %v2207
        %v2354 = vunpack.c.l.b16 %v2208
        %v2355 = vunpack.c.h.b16 %v2208
        %v2356 = vunpack.c.l.b16 %v2209
        %v2357 = vunpack.c.h.b16 %v2209
        %v2358 = vunpack.c.l.b16 %v2210
        %v2359 = vunpack.c.h.b16 %v2210
        %v2360 = vunpack.c.l.b16 %v2211
        %v2361 = vunpack.c.h.b16 %v2211
        %v2362 = vunpack.c.l.b16 %v2212
        %v2363 = vunpack.c.h.b16 %v2212
        %v2364 = vunpack.c.l.b16 %v2213
        %v2365 = vunpack.c.h.b16 %v2213
        %v2366 = vunpack.c.l.b16 %v2214
        %v2367 = vunpack.c.h.b16 %v2214
        %v2368 = vunpack.c.l.b16 %v2215
        %v2369 = vunpack.c.h.b16 %v2215
        %v2370 = vunpack.c.l.b16 %v2216
        %v2371 = vunpack.c.h.b16 %v2216
        %v2372 = vunpack.c.l.b16 %v2217
        %v2373 = vunpack.c.h.b16 %v2217
        %v2374 = vunpack.c.l.b16 %v2218
        %v2375 = vunpack.c.h.b16 %v2218
        %v2376 = vunpack.c.l.b16 %v2219
        %v2377 = vunpack.c.h.b16 %v2219
        %v2378 = vunpack.c.l.b16 %v2220
        %v2379 = vunpack.c.h.b16 %v2220
        %v2380 = vunpack.c.l.b16 %v2221
        %v2381 = vunpack.c.h.b16 %v2221
        %v2382 = vunpack.c.l.b16 %v2222
        %v2383 = vunpack.c.h.b16 %v2222
        %v2384 = vunpack.c.l.b16 %v2223
        %v2385 = vunpack.c.h.b16 %v2223
        %v2386 = vunpack.c.l.b16 %v2224
        %v2387 = vunpack.c.h.b16 %v2224
        %v2388 = vunpack.c.l.b16 %v2225
        %v2389 = vunpack.c.h.b16 %v2225
        %v2390 = vunpack.c.l.b16 %v2226
        %v2391 = vunpack.c.h.b16 %v2226
        %v2392 = vunpack.c.l.b16 %v2227
        %v2393 = vunpack.c.h.b16 %v2227
        %v2394 = vunpack.c.l.b16 %v2228
        %v2395 = vunpack.c.h.b16 %v2228
        %v2396 = vunpack.c.l.b16 %v2229
        %v2397 = vunpack.c.h.b16 %v2229
        %v2398 = vunpack.c.l.b16 %v2230
        %v2399 = vunpack.c.h.b16 %v2230
        %v2400 = vunpack.c.l.b16 %v2231
        %v2401 = vunpack.c.h.b16 %v2231
        %v2402 = vunpack.c.l.b16 %v2232
        %v2403 = vunpack.c.h.b16 %v2232
        %v2404 = vunpack.c.l.b16 %v2233
        %v2405 = vunpack.c.h.b16 %v2233
        %v2406 = vunpack.c.l.b16 %v2234
        %v2407 = vunpack.c.h.b16 %v2234
        %v2408 = vunpack.c.l.b16 %v2235
        %v2409 = vunpack.c.h.b16 %v2235
        %v2410 = vpack.c.b16 %v2306, %v2298
        %v2411 = vpack.c.b16 %v2307, %v2299
        %v2412 = vpack.c.b16 %v2308, %v2300
        %v2413 = vpack.c.b16 %v2309, %v2301
        %v2414 = vpack.c.b16 %v2310, %v2302
        %v2415 = vpack.c.b16 %v2311, %v2303
        %v2416 = vpack.c.b16 %v2312, %v2304
        %v2417 = vpack.c.b16 %v2313, %v2305
        %v2418 = vpack.c.b16 %v2322, %v2314
        %v2419 = vpack.c.b16 %v2323, %v2315
        %v2420 = vpack.c.b16 %v2324, %v2316
        %v2421 = vpack.c.b16 %v2325, %v2317
        %v2422 = vpack.c.b16 %v2326, %v2318
        %v2423 = vpack.c.b16 %v2327, %v2319
        %v2424 = vpack.c.b16 %v2328, %v2320
        %v2425 = vpack.c.b16 %v2329, %v2321
        %v2426 = vpack.c.b16 %v2338, %v2330
        %v2427 = vpack.c.b16 %v2339, %v2331
        %v2428 = vpack.c.b16 %v2340, %v2332
        %v2429 = vpack.c.b16 %v2341, %v2333
        %v2430 = vpack.c.b16 %v2342, %v2334
        %v2431 = vpack.c.b16 %v2343, %v2335
        %v2432 = vpack.c.b16 %v2344, %v2336
        %v2433 = vpack.c.b16 %v2345, %v2337
        %v2434 = vpack.c.b16 %v2354, %v2346
        %v2435 = vpack.c.b16 %v2355, %v2347
        %v2436 = vpack.c.b16 %v2356, %v2348
        %v2437 = vpack.c.b16 %v2357, %v2349
        %v2438 = vpack.c.b16 %v2358, %v2350
        %v2439 = vpack.c.b16 %v2359, %v2351
        %v2440 = vpack.c.b16 %v2360, %v2352
        %v2441 = vpack.c.b16 %v2361, %v2353
        %v2442 = vpack.c.b16 %v2370, %v2362
        %v2443 = vpack.c.b16 %v2371, %v2363
        %v2444 = vpack.c.b16 %v2372, %v2364
        %v2445 = vpack.c.b16 %v2373, %v2365
        %v2446 = vpack.c.b16 %v2374, %v2366
        %v2447 = vpack.c.b16 %v2375, %v2367
        %v2448 = vpack.c.b16 %v2376, %v2368
        %v2449 = vpack.c.b16 %v2377, %v2369
        %v2450 = vpack.c.b16 %v2386, %v2378
        %v2451 = vpack.c.b16 %v2387, %v2379
        %v2452 = vpack.c.b16 %v2388, %v2380
        %v2453 = vpack.c.b16 %v2389, %v2381
        %v2454 = vpack.c.b16 %v2390, %v2382
        %v2455 = vpack.c.b16 %v2391, %v2383
        %v2456 = vpack.c.b16 %v2392, %v2384
        %v2457 = vpack.c.b16 %v2393, %v2385
        %v2458 = vpack.c.b16 %v2402, %v2394
        %v2459 = vpack.c.b16 %v2403, %v2395
        %v2460 = vpack.c.b16 %v2404, %v2396
        %v2461 = vpack.c.b16 %v2405, %v2397
        %v2462 = vpack.c.b16 %v2406, %v2398
        %v2463 = vpack.c.b16 %v2407, %v2399
        %v2464 = vpack.c.b16 %v2408, %v2400
        %v2465 = vpack.c.b16 %v2409, %v2401
        %vm2514 = vcmask 883712
        %v2516 = vsel %vm2514, %v2179, 0
        %vm2518 = vcmask 1045504
        %v2520 = vsel %vm2518, %v2458, 0
        %v2523 = vsel %vm2518, %v2459, 0
        %v2526 = vsel %vm2518, %v2460, 0
        %v2529 = vsel %vm2518, %v2461, 0
        %v2532 = vsel %vm2518, %v2462, 0
        %v2535 = vsel %vm2518, %v2463, 0
        %v2538 = vsel %vm2518, %v2464, 0
        %v2541 = vsel %vm2518, %v2465, 0
        %2543 = vmatprep.subr.bf16.mxu0 %v2411
        %2544 = vmatpush1.bf16.msra.mxu0 %v2410
        %2545 = vmatprep.subr.bf16.mxu0 %v2419
        %2546 = vmatpush1.bf16.msra.mxu0 %v2418
        %2547 = vmatprep.subr.bf16.mxu0 %v2427
        %2548 = vmatpush1.bf16.msra.mxu0 %v2426
        %2549 = vmatprep.subr.bf16.mxu0 %v2435
        %2550 = vmatpush1.bf16.msra.mxu0 %v2434
        %2551 = vmatprep.subr.bf16.mxu0 %v2443
        %2552 = vmatpush1.bf16.msra.mxu0 %v2442
        %2553 = vmatprep.subr.bf16.mxu0 %v2451
        %2554 = vmatpush1.bf16.msra.mxu0 %v2450
        %2555 = vmatprep.subr.bf16.mxu0 %v2523
        %2556 = vmatpush1.bf16.msra.mxu0 %v2520
        %2557 = vmatprep.subr.bf16.mxu0 0
        %2558 = vmatpush1.bf16.msra.mxu0 0
        %2559 = vmatprep.subr.bf16.mxu0 0
        %2560 = vmatpush1.bf16.msra.mxu0 0
        %2561 = vmatprep.subr.bf16.mxu0 0
        %2562 = vmatpush1.bf16.msra.mxu0 0
        %2563 = vmatprep.subr.bf16.mxu0 0
        %2564 = vmatpush1.bf16.msra.mxu0 0
        %2565 = vmatprep.subr.bf16.mxu0 0
        %2566 = vmatpush1.bf16.msra.mxu0 0
        %2567 = vmatprep.subr.bf16.mxu0 0
        %2568 = vmatpush1.bf16.msra.mxu0 0
        %2569 = vmatprep.subr.bf16.mxu0 0
        %2570 = vmatpush1.bf16.msra.mxu0 0
        %2571 = vmatprep.subr.bf16.mxu0 0
        %2572 = vmatpush1.bf16.msra.mxu0 0
        %2573 = vmatprep.subr.bf16.mxu0 0
        %2574 = vmatpush1.bf16.msra.mxu0 0
        %2575 = vmatprep.mubr.bf16.mxu0 0
        %2576 = vmatmul.mubr.bf16.gmra.mrb[0].mxu0 %v2516
        %v2577 = vpop.f32.mrb[0].mxu0
        %v2578 = vadd.f32 %v2240, %v2577
        %v2579 = vpop.f32.mrb[0].mxu0
        %v2580 = vadd.f32 %v2240, %v2579
        %v2581 = vpop.f32.mrb[0].mxu0
        %v2582 = vpop.f32.mrb[0].mxu0
        %2583 = vdwg.mxu0
        %2584 = vmatprep.subr.bf16.mxu0 %v2413
        %2585 = vmatpush1.bf16.msra.mxu0 %v2412
        %2586 = vmatprep.subr.bf16.mxu0 %v2421
        %2587 = vmatpush1.bf16.msra.mxu0 %v2420
        %2588 = vmatprep.subr.bf16.mxu0 %v2429
        %2589 = vmatpush1.bf16.msra.mxu0 %v2428
        %2590 = vmatprep.subr.bf16.mxu0 %v2437
        %2591 = vmatpush1.bf16.msra.mxu0 %v2436
        %2592 = vmatprep.subr.bf16.mxu0 %v2445
        %2593 = vmatpush1.bf16.msra.mxu0 %v2444
        %2594 = vmatprep.subr.bf16.mxu0 %v2453
        %2595 = vmatpush1.bf16.msra.mxu0 %v2452
        %2596 = vmatprep.subr.bf16.mxu0 %v2529
        %2597 = vmatpush1.bf16.msra.mxu0 %v2526
        %2598 = vmatprep.subr.bf16.mxu0 0
        %2599 = vmatpush1.bf16.msra.mxu0 0
        %2600 = vmatprep.subr.bf16.mxu0 0
        %2601 = vmatpush1.bf16.msra.mxu0 0
        %2602 = vmatprep.subr.bf16.mxu0 0
        %2603 = vmatpush1.bf16.msra.mxu0 0
        %2604 = vmatprep.subr.bf16.mxu0 0
        %2605 = vmatpush1.bf16.msra.mxu0 0
        %2606 = vmatprep.subr.bf16.mxu0 0
        %2607 = vmatpush1.bf16.msra.mxu0 0
        %2608 = vmatprep.subr.bf16.mxu0 0
        %2609 = vmatpush1.bf16.msra.mxu0 0
        %2610 = vmatprep.subr.bf16.mxu0 0
        %2611 = vmatpush1.bf16.msra.mxu0 0
        %2612 = vmatprep.subr.bf16.mxu0 0
        %2613 = vmatpush1.bf16.msra.mxu0 0
        %2614 = vmatprep.subr.bf16.mxu0 0
        %2615 = vmatpush1.bf16.msra.mxu0 0
        %2616 = vmatprep.mubr.bf16.mxu0 0
        %2617 = vmatmul.mubr.bf16.gmra.mrb[0].mxu0 %v2516
        %v2618 = vpop.f32.mrb[0].mxu0
        %v2619 = vadd.f32 %v2240, %v2618
        %v2620 = vpop.f32.mrb[0].mxu0
        %v2621 = vadd.f32 %v2240, %v2620
        %v2622 = vpop.f32.mrb[0].mxu0
        %v2623 = vpop.f32.mrb[0].mxu0
        %2624 = vdwg.mxu0
        %2625 = vmatprep.subr.bf16.mxu0 %v2415
        %2626 = vmatpush1.bf16.msra.mxu0 %v2414
        %2627 = vmatprep.subr.bf16.mxu0 %v2423
        %2628 = vmatpush1.bf16.msra.mxu0 %v2422
        %2629 = vmatprep.subr.bf16.mxu0 %v2431
        %2630 = vmatpush1.bf16.msra.mxu0 %v2430
        %2631 = vmatprep.subr.bf16.mxu0 %v2439
        %2632 = vmatpush1.bf16.msra.mxu0 %v2438
        %2633 = vmatprep.subr.bf16.mxu0 %v2447
        %2634 = vmatpush1.bf16.msra.mxu0 %v2446
        %2635 = vmatprep.subr.bf16.mxu0 %v2455
        %2636 = vmatpush1.bf16.msra.mxu0 %v2454
        %2637 = vmatprep.subr.bf16.mxu0 %v2535
        %2638 = vmatpush1.bf16.msra.mxu0 %v2532
        %2639 = vmatprep.subr.bf16.mxu0 0
        %2640 = vmatpush1.bf16.msra.mxu0 0
        %2641 = vmatprep.subr.bf16.mxu0 0
        %2642 = vmatpush1.bf16.msra.mxu0 0
        %2643 = vmatprep.subr.bf16.mxu0 0
        %2644 = vmatpush1.bf16.msra.mxu0 0
        %2645 = vmatprep.subr.bf16.mxu0 0
        %2646 = vmatpush1.bf16.msra.mxu0 0
        %2647 = vmatprep.subr.bf16.mxu0 0
        %2648 = vmatpush1.bf16.msra.mxu0 0
        %2649 = vmatprep.subr.bf16.mxu0 0
        %2650 = vmatpush1.bf16.msra.mxu0 0
        %2651 = vmatprep.subr.bf16.mxu0 0
        %2652 = vmatpush1.bf16.msra.mxu0 0
        %2653 = vmatprep.subr.bf16.mxu0 0
        %2654 = vmatpush1.bf16.msra.mxu0 0
        %2655 = vmatprep.subr.bf16.mxu0 0
        %2656 = vmatpush1.bf16.msra.mxu0 0
        %2657 = vmatprep.mubr.bf16.mxu0 0
        %2658 = vmatmul.mubr.bf16.gmra.mrb[0].mxu0 %v2516
        %v2659 = vpop.f32.mrb[0].mxu0
        %v2660 = vadd.f32 %v2240, %v2659
        %v2661 = vpop.f32.mrb[0].mxu0
        %v2662 = vadd.f32 %v2240, %v2661
        %v2663 = vpop.f32.mrb[0].mxu0
        %v2664 = vpop.f32.mrb[0].mxu0
        %2665 = vdwg.mxu0
        %2666 = vmatprep.subr.bf16.mxu0 %v2417
        %2667 = vmatpush1.bf16.msra.mxu0 %v2416
        %2668 = vmatprep.subr.bf16.mxu0 %v2425
        %2669 = vmatpush1.bf16.msra.mxu0 %v2424
        %2670 = vmatprep.subr.bf16.mxu0 %v2433
        %2671 = vmatpush1.bf16.msra.mxu0 %v2432
        %2672 = vmatprep.subr.bf16.mxu0 %v2441
        %2673 = vmatpush1.bf16.msra.mxu0 %v2440
        %2674 = vmatprep.subr.bf16.mxu0 %v2449
        %2675 = vmatpush1.bf16.msra.mxu0 %v2448
        %2676 = vmatprep.subr.bf16.mxu0 %v2457
        %2677 = vmatpush1.bf16.msra.mxu0 %v2456
        %2678 = vmatprep.subr.bf16.mxu0 %v2541
        %2679 = vmatpush1.bf16.msra.mxu0 %v2538
        %2680 = vmatprep.subr.bf16.mxu0 0
        %2681 = vmatpush1.bf16.msra.mxu0 0
        %2682 = vmatprep.subr.bf16.mxu0 0
        %2683 = vmatpush1.bf16.msra.mxu0 0
        %2684 = vmatprep.subr.bf16.mxu0 0
        %2685 = vmatpush1.bf16.msra.mxu0 0
        %2686 = vmatprep.subr.bf16.mxu0 0
        %2687 = vmatpush1.bf16.msra.mxu0 0
        %2688 = vmatprep.subr.bf16.mxu0 0
        %2689 = vmatpush1.bf16.msra.mxu0 0
        %2690 = vmatprep.subr.bf16.mxu0 0
        %2691 = vmatpush1.bf16.msra.mxu0 0
        %2692 = vmatprep.subr.bf16.mxu0 0
        %2693 = vmatpush1.bf16.msra.mxu0 0
        %2694 = vmatprep.subr.bf16.mxu0 0
        %2695 = vmatpush1.bf16.msra.mxu0 0
        %2696 = vmatprep.subr.bf16.mxu0 0
        %2697 = vmatpush1.bf16.msra.mxu0 0
        %2698 = vmatprep.mubr.bf16.mxu0 0
        %2699 = vmatmul.mubr.bf16.gmra.mrb[0].mxu0 %v2516
        %v2700 = vpop.f32.mrb[0].mxu0
        %v2701 = vadd.f32 %v2240, %v2700
        %v2702 = vpop.f32.mrb[0].mxu0
        %v2703 = vadd.f32 %v2240, %v2702
        %v2704 = vpop.f32.mrb[0].mxu0
        %v2705 = vpop.f32.mrb[0].mxu0
        %2706 = vdwg.mxu0
        %v2707 = vmax.f32 %v2578, 0.0
        %v2708 = vmax.f32 %v2580, 0.0
        %v2709 = vmax.f32 %v2619, 0.0
        %v2710 = vmax.f32 %v2621, 0.0
        %v2711 = vmax.f32 %v2660, 0.0
        %v2712 = vmax.f32 %v2662, 0.0
        %v2713 = vmax.f32 %v2701, 0.0
        %v2714 = vmax.f32 %v2703, 0.0
        %v2715 = vld [vmem:[%s5] sm:$0xff]
        %v2717 = vlaneseq
        %v2718 = vshrl.u32 %v2717, 7
        %v2719 = vsub.s32 0, %v2718
        %v2720 = vrot.slane %v2715, %v2719
        %v2721 = vlaneseq
        %v2722 = vshrl.u32 %v2721, 7
        %v2723 = vsub.s32 1, %v2722
        %v2724 = vrot.slane %v2715, %v2723
        %v2725 = vlaneseq
        %v2726 = vshrl.u32 %v2725, 7
        %v2727 = vsub.s32 2, %v2726
        %v2728 = vrot.slane %v2715, %v2727
        %v2729 = vlaneseq
        %v2730 = vshrl.u32 %v2729, 7
        %v2731 = vsub.s32 3, %v2730
        %v2732 = vrot.slane %v2715, %v2731
        %v2733 = vlaneseq
        %v2734 = vshrl.u32 %v2733, 7
        %v2735 = vsub.s32 4, %v2734
        %v2736 = vrot.slane %v2715, %v2735
        %v2737 = vlaneseq
        %v2738 = vshrl.u32 %v2737, 7
        %v2739 = vsub.s32 5, %v2738
        %v2740 = vrot.slane %v2715, %v2739
        %v2741 = vlaneseq
        %v2742 = vshrl.u32 %v2741, 7
        %v2743 = vsub.s32 6, %v2742
        %v2744 = vrot.slane %v2715, %v2743
        %v2745 = vlaneseq
        %v2746 = vshrl.u32 %v2745, 7
        %v2747 = vsub.s32 7, %v2746
        %v2748 = vrot.slane %v2715, %v2747
        %v2757 = vmul.f32 %v2707, %v2720
        %v2758 = vmul.f32 %v2708, %v2724
        %v2759 = vmul.f32 %v2709, %v2728
        %v2760 = vmul.f32 %v2710, %v2732
        %v2761 = vmul.f32 %v2711, %v2736
        %v2762 = vmul.f32 %v2712, %v2740
        %v2763 = vmul.f32 %v2713, %v2744
        %v2764 = vmul.f32 %v2714, %v2748
        %v2765 = vpack.c.bf16 %v2757, %v2757
        %v2766 = vpack.c.bf16 %v2758, %v2758
        %v2767 = vpack.c.bf16 %v2759, %v2759
        %v2768 = vpack.c.bf16 %v2760, %v2760
        %v2769 = vpack.c.bf16 %v2761, %v2761
        %v2770 = vpack.c.bf16 %v2762, %v2762
        %v2771 = vpack.c.bf16 %v2763, %v2763
        %v2772 = vpack.c.bf16 %v2764, %v2764
        %v2781 = vunpack.c.l.b16 %v2765
        %v2782 = vunpack.c.l.b16 %v2766
        %v2783 = vunpack.c.l.b16 %v2767
        %v2784 = vunpack.c.l.b16 %v2768
        %v2785 = vunpack.c.l.b16 %v2769
        %v2786 = vunpack.c.l.b16 %v2770
        %v2787 = vunpack.c.l.b16 %v2771
        %v2788 = vunpack.c.l.b16 %v2772
        %v2789 = vpack.c.b16 %v2782, %v2781
        %v2790 = vpack.c.b16 %v2784, %v2783
        %v2791 = vpack.c.b16 %v2786, %v2785
        %v2792 = vpack.c.b16 %v2788, %v2787
        %2793 = vrot.lane.b32.xlu0 %v2789, 111
        %v2794 = vpop.permute.xlu0 %2793
        %2795 = vrot.lane.b32.xlu0 %v2790, 111
        %v2796 = vpop.permute.xlu0 %2795
        %2797 = vrot.lane.b32.xlu0 %v2791, 111
        %v2798 = vpop.permute.xlu0 %2797
        %2799 = vrot.lane.b32.xlu0 %v2792, 111
        %v2800 = vpop.permute.xlu0 %2799
        %v2801 = vrot.slane %v2794, 4
        %v2802 = vrot.slane %v2796, 4
        %v2803 = vrot.slane %v2798, 4
        %v2804 = vrot.slane %v2800, 4
        %vm2805 = vcmask 908288
        %v2806 = vsel %vm2805, %v2801, %v2794
        %v2807 = vsel %vm366, %v2801, %v2802
        %v2808 = vsel %vm2805, %v2807, %v2796
        %v2809 = vsel %vm366, %v2802, %v2803
        %v2810 = vsel %vm2805, %v2809, %v2798
        %v2811 = vsel %vm366, %v2803, %v2804
        %v2812 = vsel %vm2805, %v2811, %v2800
        %vm2818 = vcmask 1044344
        %vm2819 = vcmask 1047556
        %vm2820 = vmor %vm2819, %vm2818
        %2821 = vst.msk [vmem:[#allocation3] sm:$0xff] %vm2820, %v2806
        %2822 = vst [vmem:[#allocation3 + $0x8] sm:$0xff] %v2808
        %2823 = vst [vmem:[#allocation3 + $0x10] sm:$0xff] %v2810
        %2824 = vst [vmem:[#allocation3 + $0x18] sm:$0xff] %v2812
        %vm2825 = vcmask 707584
        %2826 = vst.msk [vmem:[#allocation3 + $0x20] sm:$0xf] %vm2825, %v2804
        %v2827 = vld [vmem:[#allocation3] sm:$0xff]
        %v2828 = vld [vmem:[#allocation3 + $0x8] sm:$0xff]
        %v2829 = vld [vmem:[#allocation3 + $0x10] sm:$0xff]
        %v2830 = vld [vmem:[#allocation3 + $0x18] sm:$0xff]
        %2831 = vst [vmem:[#allocation4] sm:$0xff] %v2827
        %2832 = vst [vmem:[#allocation4 + $0x8] sm:$0xff] %v2828
        %2833 = vst [vmem:[#allocation4 + $0x10] sm:$0xff] %v2829
        %vm2834 = vcmask 1043456
        %vm2835 = vcmask 850948
        %vm2836 = vmor %vm2835, %vm2834
        %2837 = vst.msk [vmem:[#allocation4 + $0x18] sm:$0xff] %vm2836, %v2830
        %v2838 = vld [vmem:[#allocation3] sm:$0xff]
        %v2839 = vld [vmem:[#allocation3 + $0x8] sm:$0xff]
        %v2840 = vld [vmem:[#allocation3 + $0x10] sm:$0xff]
        %v2841 = vld [vmem:[#allocation3 + $0x18] sm:$0xff]
        %2846 = vrot.lane.b32.xlu0 %v2838, 127
        %v2847 = vpop.permute.xlu0 %2846
        %2848 = vrot.lane.b32.xlu0 %v2839, 127
        %v2849 = vpop.permute.xlu0 %2848
        %2850 = vrot.lane.b32.xlu0 %v2840, 127
        %v2851 = vpop.permute.xlu0 %2850
        %2852 = vrot.lane.b32.xlu0 %v2841, 127
        %v2853 = vpop.permute.xlu0 %2852
        %v2854 = vrot.slane %v2847, 4
        %v2855 = vrot.slane %v2849, 4
        %v2856 = vrot.slane %v2851, 4
        %v2857 = vrot.slane %v2853, 4
        %v2858 = vsel %vm366, %v2854, %v2855
        %v2859 = vsel %vm368, %v2847, %v2858
        %v2860 = vsel %vm366, %v2855, %v2856
        %v2861 = vsel %vm368, %v2849, %v2860
        %v2862 = vsel %vm366, %v2856, %v2857
        %v2863 = vsel %vm368, %v2851, %v2862
        %v2864 = vsel %vm368, %v2853, %v2857
        %2869 = vst [vmem:[#allocation4 + $0x20] sm:$0xff] %v2859
        %2870 = vst [vmem:[#allocation4 + $0x28] sm:$0xff] %v2861
        %2871 = vst [vmem:[#allocation4 + $0x30] sm:$0xff] %v2863
        %2872 = vst.msk [vmem:[#allocation4 + $0x38] sm:$0xff] %vm2836, %v2864
        %v2873 = vld [vmem:[#allocation3] sm:$0xff]
        %v2874 = vld [vmem:[#allocation3 + $0x8] sm:$0xff]
        %v2875 = vld [vmem:[#allocation3 + $0x10] sm:$0xff]
        %v2876 = vld [vmem:[#allocation3 + $0x18] sm:$0xff]
        %2881 = vrot.lane.b32.xlu0 %v2873, 126
        %v2882 = vpop.permute.xlu0 %2881
        %2883 = vrot.lane.b32.xlu0 %v2874, 126
        %v2884 = vpop.permute.xlu0 %2883
        %2885 = vrot.lane.b32.xlu0 %v2875, 126
        %v2886 = vpop.permute.xlu0 %2885
        %2887 = vrot.lane.b32.xlu0 %v2876, 126
        %v2888 = vpop.permute.xlu0 %2887
        %v2889 = vrot.slane %v2882, 4
        %v2890 = vrot.slane %v2884, 4
        %v2891 = vrot.slane %v2886, 4
        %v2892 = vrot.slane %v2888, 4
        %v2893 = vsel %vm366, %v2889, %v2890
        %v2894 = vsel %vm433, %v2882, %v2893
        %v2895 = vsel %vm366, %v2890, %v2891
        %v2896 = vsel %vm433, %v2884, %v2895
        %v2897 = vsel %vm366, %v2891, %v2892
        %v2898 = vsel %vm433, %v2886, %v2897
        %v2899 = vsel %vm433, %v2888, %v2892
        %2904 = vst [vmem:[#allocation4 + $0x40] sm:$0xff] %v2894
        %2905 = vst [vmem:[#allocation4 + $0x48] sm:$0xff] %v2896
        %2906 = vst [vmem:[#allocation4 + $0x50] sm:$0xff] %v2898
        %2907 = vst.msk [vmem:[#allocation4 + $0x58] sm:$0xff] %vm2836, %v2899
        %v2908 = vld [vmem:[#allocation3] sm:$0xff]
        %v2909 = vld [vmem:[#allocation3 + $0x8] sm:$0xff]
        %v2910 = vld [vmem:[#allocation3 + $0x10] sm:$0xff]
        %v2911 = vld [vmem:[#allocation3 + $0x18] sm:$0xff]
        %2916 = vrot.lane.b32.xlu0 %v2908, 118
        %v2917 = vpop.permute.xlu0 %2916
        %2918 = vrot.lane.b32.xlu0 %v2909, 118
        %v2919 = vpop.permute.xlu0 %2918
        %2920 = vrot.lane.b32.xlu0 %v2910, 118
        %v2921 = vpop.permute.xlu0 %2920
        %2922 = vrot.lane.b32.xlu0 %v2911, 118
        %v2923 = vpop.permute.xlu0 %2922
        %v2924 = vrot.slane %v2917, 4
        %v2925 = vrot.slane %v2919, 4
        %v2926 = vrot.slane %v2921, 4
        %v2927 = vrot.slane %v2923, 4
        %v2928 = vsel %vm366, %v2924, %v2925
        %v2929 = vsel %vm495, %v2917, %v2928
        %v2930 = vsel %vm366, %v2925, %v2926
        %v2931 = vsel %vm495, %v2919, %v2930
        %v2932 = vsel %vm366, %v2926, %v2927
        %v2933 = vsel %vm495, %v2921, %v2932
        %v2934 = vsel %vm495, %v2923, %v2927
        %2939 = vst [vmem:[#allocation4 + $0x60] sm:$0xff] %v2929
        %2940 = vst [vmem:[#allocation4 + $0x68] sm:$0xff] %v2931
        %2941 = vst [vmem:[#allocation4 + $0x70] sm:$0xff] %v2933
        %2942 = vst.msk [vmem:[#allocation4 + $0x78] sm:$0xff] %vm2836, %v2934
        %v2943 = vld [vmem:[#allocation3] sm:$0xff]
        %v2944 = vld [vmem:[#allocation3 + $0x8] sm:$0xff]
        %v2945 = vld [vmem:[#allocation3 + $0x10] sm:$0xff]
        %v2946 = vld [vmem:[#allocation3 + $0x18] sm:$0xff]
        %2951 = vrot.lane.b32.xlu0 %v2943, 117
        %v2952 = vpop.permute.xlu0 %2951
        %2953 = vrot.lane.b32.xlu0 %v2944, 117
        %v2954 = vpop.permute.xlu0 %2953
        %2955 = vrot.lane.b32.xlu0 %v2945, 117
        %v2956 = vpop.permute.xlu0 %2955
        %2957 = vrot.lane.b32.xlu0 %v2946, 117
        %v2958 = vpop.permute.xlu0 %2957
        %v2959 = vrot.slane %v2952, 4
        %v2960 = vrot.slane %v2954, 4
        %v2961 = vrot.slane %v2956, 4
        %v2962 = vrot.slane %v2958, 4
        %v2963 = vsel %vm366, %v2959, %v2960
        %v2964 = vsel %vm557, %v2952, %v2963
        %v2965 = vsel %vm366, %v2960, %v2961
        %v2966 = vsel %vm557, %v2954, %v2965
        %v2967 = vsel %vm366, %v2961, %v2962
        %v2968 = vsel %vm557, %v2956, %v2967
        %v2969 = vsel %vm557, %v2958, %v2962
        %2974 = vst [vmem:[#allocation4 + $0x80] sm:$0xff] %v2964
        %2975 = vst [vmem:[#allocation4 + $0x88] sm:$0xff] %v2966
        %2976 = vst [vmem:[#allocation4 + $0x90] sm:$0xff] %v2968
        %2977 = vst.msk [vmem:[#allocation4 + $0x98] sm:$0xff] %vm2836, %v2969
        %v2978 = vld [vmem:[#allocation3] sm:$0xff]
        %v2979 = vld [vmem:[#allocation3 + $0x8] sm:$0xff]
        %v2980 = vld [vmem:[#allocation3 + $0x10] sm:$0xff]
        %v2981 = vld [vmem:[#allocation3 + $0x18] sm:$0xff]
        %2986 = vrot.lane.b32.xlu0 %v2978, 116
        %v2987 = vpop.permute.xlu0 %2986
        %2988 = vrot.lane.b32.xlu0 %v2979, 116
        %v2989 = vpop.permute.xlu0 %2988
        %2990 = vrot.lane.b32.xlu0 %v2980, 116
        %v2991 = vpop.permute.xlu0 %2990
        %2992 = vrot.lane.b32.xlu0 %v2981, 116
        %v2993 = vpop.permute.xlu0 %2992
        %v2994 = vrot.slane %v2987, 4
        %v2995 = vrot.slane %v2989, 4
        %v2996 = vrot.slane %v2991, 4
        %v2997 = vrot.slane %v2993, 4
        %v2998 = vsel %vm366, %v2994, %v2995
        %v2999 = vsel %vm619, %v2987, %v2998
        %v3000 = vsel %vm366, %v2995, %v2996
        %v3001 = vsel %vm619, %v2989, %v3000
        %v3002 = vsel %vm366, %v2996, %v2997
        %v3003 = vsel %vm619, %v2991, %v3002
        %v3004 = vsel %vm619, %v2993, %v2997
        %3009 = vst [vmem:[#allocation4 + $0xa0] sm:$0xff] %v2999
        %3010 = vst [vmem:[#allocation4 + $0xa8] sm:$0xff] %v3001
        %3011 = vst [vmem:[#allocation4 + $0xb0] sm:$0xff] %v3003
        %3012 = vst.msk [vmem:[#allocation4 + $0xb8] sm:$0xff] %vm2836, %v3004
        %v3013 = vld [vmem:[#allocation3] sm:$0xff]
        %v3014 = vld [vmem:[#allocation3 + $0x8] sm:$0xff]
        %v3015 = vld [vmem:[#allocation3 + $0x10] sm:$0xff]
        %v3016 = vld [vmem:[#allocation3 + $0x18] sm:$0xff]
        %3021 = vrot.lane.b32.xlu0 %v3013, 108
        %v3022 = vpop.permute.xlu0 %3021
        %3023 = vrot.lane.b32.xlu0 %v3014, 108
        %v3024 = vpop.permute.xlu0 %3023
        %3025 = vrot.lane.b32.xlu0 %v3015, 108
        %v3026 = vpop.permute.xlu0 %3025
        %3027 = vrot.lane.b32.xlu0 %v3016, 108
        %v3028 = vpop.permute.xlu0 %3027
        %v3029 = vrot.slane %v3022, 4
        %v3030 = vrot.slane %v3024, 4
        %v3031 = vrot.slane %v3026, 4
        %v3032 = vrot.slane %v3028, 4
        %v3033 = vsel %vm366, %v3029, %v3030
        %v3034 = vsel %vm681, %v3022, %v3033
        %v3035 = vsel %vm366, %v3030, %v3031
        %v3036 = vsel %vm681, %v3024, %v3035
        %v3037 = vsel %vm366, %v3031, %v3032
        %v3038 = vsel %vm681, %v3026, %v3037
        %v3039 = vsel %vm681, %v3028, %v3032
        %3044 = vst [vmem:[#allocation4 + $0xc0] sm:$0xff] %v3034
        %3045 = vst [vmem:[#allocation4 + $0xc8] sm:$0xff] %v3036
        %3046 = vst [vmem:[#allocation4 + $0xd0] sm:$0xff] %v3038
        %3047 = vst.msk [vmem:[#allocation4 + $0xd8] sm:$0xff] %vm2836, %v3039
        %v3048 = vld [vmem:[#allocation3] sm:$0xff]
        %v3049 = vld [vmem:[#allocation3 + $0x8] sm:$0xff]
        %v3050 = vld [vmem:[#allocation3 + $0x10] sm:$0xff]
        %v3051 = vld [vmem:[#allocation3 + $0x18] sm:$0xff]
        %3056 = vrot.lane.b32.xlu0 %v3048, 107
        %v3057 = vpop.permute.xlu0 %3056
        %3058 = vrot.lane.b32.xlu0 %v3049, 107
        %v3059 = vpop.permute.xlu0 %3058
        %3060 = vrot.lane.b32.xlu0 %v3050, 107
        %v3061 = vpop.permute.xlu0 %3060
        %3062 = vrot.lane.b32.xlu0 %v3051, 107
        %v3063 = vpop.permute.xlu0 %3062
        %v3064 = vrot.slane %v3057, 4
        %v3065 = vrot.slane %v3059, 4
        %v3066 = vrot.slane %v3061, 4
        %v3067 = vrot.slane %v3063, 4
        %v3068 = vsel %vm366, %v3064, %v3065
        %v3069 = vsel %vm743, %v3057, %v3068
        %v3070 = vsel %vm366, %v3065, %v3066
        %v3071 = vsel %vm743, %v3059, %v3070
        %v3072 = vsel %vm366, %v3066, %v3067
        %v3073 = vsel %vm743, %v3061, %v3072
        %v3074 = vsel %vm743, %v3063, %v3067
        %3079 = vst [vmem:[#allocation4 + $0xe0] sm:$0xff] %v3069
        %3080 = vst [vmem:[#allocation4 + $0xe8] sm:$0xff] %v3071
        %3081 = vst [vmem:[#allocation4 + $0xf0] sm:$0xff] %v3073
        %3082 = vst.msk [vmem:[#allocation4 + $0xf8] sm:$0xff] %vm2836, %v3074
        %v3083 = vld [vmem:[#allocation3] sm:$0xff]
        %v3084 = vld [vmem:[#allocation3 + $0x8] sm:$0xff]
        %v3085 = vld [vmem:[#allocation3 + $0x10] sm:$0xff]
        %v3086 = vld [vmem:[#allocation3 + $0x18] sm:$0xff]
        %3091 = vrot.lane.b32.xlu0 %v3083, 106
        %v3092 = vpop.permute.xlu0 %3091
        %3093 = vrot.lane.b32.xlu0 %v3084, 106
        %v3094 = vpop.permute.xlu0 %3093
        %3095 = vrot.lane.b32.xlu0 %v3085, 106
        %v3096 = vpop.permute.xlu0 %3095
        %3097 = vrot.lane.b32.xlu0 %v3086, 106
        %v3098 = vpop.permute.xlu0 %3097
        %v3099 = vrot.slane %v3092, 4
        %v3100 = vrot.slane %v3094, 4
        %v3101 = vrot.slane %v3096, 4
        %v3102 = vrot.slane %v3098, 4
        %v3103 = vsel %vm366, %v3099, %v3100
        %v3104 = vsel %vm805, %v3092, %v3103
        %v3105 = vsel %vm366, %v3100, %v3101
        %v3106 = vsel %vm805, %v3094, %v3105
        %v3107 = vsel %vm366, %v3101, %v3102
        %v3108 = vsel %vm805, %v3096, %v3107
        %v3109 = vsel %vm805, %v3098, %v3102
        %3114 = vst [vmem:[#allocation4 + $0x100] sm:$0xff] %v3104
        %3115 = vst [vmem:[#allocation4 + $0x108] sm:$0xff] %v3106
        %3116 = vst [vmem:[#allocation4 + $0x110] sm:$0xff] %v3108
        %3117 = vst.msk [vmem:[#allocation4 + $0x118] sm:$0xff] %vm2836, %v3109
        %v3118 = vld [vmem:[#allocation3] sm:$0xff]
        %v3119 = vld [vmem:[#allocation3 + $0x8] sm:$0xff]
        %v3120 = vld [vmem:[#allocation3 + $0x10] sm:$0xff]
        %v3121 = vld [vmem:[#allocation3 + $0x18] sm:$0xff]
        %v3122 = vld [vmem:[#allocation3 + $0x20] sm:$0xf]
        %3128 = vrot.lane.b32.xlu0 %v3118, 28
        %v3129 = vpop.permute.xlu0 %3128
        %3130 = vrot.lane.b32.xlu0 %v3119, 28
        %v3131 = vpop.permute.xlu0 %3130
        %3132 = vrot.lane.b32.xlu0 %v3120, 28
        %v3133 = vpop.permute.xlu0 %3132
        %3134 = vrot.lane.b32.xlu0 %v3121, 28
        %v3135 = vpop.permute.xlu0 %3134
        %3136 = vrot.lane.b32.xlu0 %v3122, 28
        %v3137 = vpop.permute.xlu0 %3136
        %v3138 = vrot.slane %v3129, 4
        %v3139 = vrot.slane %v3131, 4
        %v3140 = vrot.slane %v3133, 4
        %v3141 = vrot.slane %v3135, 4
        %v3142 = vrot.slane %v3137, 4
        %v3143 = vsel %vm366, %v3138, %v3139
        %v3144 = vsel %vm880, %v3129, %v3143
        %v3145 = vsel %vm366, %v3139, %v3140
        %v3146 = vsel %vm880, %v3131, %v3145
        %v3147 = vsel %vm366, %v3140, %v3141
        %v3148 = vsel %vm880, %v3133, %v3147
        %v3149 = vsel %vm366, %v3141, %v3142
        %v3150 = vsel %vm880, %v3135, %v3149
        %3155 = vst [vmem:[#allocation4 + $0x120] sm:$0xff] %v3144
        %3156 = vst [vmem:[#allocation4 + $0x128] sm:$0xff] %v3146
        %3157 = vst [vmem:[#allocation4 + $0x130] sm:$0xff] %v3148
        %3158 = vst.msk [vmem:[#allocation4 + $0x138] sm:$0xff] %vm2836, %v3150
        %v3159 = vld [vmem:[#allocation3] sm:$0xff]
        %v3160 = vld [vmem:[#allocation3 + $0x8] sm:$0xff]
        %v3161 = vld [vmem:[#allocation3 + $0x10] sm:$0xff]
        %v3162 = vld [vmem:[#allocation3 + $0x18] sm:$0xff]
        %v3163 = vld [vmem:[#allocation3 + $0x20] sm:$0xf]
        %3169 = vrot.lane.b32.xlu0 %v3159, 27
        %v3170 = vpop.permute.xlu0 %3169
        %3171 = vrot.lane.b32.xlu0 %v3160, 27
        %v3172 = vpop.permute.xlu0 %3171
        %3173 = vrot.lane.b32.xlu0 %v3161, 27
        %v3174 = vpop.permute.xlu0 %3173
        %3175 = vrot.lane.b32.xlu0 %v3162, 27
        %v3176 = vpop.permute.xlu0 %3175
        %3177 = vrot.lane.b32.xlu0 %v3163, 27
        %v3178 = vpop.permute.xlu0 %3177
        %v3179 = vrot.slane %v3170, 4
        %v3180 = vrot.slane %v3172, 4
        %v3181 = vrot.slane %v3174, 4
        %v3182 = vrot.slane %v3176, 4
        %v3183 = vrot.slane %v3178, 4
        %v3184 = vsel %vm366, %v3179, %v3180
        %v3185 = vsel %vm955, %v3170, %v3184
        %v3186 = vsel %vm366, %v3180, %v3181
        %v3187 = vsel %vm955, %v3172, %v3186
        %v3188 = vsel %vm366, %v3181, %v3182
        %v3189 = vsel %vm955, %v3174, %v3188
        %v3190 = vsel %vm366, %v3182, %v3183
        %v3191 = vsel %vm955, %v3176, %v3190
        %3196 = vst [vmem:[#allocation4 + $0x140] sm:$0xff] %v3185
        %3197 = vst [vmem:[#allocation4 + $0x148] sm:$0xff] %v3187
        %3198 = vst [vmem:[#allocation4 + $0x150] sm:$0xff] %v3189
        %3199 = vst.msk [vmem:[#allocation4 + $0x158] sm:$0xff] %vm2836, %v3191
        %v3200 = vld [vmem:[#allocation3] sm:$0xff]
        %v3201 = vld [vmem:[#allocation3 + $0x8] sm:$0xff]
        %v3202 = vld [vmem:[#allocation3 + $0x10] sm:$0xff]
        %v3203 = vld [vmem:[#allocation3 + $0x18] sm:$0xff]
        %v3204 = vld [vmem:[#allocation3 + $0x20] sm:$0xf]
        %3210 = vrot.lane.b32.xlu0 %v3200, 26
        %v3211 = vpop.permute.xlu0 %3210
        %3212 = vrot.lane.b32.xlu0 %v3201, 26
        %v3213 = vpop.permute.xlu0 %3212
        %3214 = vrot.lane.b32.xlu0 %v3202, 26
        %v3215 = vpop.permute.xlu0 %3214
        %3216 = vrot.lane.b32.xlu0 %v3203, 26
        %v3217 = vpop.permute.xlu0 %3216
        %3218 = vrot.lane.b32.xlu0 %v3204, 26
        %v3219 = vpop.permute.xlu0 %3218
        %v3220 = vrot.slane %v3211, 4
        %v3221 = vrot.slane %v3213, 4
        %v3222 = vrot.slane %v3215, 4
        %v3223 = vrot.slane %v3217, 4
        %v3224 = vrot.slane %v3219, 4
        %v3225 = vsel %vm366, %v3220, %v3221
        %v3226 = vsel %vm1031, %v3211, %v3225
        %v3227 = vsel %vm366, %v3221, %v3222
        %v3228 = vsel %vm1031, %v3213, %v3227
        %v3229 = vsel %vm366, %v3222, %v3223
        %v3230 = vsel %vm1031, %v3215, %v3229
        %v3231 = vsel %vm366, %v3223, %v3224
        %v3232 = vsel %vm1031, %v3217, %v3231
        %3237 = vst [vmem:[#allocation4 + $0x160] sm:$0xff] %v3226
        %3238 = vst [vmem:[#allocation4 + $0x168] sm:$0xff] %v3228
        %3239 = vst [vmem:[#allocation4 + $0x170] sm:$0xff] %v3230
        %3240 = vst.msk [vmem:[#allocation4 + $0x178] sm:$0xff] %vm2836, %v3232
        %v3241 = vld [vmem:[#allocation3] sm:$0xff]
        %v3242 = vld [vmem:[#allocation3 + $0x8] sm:$0xff]
        %v3243 = vld [vmem:[#allocation3 + $0x10] sm:$0xff]
        %v3244 = vld [vmem:[#allocation3 + $0x18] sm:$0xff]
        %v3245 = vld [vmem:[#allocation3 + $0x20] sm:$0xf]
        %3251 = vrot.lane.b32.xlu0 %v3241, 18
        %v3252 = vpop.permute.xlu0 %3251
        %3253 = vrot.lane.b32.xlu0 %v3242, 18
        %v3254 = vpop.permute.xlu0 %3253
        %3255 = vrot.lane.b32.xlu0 %v3243, 18
        %v3256 = vpop.permute.xlu0 %3255
        %3257 = vrot.lane.b32.xlu0 %v3244, 18
        %v3258 = vpop.permute.xlu0 %3257
        %3259 = vrot.lane.b32.xlu0 %v3245, 18
        %v3260 = vpop.permute.xlu0 %3259
        %v3261 = vrot.slane %v3252, 4
        %v3262 = vrot.slane %v3254, 4
        %v3263 = vrot.slane %v3256, 4
        %v3264 = vrot.slane %v3258, 4
        %v3265 = vrot.slane %v3260, 4
        %v3266 = vsel %vm366, %v3261, %v3262
        %v3267 = vsel %vm1106, %v3252, %v3266
        %v3268 = vsel %vm366, %v3262, %v3263
        %v3269 = vsel %vm1106, %v3254, %v3268
        %v3270 = vsel %vm366, %v3263, %v3264
        %v3271 = vsel %vm1106, %v3256, %v3270
        %v3272 = vsel %vm366, %v3264, %v3265
        %v3273 = vsel %vm1106, %v3258, %v3272
        %3278 = vst [vmem:[#allocation4 + $0x180] sm:$0xff] %v3267
        %3279 = vst [vmem:[#allocation4 + $0x188] sm:$0xff] %v3269
        %3280 = vst [vmem:[#allocation4 + $0x190] sm:$0xff] %v3271
        %3281 = vst.msk [vmem:[#allocation4 + $0x198] sm:$0xff] %vm2836, %v3273
        %v3282 = vld [vmem:[#allocation3] sm:$0xff]
        %v3283 = vld [vmem:[#allocation3 + $0x8] sm:$0xff]
        %v3284 = vld [vmem:[#allocation3 + $0x10] sm:$0xff]
        %v3285 = vld [vmem:[#allocation3 + $0x18] sm:$0xff]
        %v3286 = vld [vmem:[#allocation3 + $0x20] sm:$0xf]
        %3292 = vrot.lane.b32.xlu0 %v3282, 17
        %v3293 = vpop.permute.xlu0 %3292
        %3294 = vrot.lane.b32.xlu0 %v3283, 17
        %v3295 = vpop.permute.xlu0 %3294
        %3296 = vrot.lane.b32.xlu0 %v3284, 17
        %v3297 = vpop.permute.xlu0 %3296
        %3298 = vrot.lane.b32.xlu0 %v3285, 17
        %v3299 = vpop.permute.xlu0 %3298
        %3300 = vrot.lane.b32.xlu0 %v3286, 17
        %v3301 = vpop.permute.xlu0 %3300
        %v3302 = vrot.slane %v3293, 4
        %v3303 = vrot.slane %v3295, 4
        %v3304 = vrot.slane %v3297, 4
        %v3305 = vrot.slane %v3299, 4
        %v3306 = vrot.slane %v3301, 4
        %v3307 = vsel %vm366, %v3302, %v3303
        %v3308 = vsel %vm1182, %v3293, %v3307
        %v3309 = vsel %vm366, %v3303, %v3304
        %v3310 = vsel %vm1182, %v3295, %v3309
        %v3311 = vsel %vm366, %v3304, %v3305
        %v3312 = vsel %vm1182, %v3297, %v3311
        %v3313 = vsel %vm366, %v3305, %v3306
        %v3314 = vsel %vm1182, %v3299, %v3313
        %3319 = vst [vmem:[#allocation4 + $0x1a0] sm:$0xff] %v3308
        %3320 = vst [vmem:[#allocation4 + $0x1a8] sm:$0xff] %v3310
        %3321 = vst [vmem:[#allocation4 + $0x1b0] sm:$0xff] %v3312
        %3322 = vst.msk [vmem:[#allocation4 + $0x1b8] sm:$0xff] %vm2836, %v3314
        %v3323 = vld [vmem:[#allocation3] sm:$0xff]
        %v3324 = vld [vmem:[#allocation3 + $0x8] sm:$0xff]
        %v3325 = vld [vmem:[#allocation3 + $0x10] sm:$0xff]
        %v3326 = vld [vmem:[#allocation3 + $0x18] sm:$0xff]
        %v3327 = vld [vmem:[#allocation3 + $0x20] sm:$0xf]
        %3333 = vrot.lane.b32.xlu0 %v3323, 16
        %v3334 = vpop.permute.xlu0 %3333
        %3335 = vrot.lane.b32.xlu0 %v3324, 16
        %v3336 = vpop.permute.xlu0 %3335
        %3337 = vrot.lane.b32.xlu0 %v3325, 16
        %v3338 = vpop.permute.xlu0 %3337
        %3339 = vrot.lane.b32.xlu0 %v3326, 16
        %v3340 = vpop.permute.xlu0 %3339
        %3341 = vrot.lane.b32.xlu0 %v3327, 16
        %v3342 = vpop.permute.xlu0 %3341
        %v3343 = vrot.slane %v3334, 4
        %v3344 = vrot.slane %v3336, 4
        %v3345 = vrot.slane %v3338, 4
        %v3346 = vrot.slane %v3340, 4
        %v3347 = vrot.slane %v3342, 4
        %v3348 = vsel %vm366, %v3343, %v3344
        %v3349 = vsel %vm1257, %v3334, %v3348
        %v3350 = vsel %vm366, %v3344, %v3345
        %v3351 = vsel %vm1257, %v3336, %v3350
        %v3352 = vsel %vm366, %v3345, %v3346
        %v3353 = vsel %vm1257, %v3338, %v3352
        %v3354 = vsel %vm366, %v3346, %v3347
        %v3355 = vsel %vm1257, %v3340, %v3354
        %3360 = vst [vmem:[#allocation4 + $0x1c0] sm:$0xff] %v3349
        %3361 = vst [vmem:[#allocation4 + $0x1c8] sm:$0xff] %v3351
        %3362 = vst [vmem:[#allocation4 + $0x1d0] sm:$0xff] %v3353
        %3363 = vst.msk [vmem:[#allocation4 + $0x1d8] sm:$0xff] %vm2836, %v3355
        %v3364 = vld [vmem:[#allocation3] sm:$0xff]
        %v3365 = vld [vmem:[#allocation3 + $0x8] sm:$0xff]
        %v3366 = vld [vmem:[#allocation3 + $0x10] sm:$0xff]
        %v3367 = vld [vmem:[#allocation3 + $0x18] sm:$0xff]
        %v3368 = vld [vmem:[#allocation3 + $0x20] sm:$0xf]
        %3374 = vrot.lane.b32.xlu0 %v3364, 8
        %v3375 = vpop.permute.xlu0 %3374
        %3376 = vrot.lane.b32.xlu0 %v3365, 8
        %v3377 = vpop.permute.xlu0 %3376
        %3378 = vrot.lane.b32.xlu0 %v3366, 8
        %v3379 = vpop.permute.xlu0 %3378
        %3380 = vrot.lane.b32.xlu0 %v3367, 8
        %v3381 = vpop.permute.xlu0 %3380
        %3382 = vrot.lane.b32.xlu0 %v3368, 8
        %v3383 = vpop.permute.xlu0 %3382
        %v3384 = vrot.slane %v3375, 4
        %v3385 = vrot.slane %v3377, 4
        %v3386 = vrot.slane %v3379, 4
        %v3387 = vrot.slane %v3381, 4
        %v3388 = vrot.slane %v3383, 4
        %v3389 = vsel %vm366, %v3384, %v3385
        %v3390 = vsel %vm1333, %v3375, %v3389
        %v3391 = vsel %vm366, %v3385, %v3386
        %v3392 = vsel %vm1333, %v3377, %v3391
        %v3393 = vsel %vm366, %v3386, %v3387
        %v3394 = vsel %vm1333, %v3379, %v3393
        %v3395 = vsel %vm366, %v3387, %v3388
        %v3396 = vsel %vm1333, %v3381, %v3395
        %3401 = vst [vmem:[#allocation4 + $0x1e0] sm:$0xff] %v3390
        %3402 = vst [vmem:[#allocation4 + $0x1e8] sm:$0xff] %v3392
        %3403 = vst [vmem:[#allocation4 + $0x1f0] sm:$0xff] %v3394
        %3404 = vst.msk [vmem:[#allocation4 + $0x1f8] sm:$0xff] %vm2836, %v3396
        %v3405 = vld [vmem:[#allocation3] sm:$0xff]
        %v3406 = vld [vmem:[#allocation3 + $0x8] sm:$0xff]
        %v3407 = vld [vmem:[#allocation3 + $0x10] sm:$0xff]
        %v3408 = vld [vmem:[#allocation3 + $0x18] sm:$0xff]
        %v3409 = vld [vmem:[#allocation3 + $0x20] sm:$0xf]
        %3415 = vrot.lane.b32.xlu0 %v3405, 7
        %v3416 = vpop.permute.xlu0 %3415
        %3417 = vrot.lane.b32.xlu0 %v3406, 7
        %v3418 = vpop.permute.xlu0 %3417
        %3419 = vrot.lane.b32.xlu0 %v3407, 7
        %v3420 = vpop.permute.xlu0 %3419
        %3421 = vrot.lane.b32.xlu0 %v3408, 7
        %v3422 = vpop.permute.xlu0 %3421
        %3423 = vrot.lane.b32.xlu0 %v3409, 7
        %v3424 = vpop.permute.xlu0 %3423
        %v3425 = vrot.slane %v3416, 4
        %v3426 = vrot.slane %v3418, 4
        %v3427 = vrot.slane %v3420, 4
        %v3428 = vrot.slane %v3422, 4
        %v3429 = vrot.slane %v3424, 4
        %v3430 = vsel %vm366, %v3425, %v3426
        %v3431 = vsel %vm1408, %v3416, %v3430
        %v3432 = vsel %vm366, %v3426, %v3427
        %v3433 = vsel %vm1408, %v3418, %v3432
        %v3434 = vsel %vm366, %v3427, %v3428
        %v3435 = vsel %vm1408, %v3420, %v3434
        %v3436 = vsel %vm366, %v3428, %v3429
        %v3437 = vsel %vm1408, %v3422, %v3436
        %3442 = vst [vmem:[#allocation4 + $0x200] sm:$0xff] %v3431
        %3443 = vst [vmem:[#allocation4 + $0x208] sm:$0xff] %v3433
        %3444 = vst [vmem:[#allocation4 + $0x210] sm:$0xff] %v3435
        %3445 = vst.msk [vmem:[#allocation4 + $0x218] sm:$0xff] %vm2836, %v3437
        %v3446 = vld [vmem:[#allocation3] sm:$0xff]
        %v3447 = vld [vmem:[#allocation3 + $0x8] sm:$0xff]
        %v3448 = vld [vmem:[#allocation3 + $0x10] sm:$0xff]
        %v3449 = vld [vmem:[#allocation3 + $0x18] sm:$0xff]
        %v3450 = vld [vmem:[#allocation3 + $0x20] sm:$0xf]
        %3456 = vrot.lane.b32.xlu0 %v3446, 6
        %v3457 = vpop.permute.xlu0 %3456
        %3458 = vrot.lane.b32.xlu0 %v3447, 6
        %v3459 = vpop.permute.xlu0 %3458
        %3460 = vrot.lane.b32.xlu0 %v3448, 6
        %v3461 = vpop.permute.xlu0 %3460
        %3462 = vrot.lane.b32.xlu0 %v3449, 6
        %v3463 = vpop.permute.xlu0 %3462
        %3464 = vrot.lane.b32.xlu0 %v3450, 6
        %v3465 = vpop.permute.xlu0 %3464
        %v3466 = vrot.slane %v3457, 4
        %v3467 = vrot.slane %v3459, 4
        %v3468 = vrot.slane %v3461, 4
        %v3469 = vrot.slane %v3463, 4
        %v3470 = vrot.slane %v3465, 4
        %v3471 = vsel %vm366, %v3466, %v3467
        %v3472 = vsel %vm1484, %v3457, %v3471
        %v3473 = vsel %vm366, %v3467, %v3468
        %v3474 = vsel %vm1484, %v3459, %v3473
        %v3475 = vsel %vm366, %v3468, %v3469
        %v3476 = vsel %vm1484, %v3461, %v3475
        %v3477 = vsel %vm366, %v3469, %v3470
        %v3478 = vsel %vm1484, %v3463, %v3477
        %3483 = vst [vmem:[#allocation4 + $0x220] sm:$0xff] %v3472
        %3484 = vst [vmem:[#allocation4 + $0x228] sm:$0xff] %v3474
        %3485 = vst [vmem:[#allocation4 + $0x230] sm:$0xff] %v3476
        %3486 = vst.msk [vmem:[#allocation4 + $0x238] sm:$0xff] %vm2836, %v3478
        %v3487 = vld [vmem:[#allocation3 + $0x4] sm:$0xff]
        %v3488 = vld [vmem:[#allocation3 + $0xc] sm:$0xff]
        %v3489 = vld [vmem:[#allocation3 + $0x14] sm:$0xff]
        %v3490 = vld [vmem:[#allocation3 + $0x1c] sm:$0xff]
        %v3491 = vld [vmem:[#allocation3 + $0x24] sm:$0xf]
        %3497 = vrot.lane.b32.xlu0 %v3487, 56
        %v3498 = vpop.permute.xlu0 %3497
        %3499 = vrot.lane.b32.xlu0 %v3488, 56
        %v3500 = vpop.permute.xlu0 %3499
        %3501 = vrot.lane.b32.xlu0 %v3489, 56
        %v3502 = vpop.permute.xlu0 %3501
        %3503 = vrot.lane.b32.xlu0 %v3490, 56
        %v3504 = vpop.permute.xlu0 %3503
        %3505 = vrot.lane.b32.xlu0 %v3491, 56
        %v3506 = vpop.permute.xlu0 %3505
        %v3507 = vrot.slane %v3498, 4
        %v3508 = vrot.slane %v3500, 4
        %v3509 = vrot.slane %v3502, 4
        %v3510 = vrot.slane %v3504, 4
        %v3511 = vrot.slane %v3506, 4
        %v3512 = vsel %vm366, %v3507, %v3508
        %v3513 = vsel %vm1559, %v3498, %v3512
        %v3514 = vsel %vm366, %v3508, %v3509
        %v3515 = vsel %vm1559, %v3500, %v3514
        %v3516 = vsel %vm366, %v3509, %v3510
        %v3517 = vsel %vm1559, %v3502, %v3516
        %v3518 = vsel %vm366, %v3510, %v3511
        %v3519 = vsel %vm1559, %v3504, %v3518
        %3524 = vst [vmem:[#allocation4 + $0x240] sm:$0xff] %v3513
        %3525 = vst [vmem:[#allocation4 + $0x248] sm:$0xff] %v3515
        %3526 = vst [vmem:[#allocation4 + $0x250] sm:$0xff] %v3517
        %3527 = vst.msk [vmem:[#allocation4 + $0x258] sm:$0xff] %vm2836, %v3519
        %v3528 = vld [vmem:[#allocation3 + $0x4] sm:$0xff]
        %v3529 = vld [vmem:[#allocation3 + $0xc] sm:$0xff]
        %v3530 = vld [vmem:[#allocation3 + $0x14] sm:$0xff]
        %v3531 = vld [vmem:[#allocation3 + $0x1c] sm:$0xff]
        %v3532 = vld [vmem:[#allocation3 + $0x24] sm:$0xf]
        %3538 = vrot.lane.b32.xlu0 %v3528, 55
        %v3539 = vpop.permute.xlu0 %3538
        %3540 = vrot.lane.b32.xlu0 %v3529, 55
        %v3541 = vpop.permute.xlu0 %3540
        %3542 = vrot.lane.b32.xlu0 %v3530, 55
        %v3543 = vpop.permute.xlu0 %3542
        %3544 = vrot.lane.b32.xlu0 %v3531, 55
        %v3545 = vpop.permute.xlu0 %3544
        %3546 = vrot.lane.b32.xlu0 %v3532, 55
        %v3547 = vpop.permute.xlu0 %3546
        %v3548 = vrot.slane %v3539, 4
        %v3549 = vrot.slane %v3541, 4
        %v3550 = vrot.slane %v3543, 4
        %v3551 = vrot.slane %v3545, 4
        %v3552 = vrot.slane %v3547, 4
        %v3553 = vsel %vm366, %v3548, %v3549
        %v3554 = vsel %vm1635, %v3539, %v3553
        %v3555 = vsel %vm366, %v3549, %v3550
        %v3556 = vsel %vm1635, %v3541, %v3555
        %v3557 = vsel %vm366, %v3550, %v3551
        %v3558 = vsel %vm1635, %v3543, %v3557
        %v3559 = vsel %vm366, %v3551, %v3552
        %v3560 = vsel %vm1635, %v3545, %v3559
        %3565 = vst [vmem:[#allocation4 + $0x260] sm:$0xff] %v3554
        %3566 = vst [vmem:[#allocation4 + $0x268] sm:$0xff] %v3556
        %3567 = vst [vmem:[#allocation4 + $0x270] sm:$0xff] %v3558
        %3568 = vst.msk [vmem:[#allocation4 + $0x278] sm:$0xff] %vm2836, %v3560
        %v3569 = vld [vmem:[#allocation3 + $0x4] sm:$0xff]
        %v3570 = vld [vmem:[#allocation3 + $0xc] sm:$0xff]
        %v3571 = vld [vmem:[#allocation3 + $0x14] sm:$0xff]
        %v3572 = vld [vmem:[#allocation3 + $0x1c] sm:$0xff]
        %v3573 = vld [vmem:[#allocation3 + $0x24] sm:$0xf]
        %3579 = vrot.lane.b32.xlu0 %v3569, 54
        %v3580 = vpop.permute.xlu0 %3579
        %3581 = vrot.lane.b32.xlu0 %v3570, 54
        %v3582 = vpop.permute.xlu0 %3581
        %3583 = vrot.lane.b32.xlu0 %v3571, 54
        %v3584 = vpop.permute.xlu0 %3583
        %3585 = vrot.lane.b32.xlu0 %v3572, 54
        %v3586 = vpop.permute.xlu0 %3585
        %3587 = vrot.lane.b32.xlu0 %v3573, 54
        %v3588 = vpop.permute.xlu0 %3587
        %v3589 = vrot.slane %v3580, 4
        %v3590 = vrot.slane %v3582, 4
        %v3591 = vrot.slane %v3584, 4
        %v3592 = vrot.slane %v3586, 4
        %v3593 = vrot.slane %v3588, 4
        %v3594 = vsel %vm366, %v3589, %v3590
        %v3595 = vsel %vm1710, %v3580, %v3594
        %v3596 = vsel %vm366, %v3590, %v3591
        %v3597 = vsel %vm1710, %v3582, %v3596
        %v3598 = vsel %vm366, %v3591, %v3592
        %v3599 = vsel %vm1710, %v3584, %v3598
        %v3600 = vsel %vm366, %v3592, %v3593
        %v3601 = vsel %vm1710, %v3586, %v3600
        %3606 = vst [vmem:[#allocation4 + $0x280] sm:$0xff] %v3595
        %3607 = vst [vmem:[#allocation4 + $0x288] sm:$0xff] %v3597
        %3608 = vst [vmem:[#allocation4 + $0x290] sm:$0xff] %v3599
        %3609 = vst.msk [vmem:[#allocation4 + $0x298] sm:$0xff] %vm2836, %v3601
        %v3610 = vld [vmem:[#allocation3 + $0x4] sm:$0xff]
        %v3611 = vld [vmem:[#allocation3 + $0xc] sm:$0xff]
        %v3612 = vld [vmem:[#allocation3 + $0x14] sm:$0xff]
        %v3613 = vld [vmem:[#allocation3 + $0x1c] sm:$0xff]
        %v3614 = vld [vmem:[#allocation3 + $0x24] sm:$0xf]
        %3620 = vrot.lane.b32.xlu0 %v3610, 46
        %v3621 = vpop.permute.xlu0 %3620
        %3622 = vrot.lane.b32.xlu0 %v3611, 46
        %v3623 = vpop.permute.xlu0 %3622
        %3624 = vrot.lane.b32.xlu0 %v3612, 46
        %v3625 = vpop.permute.xlu0 %3624
        %3626 = vrot.lane.b32.xlu0 %v3613, 46
        %v3627 = vpop.permute.xlu0 %3626
        %3628 = vrot.lane.b32.xlu0 %v3614, 46
        %v3629 = vpop.permute.xlu0 %3628
        %v3630 = vrot.slane %v3621, 4
        %v3631 = vrot.slane %v3623, 4
        %v3632 = vrot.slane %v3625, 4
        %v3633 = vrot.slane %v3627, 4
        %v3634 = vrot.slane %v3629, 4
        %v3635 = vsel %vm366, %v3630, %v3631
        %v3636 = vsel %vm1786, %v3621, %v3635
        %v3637 = vsel %vm366, %v3631, %v3632
        %v3638 = vsel %vm1786, %v3623, %v3637
        %v3639 = vsel %vm366, %v3632, %v3633
        %v3640 = vsel %vm1786, %v3625, %v3639
        %v3641 = vsel %vm366, %v3633, %v3634
        %v3642 = vsel %vm1786, %v3627, %v3641
        %3647 = vst [vmem:[#allocation4 + $0x2a0] sm:$0xff] %v3636
        %3648 = vst [vmem:[#allocation4 + $0x2a8] sm:$0xff] %v3638
        %3649 = vst [vmem:[#allocation4 + $0x2b0] sm:$0xff] %v3640
        %3650 = vst.msk [vmem:[#allocation4 + $0x2b8] sm:$0xff] %vm2836, %v3642
        %v3651 = vld [vmem:[#allocation3 + $0x4] sm:$0xff]
        %v3652 = vld [vmem:[#allocation3 + $0xc] sm:$0xff]
        %v3653 = vld [vmem:[#allocation3 + $0x14] sm:$0xff]
        %v3654 = vld [vmem:[#allocation3 + $0x1c] sm:$0xff]
        %v3655 = vld [vmem:[#allocation3 + $0x24] sm:$0xf]
        %3661 = vrot.lane.b32.xlu0 %v3651, 45
        %v3662 = vpop.permute.xlu0 %3661
        %3663 = vrot.lane.b32.xlu0 %v3652, 45
        %v3664 = vpop.permute.xlu0 %3663
        %3665 = vrot.lane.b32.xlu0 %v3653, 45
        %v3666 = vpop.permute.xlu0 %3665
        %3667 = vrot.lane.b32.xlu0 %v3654, 45
        %v3668 = vpop.permute.xlu0 %3667
        %3669 = vrot.lane.b32.xlu0 %v3655, 45
        %v3670 = vpop.permute.xlu0 %3669
        %v3671 = vrot.slane %v3662, 4
        %v3672 = vrot.slane %v3664, 4
        %v3673 = vrot.slane %v3666, 4
        %v3674 = vrot.slane %v3668, 4
        %v3675 = vrot.slane %v3670, 4
        %v3676 = vsel %vm366, %v3671, %v3672
        %v3677 = vsel %vm1861, %v3662, %v3676
        %v3678 = vsel %vm366, %v3672, %v3673
        %v3679 = vsel %vm1861, %v3664, %v3678
        %v3680 = vsel %vm366, %v3673, %v3674
        %v3681 = vsel %vm1861, %v3666, %v3680
        %v3682 = vsel %vm366, %v3674, %v3675
        %v3683 = vsel %vm1861, %v3668, %v3682
        %3688 = vst [vmem:[#allocation4 + $0x2c0] sm:$0xff] %v3677
        %3689 = vst [vmem:[#allocation4 + $0x2c8] sm:$0xff] %v3679
        %3690 = vst [vmem:[#allocation4 + $0x2d0] sm:$0xff] %v3681
        %3691 = vst.msk [vmem:[#allocation4 + $0x2d8] sm:$0xff] %vm2836, %v3683
        %v3692 = vld [vmem:[#allocation3 + $0x4] sm:$0xff]
        %v3693 = vld [vmem:[#allocation3 + $0xc] sm:$0xff]
        %v3694 = vld [vmem:[#allocation3 + $0x14] sm:$0xff]
        %v3695 = vld [vmem:[#allocation3 + $0x1c] sm:$0xff]
        %v3696 = vld [vmem:[#allocation3 + $0x24] sm:$0xf]
        %3702 = vrot.lane.b32.xlu0 %v3692, 44
        %v3703 = vpop.permute.xlu0 %3702
        %3704 = vrot.lane.b32.xlu0 %v3693, 44
        %v3705 = vpop.permute.xlu0 %3704
        %3706 = vrot.lane.b32.xlu0 %v3694, 44
        %v3707 = vpop.permute.xlu0 %3706
        %3708 = vrot.lane.b32.xlu0 %v3695, 44
        %v3709 = vpop.permute.xlu0 %3708
        %3710 = vrot.lane.b32.xlu0 %v3696, 44
        %v3711 = vpop.permute.xlu0 %3710
        %v3712 = vrot.slane %v3703, 4
        %v3713 = vrot.slane %v3705, 4
        %v3714 = vrot.slane %v3707, 4
        %v3715 = vrot.slane %v3709, 4
        %v3716 = vrot.slane %v3711, 4
        %v3717 = vsel %vm366, %v3712, %v3713
        %v3718 = vsel %vm1937, %v3703, %v3717
        %v3719 = vsel %vm366, %v3713, %v3714
        %v3720 = vsel %vm1937, %v3705, %v3719
        %v3721 = vsel %vm366, %v3714, %v3715
        %v3722 = vsel %vm1937, %v3707, %v3721
        %v3723 = vsel %vm366, %v3715, %v3716
        %v3724 = vsel %vm1937, %v3709, %v3723
        %3729 = vst [vmem:[#allocation4 + $0x2e0] sm:$0xff] %v3718
        %3730 = vst [vmem:[#allocation4 + $0x2e8] sm:$0xff] %v3720
        %3731 = vst [vmem:[#allocation4 + $0x2f0] sm:$0xff] %v3722
        %3732 = vst.msk [vmem:[#allocation4 + $0x2f8] sm:$0xff] %vm2836, %v3724
        %v3733 = vld [vmem:[#allocation3 + $0x4] sm:$0xff]
        %v3734 = vld [vmem:[#allocation3 + $0xc] sm:$0xff]
        %v3735 = vld [vmem:[#allocation3 + $0x14] sm:$0xff]
        %v3736 = vld [vmem:[#allocation3 + $0x1c] sm:$0xff]
        %v3737 = vld [vmem:[#allocation3 + $0x24] sm:$0xf]
        %3743 = vrot.lane.b32.xlu0 %v3733, 36
        %v3744 = vpop.permute.xlu0 %3743
        %3745 = vrot.lane.b32.xlu0 %v3734, 36
        %v3746 = vpop.permute.xlu0 %3745
        %3747 = vrot.lane.b32.xlu0 %v3735, 36
        %v3748 = vpop.permute.xlu0 %3747
        %3749 = vrot.lane.b32.xlu0 %v3736, 36
        %v3750 = vpop.permute.xlu0 %3749
        %3751 = vrot.lane.b32.xlu0 %v3737, 36
        %v3752 = vpop.permute.xlu0 %3751
        %v3753 = vrot.slane %v3744, 4
        %v3754 = vrot.slane %v3746, 4
        %v3755 = vrot.slane %v3748, 4
        %v3756 = vrot.slane %v3750, 4
        %v3757 = vrot.slane %v3752, 4
        %v3758 = vsel %vm366, %v3753, %v3754
        %v3759 = vsel %vm2012, %v3744, %v3758
        %v3760 = vsel %vm366, %v3754, %v3755
        %v3761 = vsel %vm2012, %v3746, %v3760
        %v3762 = vsel %vm366, %v3755, %v3756
        %v3763 = vsel %vm2012, %v3748, %v3762
        %v3764 = vsel %vm366, %v3756, %v3757
        %v3765 = vsel %vm2012, %v3750, %v3764
        %3770 = vst [vmem:[#allocation4 + $0x300] sm:$0xff] %v3759
        %3771 = vst [vmem:[#allocation4 + $0x308] sm:$0xff] %v3761
        %3772 = vst [vmem:[#allocation4 + $0x310] sm:$0xff] %v3763
        %3773 = vst.msk [vmem:[#allocation4 + $0x318] sm:$0xff] %vm2836, %v3765
        %v3774 = vld [vmem:[#allocation3 + $0x4] sm:$0xff]
        %v3775 = vld [vmem:[#allocation3 + $0xc] sm:$0xff]
        %v3776 = vld [vmem:[#allocation3 + $0x14] sm:$0xff]
        %v3777 = vld [vmem:[#allocation3 + $0x1c] sm:$0xff]
        %v3778 = vld [vmem:[#allocation3 + $0x24] sm:$0xf]
        %3784 = vrot.lane.b32.xlu0 %v3774, 35
        %v3785 = vpop.permute.xlu0 %3784
        %3786 = vrot.lane.b32.xlu0 %v3775, 35
        %v3787 = vpop.permute.xlu0 %3786
        %3788 = vrot.lane.b32.xlu0 %v3776, 35
        %v3789 = vpop.permute.xlu0 %3788
        %3790 = vrot.lane.b32.xlu0 %v3777, 35
        %v3791 = vpop.permute.xlu0 %3790
        %3792 = vrot.lane.b32.xlu0 %v3778, 35
        %v3793 = vpop.permute.xlu0 %3792
        %v3794 = vrot.slane %v3785, 4
        %v3795 = vrot.slane %v3787, 4
        %v3796 = vrot.slane %v3789, 4
        %v3797 = vrot.slane %v3791, 4
        %v3798 = vrot.slane %v3793, 4
        %v3799 = vsel %vm366, %v3794, %v3795
        %v3800 = vsel %vm2088, %v3785, %v3799
        %v3801 = vsel %vm366, %v3795, %v3796
        %v3802 = vsel %vm2088, %v3787, %v3801
        %v3803 = vsel %vm366, %v3796, %v3797
        %v3804 = vsel %vm2088, %v3789, %v3803
        %v3805 = vsel %vm366, %v3797, %v3798
        %v3806 = vsel %vm2088, %v3791, %v3805
        %3811 = vst [vmem:[#allocation4 + $0x320] sm:$0xff] %v3800
        %3812 = vst [vmem:[#allocation4 + $0x328] sm:$0xff] %v3802
        %3813 = vst [vmem:[#allocation4 + $0x330] sm:$0xff] %v3804
        %3814 = vst.msk [vmem:[#allocation4 + $0x338] sm:$0xff] %vm2836, %v3806
        %v3815 = vld [vmem:[#allocation3 + $0x4] sm:$0xff]
        %v3816 = vld [vmem:[#allocation3 + $0xc] sm:$0xff]
        %v3817 = vld [vmem:[#allocation3 + $0x14] sm:$0xff]
        %v3818 = vld [vmem:[#allocation3 + $0x1c] sm:$0xff]
        %v3819 = vld [vmem:[#allocation3 + $0x24] sm:$0xf]
        %3825 = vrot.lane.b32.xlu0 %v3815, 34
        %v3826 = vpop.permute.xlu0 %3825
        %3827 = vrot.lane.b32.xlu0 %v3816, 34
        %v3828 = vpop.permute.xlu0 %3827
        %3829 = vrot.lane.b32.xlu0 %v3817, 34
        %v3830 = vpop.permute.xlu0 %3829
        %3831 = vrot.lane.b32.xlu0 %v3818, 34
        %v3832 = vpop.permute.xlu0 %3831
        %3833 = vrot.lane.b32.xlu0 %v3819, 34
        %v3834 = vpop.permute.xlu0 %3833
        %v3835 = vrot.slane %v3826, 4
        %v3836 = vrot.slane %v3828, 4
        %v3837 = vrot.slane %v3830, 4
        %v3838 = vrot.slane %v3832, 4
        %v3839 = vrot.slane %v3834, 4
        %v3840 = vsel %vm366, %v3835, %v3836
        %v3841 = vsel %vm2163, %v3826, %v3840
        %v3842 = vsel %vm366, %v3836, %v3837
        %v3843 = vsel %vm2163, %v3828, %v3842
        %v3844 = vsel %vm366, %v3837, %v3838
        %v3845 = vsel %vm2163, %v3830, %v3844
        %v3846 = vsel %vm366, %v3838, %v3839
        %v3847 = vsel %vm2163, %v3832, %v3846
        %3852 = vst [vmem:[#allocation4 + $0x340] sm:$0xff] %v3841
        %3853 = vst [vmem:[#allocation4 + $0x348] sm:$0xff] %v3843
        %3854 = vst [vmem:[#allocation4 + $0x350] sm:$0xff] %v3845
        %3855 = vst.msk [vmem:[#allocation4 + $0x358] sm:$0xff] %vm2836, %v3847
        %v3856 = vld [vmem:[%s239] sm:$0xff]
        %v3857 = vld [vmem:[%s239 + $0x8] sm:$0xff]
        %v3858 = vld [vmem:[%s239 + $0x10] sm:$0x3]
        %v3862 = vcombine.high %v3856, %v3856
        %v3864 = vunpack.c.l.s4 1983009808
        %v3865 = vunpack.c.0.s8 %v3864
        %v3866 = vlaneseq
        %v3867 = vshrl.u32 %v3866, 7
        %v3868 = vsub.s32 %v3865, %v3867
        %v3869 = vrot.slane %v3856, %v3868
        %v3871 = vunpack.c.l.s4 1983009808
        %v3872 = vunpack.c.0.s8 %v3871
        %v3873 = vlaneseq
        %v3874 = vshrl.u32 %v3873, 7
        %v3875 = vsub.s32 %v3872, %v3874
        %v3876 = vrot.slane %v3862, %v3875
        %v3877 = vcombine.high %v3857, %v3857
        %v3879 = vunpack.c.l.s4 1983009808
        %v3880 = vunpack.c.0.s8 %v3879
        %v3881 = vlaneseq
        %v3882 = vshrl.u32 %v3881, 7
        %v3883 = vsub.s32 %v3880, %v3882
        %v3884 = vrot.slane %v3857, %v3883
        %v3886 = vunpack.c.l.s4 1983009808
        %v3887 = vunpack.c.0.s8 %v3886
        %v3888 = vlaneseq
        %v3889 = vshrl.u32 %v3888, 7
        %v3890 = vsub.s32 %v3887, %v3889
        %v3891 = vrot.slane %v3877, %v3890
        %v3893 = vunpack.c.l.s4 1983009808
        %v3894 = vunpack.c.0.s8 %v3893
        %v3895 = vlaneseq
        %v3896 = vshrl.u32 %v3895, 7
        %v3897 = vsub.s32 %v3894, %v3896
        %v3898 = vrot.slane %v3858, %v3897
        %3899 = vrot.lane.b32.xlu0 %v3869, 17
        %v3900 = vpop.permute.xlu0 %3899
        %3901 = vrot.lane.b32.xlu0 %v3876, 17
        %v3902 = vpop.permute.xlu0 %3901
        %3903 = vrot.lane.b32.xlu0 %v3884, 17
        %v3904 = vpop.permute.xlu0 %3903
        %3905 = vrot.lane.b32.xlu0 %v3891, 17
        %v3906 = vpop.permute.xlu0 %3905
        %3907 = vrot.lane.b32.xlu0 %v3898, 17
        %v3908 = vpop.permute.xlu0 %3907
        %v3909 = vrot.slane %v3900, 4
        %v3910 = vrot.slane %v3902, 4
        %v3911 = vrot.slane %v3904, 4
        %v3912 = vrot.slane %v3906, 4
        %v3913 = vrot.slane %v3908, 4
        %v3914 = vsel %vm366, %v3909, %v3910
        %v3915 = vsel %vm1182, %v3900, %v3914
        %v3916 = vsel %vm366, %v3910, %v3911
        %v3917 = vsel %vm1182, %v3902, %v3916
        %v3918 = vsel %vm366, %v3911, %v3912
        %v3919 = vsel %vm1182, %v3904, %v3918
        %v3920 = vsel %vm366, %v3912, %v3913
        %v3921 = vsel %vm1182, %v3906, %v3920
        %3926 = vst [vmem:[#allocation4 + $0x360] sm:$0x33] %v3915
        %3927 = vst [vmem:[#allocation4 + $0x368] sm:$0x33] %v3917
        %3928 = vst [vmem:[#allocation4 + $0x370] sm:$0x33] %v3919
        %3929 = vst.msk [vmem:[#allocation4 + $0x378] sm:$0x33] %vm318, %v3921
        %v3930 = vld [vmem:[%s3] sm:$0xff]
        %v3931 = vld [vmem:[#allocation4] sm:$0xff]
        %v3932 = vld [vmem:[#allocation4 + $0x8] sm:$0xff]
        %v3933 = vld [vmem:[#allocation4 + $0x10] sm:$0xff]
        %v3934 = vld [vmem:[#allocation4 + $0x18] sm:$0xff]
        %v3935 = vld [vmem:[#allocation4 + $0x20] sm:$0xff]
        %v3936 = vld [vmem:[#allocation4 + $0x28] sm:$0xff]
        %v3937 = vld [vmem:[#allocation4 + $0x30] sm:$0xff]
        %v3938 = vld [vmem:[#allocation4 + $0x38] sm:$0xff]
        %v3939 = vld [vmem:[#allocation4 + $0x40] sm:$0xff]
        %v3940 = vld [vmem:[#allocation4 + $0x48] sm:$0xff]
        %v3941 = vld [vmem:[#allocation4 + $0x50] sm:$0xff]
        %v3942 = vld [vmem:[#allocation4 + $0x58] sm:$0xff]
        %v3943 = vld [vmem:[#allocation4 + $0x60] sm:$0xff]
        %v3944 = vld [vmem:[#allocation4 + $0x68] sm:$0xff]
        %v3945 = vld [vmem:[#allocation4 + $0x70] sm:$0xff]
        %v3946 = vld [vmem:[#allocation4 + $0x78] sm:$0xff]
        %v3947 = vld [vmem:[#allocation4 + $0x80] sm:$0xff]
        %v3948 = vld [vmem:[#allocation4 + $0x88] sm:$0xff]
        %v3949 = vld [vmem:[#allocation4 + $0x90] sm:$0xff]
        %v3950 = vld [vmem:[#allocation4 + $0x98] sm:$0xff]
        %v3951 = vld [vmem:[#allocation4 + $0xa0] sm:$0xff]
        %v3952 = vld [vmem:[#allocation4 + $0xa8] sm:$0xff]
        %v3953 = vld [vmem:[#allocation4 + $0xb0] sm:$0xff]
        %v3954 = vld [vmem:[#allocation4 + $0xb8] sm:$0xff]
        %v3955 = vld [vmem:[#allocation4 + $0xc0] sm:$0xff]
        %v3956 = vld [vmem:[#allocation4 + $0xc8] sm:$0xff]
        %v3957 = vld [vmem:[#allocation4 + $0xd0] sm:$0xff]
        %v3958 = vld [vmem:[#allocation4 + $0xd8] sm:$0xff]
        %v3959 = vld [vmem:[#allocation4 + $0xe0] sm:$0xff]
        %v3960 = vld [vmem:[#allocation4 + $0xe8] sm:$0xff]
        %v3961 = vld [vmem:[#allocation4 + $0xf0] sm:$0xff]
        %v3962 = vld [vmem:[#allocation4 + $0xf8] sm:$0xff]
        %v3963 = vld [vmem:[#allocation4 + $0x100] sm:$0xff]
        %v3964 = vld [vmem:[#allocation4 + $0x108] sm:$0xff]
        %v3965 = vld [vmem:[#allocation4 + $0x110] sm:$0xff]
        %v3966 = vld [vmem:[#allocation4 + $0x118] sm:$0xff]
        %v3967 = vld [vmem:[#allocation4 + $0x120] sm:$0xff]
        %v3968 = vld [vmem:[#allocation4 + $0x128] sm:$0xff]
        %v3969 = vld [vmem:[#allocation4 + $0x130] sm:$0xff]
        %v3970 = vld [vmem:[#allocation4 + $0x138] sm:$0xff]
        %v3971 = vld [vmem:[#allocation4 + $0x140] sm:$0xff]
        %v3972 = vld [vmem:[#allocation4 + $0x148] sm:$0xff]
        %v3973 = vld [vmem:[#allocation4 + $0x150] sm:$0xff]
        %v3974 = vld [vmem:[#allocation4 + $0x158] sm:$0xff]
        %v3975 = vld [vmem:[#allocation4 + $0x160] sm:$0xff]
        %v3976 = vld [vmem:[#allocation4 + $0x168] sm:$0xff]
        %v3977 = vld [vmem:[#allocation4 + $0x170] sm:$0xff]
        %v3978 = vld [vmem:[#allocation4 + $0x178] sm:$0xff]
        %v3979 = vld [vmem:[#allocation4 + $0x180] sm:$0xff]
        %v3980 = vld [vmem:[#allocation4 + $0x188] sm:$0xff]
        %v3981 = vld [vmem:[#allocation4 + $0x190] sm:$0xff]
        %v3982 = vld [vmem:[#allocation4 + $0x198] sm:$0xff]
        %v3983 = vld [vmem:[#allocation4 + $0x1a0] sm:$0xff]
        %v3984 = vld [vmem:[#allocation4 + $0x1a8] sm:$0xff]
        %v3985 = vld [vmem:[#allocation4 + $0x1b0] sm:$0xff]
        %v3986 = vld [vmem:[#allocation4 + $0x1b8] sm:$0xff]
        %v3987 = vld [vmem:[#allocation4 + $0x1c0] sm:$0xff]
        %v3988 = vld [vmem:[#allocation4 + $0x1c8] sm:$0xff]
        %v3989 = vld [vmem:[#allocation4 + $0x1d0] sm:$0xff]
        %v3990 = vld [vmem:[#allocation4 + $0x1d8] sm:$0xff]
        %v3991 = vld [vmem:[#allocation4 + $0x1e0] sm:$0xff]
        %v3992 = vld [vmem:[#allocation4 + $0x1e8] sm:$0xff]
        %v3993 = vld [vmem:[#allocation4 + $0x1f0] sm:$0xff]
        %v3994 = vld [vmem:[#allocation4 + $0x1f8] sm:$0xff]
        %v3995 = vld [vmem:[#allocation4 + $0x200] sm:$0xff]
        %v3996 = vld [vmem:[#allocation4 + $0x208] sm:$0xff]
        %v3997 = vld [vmem:[#allocation4 + $0x210] sm:$0xff]
        %v3998 = vld [vmem:[#allocation4 + $0x218] sm:$0xff]
        %v3999 = vld [vmem:[#allocation4 + $0x220] sm:$0xff]
        %v4000 = vld [vmem:[#allocation4 + $0x228] sm:$0xff]
        %v4001 = vld [vmem:[#allocation4 + $0x230] sm:$0xff]
        %v4002 = vld [vmem:[#allocation4 + $0x238] sm:$0xff]
        %v4003 = vld [vmem:[#allocation4 + $0x240] sm:$0xff]
        %v4004 = vld [vmem:[#allocation4 + $0x248] sm:$0xff]
        %v4005 = vld [vmem:[#allocation4 + $0x250] sm:$0xff]
        %v4006 = vld [vmem:[#allocation4 + $0x258] sm:$0xff]
        %v4007 = vld [vmem:[#allocation4 + $0x260] sm:$0xff]
        %v4008 = vld [vmem:[#allocation4 + $0x268] sm:$0xff]
        %v4009 = vld [vmem:[#allocation4 + $0x270] sm:$0xff]
        %v4010 = vld [vmem:[#allocation4 + $0x278] sm:$0xff]
        %v4011 = vld [vmem:[#allocation4 + $0x280] sm:$0xff]
        %v4012 = vld [vmem:[#allocation4 + $0x288] sm:$0xff]
        %v4013 = vld [vmem:[#allocation4 + $0x290] sm:$0xff]
        %v4014 = vld [vmem:[#allocation4 + $0x298] sm:$0xff]
        %v4015 = vld [vmem:[#allocation4 + $0x2a0] sm:$0xff]
        %v4016 = vld [vmem:[#allocation4 + $0x2a8] sm:$0xff]
        %v4017 = vld [vmem:[#allocation4 + $0x2b0] sm:$0xff]
        %v4018 = vld [vmem:[#allocation4 + $0x2b8] sm:$0xff]
        %v4019 = vld [vmem:[#allocation4 + $0x2c0] sm:$0xff]
        %v4020 = vld [vmem:[#allocation4 + $0x2c8] sm:$0xff]
        %v4021 = vld [vmem:[#allocation4 + $0x2d0] sm:$0xff]
        %v4022 = vld [vmem:[#allocation4 + $0x2d8] sm:$0xff]
        %v4023 = vld [vmem:[#allocation4 + $0x2e0] sm:$0xff]
        %v4024 = vld [vmem:[#allocation4 + $0x2e8] sm:$0xff]
        %v4025 = vld [vmem:[#allocation4 + $0x2f0] sm:$0xff]
        %v4026 = vld [vmem:[#allocation4 + $0x2f8] sm:$0xff]
        %v4027 = vld [vmem:[#allocation4 + $0x300] sm:$0xff]
        %v4028 = vld [vmem:[#allocation4 + $0x308] sm:$0xff]
        %v4029 = vld [vmem:[#allocation4 + $0x310] sm:$0xff]
        %v4030 = vld [vmem:[#allocation4 + $0x318] sm:$0xff]
        %v4031 = vld [vmem:[#allocation4 + $0x320] sm:$0xff]
        %v4032 = vld [vmem:[#allocation4 + $0x328] sm:$0xff]
        %v4033 = vld [vmem:[#allocation4 + $0x330] sm:$0xff]
        %v4034 = vld [vmem:[#allocation4 + $0x338] sm:$0xff]
        %v4035 = vld [vmem:[#allocation4 + $0x340] sm:$0xff]
        %v4036 = vld [vmem:[#allocation4 + $0x348] sm:$0xff]
        %v4037 = vld [vmem:[#allocation4 + $0x350] sm:$0xff]
        %v4038 = vld [vmem:[#allocation4 + $0x358] sm:$0xff]
        %v4039 = vld [vmem:[#allocation4 + $0x360] sm:$0x33]
        %v4040 = vld [vmem:[#allocation4 + $0x368] sm:$0x33]
        %v4041 = vld [vmem:[#allocation4 + $0x370] sm:$0x33]
        %v4042 = vld [vmem:[#allocation4 + $0x378] sm:$0x33]
        %v4043 = vld [vmem:[%s4] sm:$0xff]
        %4045 = vset.pattern.permute.xlu0 0
        %4046 = vperm.xlu0 %4045, %v4043
        %v4047 = vpop.permute.xlu0 %4046
        %v4050 = vunpack.c.l.b16 %v3930
        %v4051 = vunpack.c.h.b16 %v3930
        %v4052 = vpack.c.b16 %v4050, %v4050
        %v4053 = vpack.c.b16 %v4051, %v4051
        %v4167 = vunpack.c.l.b16 %v3931
        %v4168 = vunpack.c.h.b16 %v3931
        %v4169 = vunpack.c.l.b16 %v3932
        %v4170 = vunpack.c.h.b16 %v3932
        %v4171 = vunpack.c.l.b16 %v3933
        %v4172 = vunpack.c.h.b16 %v3933
        %v4173 = vunpack.c.l.b16 %v3934
        %v4174 = vunpack.c.h.b16 %v3934
        %v4175 = vunpack.c.l.b16 %v3935
        %v4176 = vunpack.c.h.b16 %v3935
        %v4177 = vunpack.c.l.b16 %v3936
        %v4178 = vunpack.c.h.b16 %v3936
        %v4179 = vunpack.c.l.b16 %v3937
        %v4180 = vunpack.c.h.b16 %v3937
        %v4181 = vunpack.c.l.b16 %v3938
        %v4182 = vunpack.c.h.b16 %v3938
        %v4183 = vunpack.c.l.b16 %v3939
        %v4184 = vunpack.c.h.b16 %v3939
        %v4185 = vunpack.c.l.b16 %v3940
        %v4186 = vunpack.c.h.b16 %v3940
        %v4187 = vunpack.c.l.b16 %v3941
        %v4188 = vunpack.c.h.b16 %v3941
        %v4189 = vunpack.c.l.b16 %v3942
        %v4190 = vunpack.c.h.b16 %v3942
        %v4191 = vunpack.c.l.b16 %v3943
        %v4192 = vunpack.c.h.b16 %v3943
        %v4193 = vunpack.c.l.b16 %v3944
        %v4194 = vunpack.c.h.b16 %v3944
        %v4195 = vunpack.c.l.b16 %v3945
        %v4196 = vunpack.c.h.b16 %v3945
        %v4197 = vunpack.c.l.b16 %v3946
        %v4198 = vunpack.c.h.b16 %v3946
        %v4199 = vunpack.c.l.b16 %v3947
        %v4200 = vunpack.c.h.b16 %v3947
        %v4201 = vunpack.c.l.b16 %v3948
        %v4202 = vunpack.c.h.b16 %v3948
        %v4203 = vunpack.c.l.b16 %v3949
        %v4204 = vunpack.c.h.b16 %v3949
        %v4205 = vunpack.c.l.b16 %v3950
        %v4206 = vunpack.c.h.b16 %v3950
        %v4207 = vunpack.c.l.b16 %v3951
        %v4208 = vunpack.c.h.b16 %v3951
        %v4209 = vunpack.c.l.b16 %v3952
        %v4210 = vunpack.c.h.b16 %v3952
        %v4211 = vunpack.c.l.b16 %v3953
        %v4212 = vunpack.c.h.b16 %v3953
        %v4213 = vunpack.c.l.b16 %v3954
        %v4214 = vunpack.c.h.b16 %v3954
        %v4215 = vunpack.c.l.b16 %v3955
        %v4216 = vunpack.c.h.b16 %v3955
        %v4217 = vunpack.c.l.b16 %v3956
        %v4218 = vunpack.c.h.b16 %v3956
        %v4219 = vunpack.c.l.b16 %v3957
        %v4220 = vunpack.c.h.b16 %v3957
        %v4221 = vunpack.c.l.b16 %v3958
        %v4222 = vunpack.c.h.b16 %v3958
        %v4223 = vunpack.c.l.b16 %v3959
        %v4224 = vunpack.c.h.b16 %v3959
        %v4225 = vunpack.c.l.b16 %v3960
        %v4226 = vunpack.c.h.b16 %v3960
        %v4227 = vunpack.c.l.b16 %v3961
        %v4228 = vunpack.c.h.b16 %v3961
        %v4229 = vunpack.c.l.b16 %v3962
        %v4230 = vunpack.c.h.b16 %v3962
        %v4231 = vunpack.c.l.b16 %v3963
        %v4232 = vunpack.c.h.b16 %v3963
        %v4233 = vunpack.c.l.b16 %v3964
        %v4234 = vunpack.c.h.b16 %v3964
        %v4235 = vunpack.c.l.b16 %v3965
        %v4236 = vunpack.c.h.b16 %v3965
        %v4237 = vunpack.c.l.b16 %v3966
        %v4238 = vunpack.c.h.b16 %v3966
        %v4239 = vunpack.c.l.b16 %v3967
        %v4240 = vunpack.c.h.b16 %v3967
        %v4241 = vunpack.c.l.b16 %v3968
        %v4242 = vunpack.c.h.b16 %v3968
        %v4243 = vunpack.c.l.b16 %v3969
        %v4244 = vunpack.c.h.b16 %v3969
        %v4245 = vunpack.c.l.b16 %v3970
        %v4246 = vunpack.c.h.b16 %v3970
        %v4247 = vunpack.c.l.b16 %v3971
        %v4248 = vunpack.c.h.b16 %v3971
        %v4249 = vunpack.c.l.b16 %v3972
        %v4250 = vunpack.c.h.b16 %v3972
        %v4251 = vunpack.c.l.b16 %v3973
        %v4252 = vunpack.c.h.b16 %v3973
        %v4253 = vunpack.c.l.b16 %v3974
        %v4254 = vunpack.c.h.b16 %v3974
        %v4255 = vunpack.c.l.b16 %v3975
        %v4256 = vunpack.c.h.b16 %v3975
        %v4257 = vunpack.c.l.b16 %v3976
        %v4258 = vunpack.c.h.b16 %v3976
        %v4259 = vunpack.c.l.b16 %v3977
        %v4260 = vunpack.c.h.b16 %v3977
        %v4261 = vunpack.c.l.b16 %v3978
        %v4262 = vunpack.c.h.b16 %v3978
        %v4263 = vunpack.c.l.b16 %v3979
        %v4264 = vunpack.c.h.b16 %v3979
        %v4265 = vunpack.c.l.b16 %v3980
        %v4266 = vunpack.c.h.b16 %v3980
        %v4267 = vunpack.c.l.b16 %v3981
        %v4268 = vunpack.c.h.b16 %v3981
        %v4269 = vunpack.c.l.b16 %v3982
        %v4270 = vunpack.c.h.b16 %v3982
        %v4271 = vunpack.c.l.b16 %v3983
        %v4272 = vunpack.c.h.b16 %v3983
        %v4273 = vunpack.c.l.b16 %v3984
        %v4274 = vunpack.c.h.b16 %v3984
        %v4275 = vunpack.c.l.b16 %v3985
        %v4276 = vunpack.c.h.b16 %v3985
        %v4277 = vunpack.c.l.b16 %v3986
        %v4278 = vunpack.c.h.b16 %v3986
        %v4279 = vunpack.c.l.b16 %v3987
        %v4280 = vunpack.c.h.b16 %v3987
        %v4281 = vunpack.c.l.b16 %v3988
        %v4282 = vunpack.c.h.b16 %v3988
        %v4283 = vunpack.c.l.b16 %v3989
        %v4284 = vunpack.c.h.b16 %v3989
        %v4285 = vunpack.c.l.b16 %v3990
        %v4286 = vunpack.c.h.b16 %v3990
        %v4287 = vunpack.c.l.b16 %v3991
        %v4288 = vunpack.c.h.b16 %v3991
        %v4289 = vunpack.c.l.b16 %v3992
        %v4290 = vunpack.c.h.b16 %v3992
        %v4291 = vunpack.c.l.b16 %v3993
        %v4292 = vunpack.c.h.b16 %v3993
        %v4293 = vunpack.c.l.b16 %v3994
        %v4294 = vunpack.c.h.b16 %v3994
        %v4295 = vunpack.c.l.b16 %v3995
        %v4296 = vunpack.c.h.b16 %v3995
        %v4297 = vunpack.c.l.b16 %v3996
        %v4298 = vunpack.c.h.b16 %v3996
        %v4299 = vunpack.c.l.b16 %v3997
        %v4300 = vunpack.c.h.b16 %v3997
        %v4301 = vunpack.c.l.b16 %v3998
        %v4302 = vunpack.c.h.b16 %v3998
        %v4303 = vunpack.c.l.b16 %v3999
        %v4304 = vunpack.c.h.b16 %v3999
        %v4305 = vunpack.c.l.b16 %v4000
        %v4306 = vunpack.c.h.b16 %v4000
        %v4307 = vunpack.c.l.b16 %v4001
        %v4308 = vunpack.c.h.b16 %v4001
        %v4309 = vunpack.c.l.b16 %v4002
        %v4310 = vunpack.c.h.b16 %v4002
        %v4311 = vunpack.c.l.b16 %v4003
        %v4312 = vunpack.c.h.b16 %v4003
        %v4313 = vunpack.c.l.b16 %v4004
        %v4314 = vunpack.c.h.b16 %v4004
        %v4315 = vunpack.c.l.b16 %v4005
        %v4316 = vunpack.c.h.b16 %v4005
        %v4317 = vunpack.c.l.b16 %v4006
        %v4318 = vunpack.c.h.b16 %v4006
        %v4319 = vunpack.c.l.b16 %v4007
        %v4320 = vunpack.c.h.b16 %v4007
        %v4321 = vunpack.c.l.b16 %v4008
        %v4322 = vunpack.c.h.b16 %v4008
        %v4323 = vunpack.c.l.b16 %v4009
        %v4324 = vunpack.c.h.b16 %v4009
        %v4325 = vunpack.c.l.b16 %v4010
        %v4326 = vunpack.c.h.b16 %v4010
        %v4327 = vunpack.c.l.b16 %v4011
        %v4328 = vunpack.c.h.b16 %v4011
        %v4329 = vunpack.c.l.b16 %v4012
        %v4330 = vunpack.c.h.b16 %v4012
        %v4331 = vunpack.c.l.b16 %v4013
        %v4332 = vunpack.c.h.b16 %v4013
        %v4333 = vunpack.c.l.b16 %v4014
        %v4334 = vunpack.c.h.b16 %v4014
        %v4335 = vunpack.c.l.b16 %v4015
        %v4336 = vunpack.c.h.b16 %v4015
        %v4337 = vunpack.c.l.b16 %v4016
        %v4338 = vunpack.c.h.b16 %v4016
        %v4339 = vunpack.c.l.b16 %v4017
        %v4340 = vunpack.c.h.b16 %v4017
        %v4341 = vunpack.c.l.b16 %v4018
        %v4342 = vunpack.c.h.b16 %v4018
        %v4343 = vunpack.c.l.b16 %v4019
        %v4344 = vunpack.c.h.b16 %v4019
        %v4345 = vunpack.c.l.b16 %v4020
        %v4346 = vunpack.c.h.b16 %v4020
        %v4347 = vunpack.c.l.b16 %v4021
        %v4348 = vunpack.c.h.b16 %v4021
        %v4349 = vunpack.c.l.b16 %v4022
        %v4350 = vunpack.c.h.b16 %v4022
        %v4351 = vunpack.c.l.b16 %v4023
        %v4352 = vunpack.c.h.b16 %v4023
        %v4353 = vunpack.c.l.b16 %v4024
        %v4354 = vunpack.c.h.b16 %v4024
        %v4355 = vunpack.c.l.b16 %v4025
        %v4356 = vunpack.c.h.b16 %v4025
        %v4357 = vunpack.c.l.b16 %v4026
        %v4358 = vunpack.c.h.b16 %v4026
        %v4359 = vunpack.c.l.b16 %v4027
        %v4360 = vunpack.c.h.b16 %v4027
        %v4361 = vunpack.c.l.b16 %v4028
        %v4362 = vunpack.c.h.b16 %v4028
        %v4363 = vunpack.c.l.b16 %v4029
        %v4364 = vunpack.c.h.b16 %v4029
        %v4365 = vunpack.c.l.b16 %v4030
        %v4366 = vunpack.c.h.b16 %v4030
        %v4367 = vunpack.c.l.b16 %v4031
        %v4368 = vunpack.c.h.b16 %v4031
        %v4369 = vunpack.c.l.b16 %v4032
        %v4370 = vunpack.c.h.b16 %v4032
        %v4371 = vunpack.c.l.b16 %v4033
        %v4372 = vunpack.c.h.b16 %v4033
        %v4373 = vunpack.c.l.b16 %v4034
        %v4374 = vunpack.c.h.b16 %v4034
        %v4375 = vunpack.c.l.b16 %v4035
        %v4376 = vunpack.c.h.b16 %v4035
        %v4377 = vunpack.c.l.b16 %v4036
        %v4378 = vunpack.c.h.b16 %v4036
        %v4379 = vunpack.c.l.b16 %v4037
        %v4380 = vunpack.c.h.b16 %v4037
        %v4381 = vunpack.c.l.b16 %v4038
        %v4382 = vunpack.c.h.b16 %v4038
        %v4383 = vunpack.c.l.b16 %v4039
        %v4384 = vunpack.c.h.b16 %v4039
        %v4385 = vunpack.c.l.b16 %v4040
        %v4386 = vunpack.c.h.b16 %v4040
        %v4387 = vunpack.c.l.b16 %v4041
        %v4388 = vunpack.c.h.b16 %v4041
        %v4389 = vunpack.c.l.b16 %v4042
        %v4390 = vunpack.c.h.b16 %v4042
        %v4391 = vpack.c.b16 %v4175, %v4167
        %v4392 = vpack.c.b16 %v4176, %v4168
        %v4393 = vpack.c.b16 %v4177, %v4169
        %v4394 = vpack.c.b16 %v4178, %v4170
        %v4395 = vpack.c.b16 %v4179, %v4171
        %v4396 = vpack.c.b16 %v4180, %v4172
        %v4397 = vpack.c.b16 %v4181, %v4173
        %v4398 = vpack.c.b16 %v4182, %v4174
        %v4399 = vpack.c.b16 %v4191, %v4183
        %v4400 = vpack.c.b16 %v4192, %v4184
        %v4401 = vpack.c.b16 %v4193, %v4185
        %v4402 = vpack.c.b16 %v4194, %v4186
        %v4403 = vpack.c.b16 %v4195, %v4187
        %v4404 = vpack.c.b16 %v4196, %v4188
        %v4405 = vpack.c.b16 %v4197, %v4189
        %v4406 = vpack.c.b16 %v4198, %v4190
        %v4407 = vpack.c.b16 %v4207, %v4199
        %v4408 = vpack.c.b16 %v4208, %v4200
        %v4409 = vpack.c.b16 %v4209, %v4201
        %v4410 = vpack.c.b16 %v4210, %v4202
        %v4411 = vpack.c.b16 %v4211, %v4203
        %v4412 = vpack.c.b16 %v4212, %v4204
        %v4413 = vpack.c.b16 %v4213, %v4205
        %v4414 = vpack.c.b16 %v4214, %v4206
        %v4415 = vpack.c.b16 %v4223, %v4215
        %v4416 = vpack.c.b16 %v4224, %v4216
        %v4417 = vpack.c.b16 %v4225, %v4217
        %v4418 = vpack.c.b16 %v4226, %v4218
        %v4419 = vpack.c.b16 %v4227, %v4219
        %v4420 = vpack.c.b16 %v4228, %v4220
        %v4421 = vpack.c.b16 %v4229, %v4221
        %v4422 = vpack.c.b16 %v4230, %v4222
        %v4423 = vpack.c.b16 %v4239, %v4231
        %v4424 = vpack.c.b16 %v4240, %v4232
        %v4425 = vpack.c.b16 %v4241, %v4233
        %v4426 = vpack.c.b16 %v4242, %v4234
        %v4427 = vpack.c.b16 %v4243, %v4235
        %v4428 = vpack.c.b16 %v4244, %v4236
        %v4429 = vpack.c.b16 %v4245, %v4237
        %v4430 = vpack.c.b16 %v4246, %v4238
        %v4431 = vpack.c.b16 %v4255, %v4247
        %v4432 = vpack.c.b16 %v4256, %v4248
        %v4433 = vpack.c.b16 %v4257, %v4249
        %v4434 = vpack.c.b16 %v4258, %v4250
        %v4435 = vpack.c.b16 %v4259, %v4251
        %v4436 = vpack.c.b16 %v4260, %v4252
        %v4437 = vpack.c.b16 %v4261, %v4253
        %v4438 = vpack.c.b16 %v4262, %v4254
        %v4439 = vpack.c.b16 %v4271, %v4263
        %v4440 = vpack.c.b16 %v4272, %v4264
        %v4441 = vpack.c.b16 %v4273, %v4265
        %v4442 = vpack.c.b16 %v4274, %v4266
        %v4443 = vpack.c.b16 %v4275, %v4267
        %v4444 = vpack.c.b16 %v4276, %v4268
        %v4445 = vpack.c.b16 %v4277, %v4269
        %v4446 = vpack.c.b16 %v4278, %v4270
        %v4447 = vpack.c.b16 %v4287, %v4279
        %v4448 = vpack.c.b16 %v4288, %v4280
        %v4449 = vpack.c.b16 %v4289, %v4281
        %v4450 = vpack.c.b16 %v4290, %v4282
        %v4451 = vpack.c.b16 %v4291, %v4283
        %v4452 = vpack.c.b16 %v4292, %v4284
        %v4453 = vpack.c.b16 %v4293, %v4285
        %v4454 = vpack.c.b16 %v4294, %v4286
        %v4455 = vpack.c.b16 %v4303, %v4295
        %v4456 = vpack.c.b16 %v4304, %v4296
        %v4457 = vpack.c.b16 %v4305, %v4297
        %v4458 = vpack.c.b16 %v4306, %v4298
        %v4459 = vpack.c.b16 %v4307, %v4299
        %v4460 = vpack.c.b16 %v4308, %v4300
        %v4461 = vpack.c.b16 %v4309, %v4301
        %v4462 = vpack.c.b16 %v4310, %v4302
        %v4463 = vpack.c.b16 %v4319, %v4311
        %v4464 = vpack.c.b16 %v4320, %v4312
        %v4465 = vpack.c.b16 %v4321, %v4313
        %v4466 = vpack.c.b16 %v4322, %v4314
        %v4467 = vpack.c.b16 %v4323, %v4315
        %v4468 = vpack.c.b16 %v4324, %v4316
        %v4469 = vpack.c.b16 %v4325, %v4317
        %v4470 = vpack.c.b16 %v4326, %v4318
        %v4471 = vpack.c.b16 %v4335, %v4327
        %v4472 = vpack.c.b16 %v4336, %v4328
        %v4473 = vpack.c.b16 %v4337, %v4329
        %v4474 = vpack.c.b16 %v4338, %v4330
        %v4475 = vpack.c.b16 %v4339, %v4331
        %v4476 = vpack.c.b16 %v4340, %v4332
        %v4477 = vpack.c.b16 %v4341, %v4333
        %v4478 = vpack.c.b16 %v4342, %v4334
        %v4479 = vpack.c.b16 %v4351, %v4343
        %v4480 = vpack.c.b16 %v4352, %v4344
        %v4481 = vpack.c.b16 %v4353, %v4345
        %v4482 = vpack.c.b16 %v4354, %v4346
        %v4483 = vpack.c.b16 %v4355, %v4347
        %v4484 = vpack.c.b16 %v4356, %v4348
        %v4485 = vpack.c.b16 %v4357, %v4349
        %v4486 = vpack.c.b16 %v4358, %v4350
        %v4487 = vpack.c.b16 %v4367, %v4359
        %v4488 = vpack.c.b16 %v4368, %v4360
        %v4489 = vpack.c.b16 %v4369, %v4361
        %v4490 = vpack.c.b16 %v4370, %v4362
        %v4491 = vpack.c.b16 %v4371, %v4363
        %v4492 = vpack.c.b16 %v4372, %v4364
        %v4493 = vpack.c.b16 %v4373, %v4365
        %v4494 = vpack.c.b16 %v4374, %v4366
        %v4495 = vpack.c.b16 %v4383, %v4375
        %v4496 = vpack.c.b16 %v4384, %v4376
        %v4497 = vpack.c.b16 %v4385, %v4377
        %v4498 = vpack.c.b16 %v4386, %v4378
        %v4499 = vpack.c.b16 %v4387, %v4379
        %v4500 = vpack.c.b16 %v4388, %v4380
        %v4501 = vpack.c.b16 %v4389, %v4381
        %v4502 = vpack.c.b16 %v4390, %v4382
        %vm4607 = vcmask 752640
        %v4609 = vsel %vm4607, %v4053, 0
        %v4612 = vsel %vm2518, %v4495, 0
        %v4615 = vsel %vm2518, %v4496, 0
        %v4618 = vsel %vm2518, %v4497, 0
        %v4621 = vsel %vm2518, %v4498, 0
        %v4624 = vsel %vm2518, %v4499, 0
        %v4627 = vsel %vm2518, %v4500, 0
        %v4630 = vsel %vm2518, %v4501, 0
        %v4633 = vsel %vm2518, %v4502, 0
        %4635 = vmatprep.subr.bf16.mxu0 %v4392
        %4636 = vmatpush1.bf16.msra.mxu0 %v4391
        %4637 = vmatprep.subr.bf16.mxu0 %v4400
        %4638 = vmatpush1.bf16.msra.mxu0 %v4399
        %4639 = vmatprep.subr.bf16.mxu0 %v4408
        %4640 = vmatpush1.bf16.msra.mxu0 %v4407
        %4641 = vmatprep.subr.bf16.mxu0 %v4416
        %4642 = vmatpush1.bf16.msra.mxu0 %v4415
        %4643 = vmatprep.subr.bf16.mxu0 %v4424
        %4644 = vmatpush1.bf16.msra.mxu0 %v4423
        %4645 = vmatprep.subr.bf16.mxu0 %v4432
        %4646 = vmatpush1.bf16.msra.mxu0 %v4431
        %4647 = vmatprep.subr.bf16.mxu0 %v4440
        %4648 = vmatpush1.bf16.msra.mxu0 %v4439
        %4649 = vmatprep.subr.bf16.mxu0 %v4448
        %4650 = vmatpush1.bf16.msra.mxu0 %v4447
        %4651 = vmatprep.subr.bf16.mxu0 %v4456
        %4652 = vmatpush1.bf16.msra.mxu0 %v4455
        %4653 = vmatprep.subr.bf16.mxu0 %v4464
        %4654 = vmatpush1.bf16.msra.mxu0 %v4463
        %4655 = vmatprep.subr.bf16.mxu0 %v4472
        %4656 = vmatpush1.bf16.msra.mxu0 %v4471
        %4657 = vmatprep.subr.bf16.mxu0 %v4480
        %4658 = vmatpush1.bf16.msra.mxu0 %v4479
        %4659 = vmatprep.subr.bf16.mxu0 %v4488
        %4660 = vmatpush1.bf16.msra.mxu0 %v4487
        %4661 = vmatprep.subr.bf16.mxu0 %v4615
        %4662 = vmatpush1.bf16.msra.mxu0 %v4612
        %4663 = vmatprep.subr.bf16.mxu0 0
        %4664 = vmatpush1.bf16.msra.mxu0 0
        %4665 = vmatprep.subr.bf16.mxu0 0
        %4666 = vmatpush1.bf16.msra.mxu0 0
        %4667 = vmatprep.mubr.bf16.mxu0 %v4609
        %4668 = vmatmul.mubr.bf16.gmra.mrb[0].mxu0 %v4052
        %v4669 = vpop.f32.mrb[0].mxu0
        %v4670 = vadd.f32 %v4047, %v4669
        %v4671 = vpop.f32.mrb[0].mxu0
        %v4672 = vadd.f32 %v4047, %v4671
        %v4673 = vpop.f32.mrb[0].mxu0
        %v4674 = vpop.f32.mrb[0].mxu0
        %4675 = vdwg.mxu0
        %4676 = vmatprep.subr.bf16.mxu0 %v4394
        %4677 = vmatpush1.bf16.msra.mxu0 %v4393
        %4678 = vmatprep.subr.bf16.mxu0 %v4402
        %4679 = vmatpush1.bf16.msra.mxu0 %v4401
        %4680 = vmatprep.subr.bf16.mxu0 %v4410
        %4681 = vmatpush1.bf16.msra.mxu0 %v4409
        %4682 = vmatprep.subr.bf16.mxu0 %v4418
        %4683 = vmatpush1.bf16.msra.mxu0 %v4417
        %4684 = vmatprep.subr.bf16.mxu0 %v4426
        %4685 = vmatpush1.bf16.msra.mxu0 %v4425
        %4686 = vmatprep.subr.bf16.mxu0 %v4434
        %4687 = vmatpush1.bf16.msra.mxu0 %v4433
        %4688 = vmatprep.subr.bf16.mxu0 %v4442
        %4689 = vmatpush1.bf16.msra.mxu0 %v4441
        %4690 = vmatprep.subr.bf16.mxu0 %v4450
        %4691 = vmatpush1.bf16.msra.mxu0 %v4449
        %4692 = vmatprep.subr.bf16.mxu0 %v4458
        %4693 = vmatpush1.bf16.msra.mxu0 %v4457
        %4694 = vmatprep.subr.bf16.mxu0 %v4466
        %4695 = vmatpush1.bf16.msra.mxu0 %v4465
        %4696 = vmatprep.subr.bf16.mxu0 %v4474
        %4697 = vmatpush1.bf16.msra.mxu0 %v4473
        %4698 = vmatprep.subr.bf16.mxu0 %v4482
        %4699 = vmatpush1.bf16.msra.mxu0 %v4481
        %4700 = vmatprep.subr.bf16.mxu0 %v4490
        %4701 = vmatpush1.bf16.msra.mxu0 %v4489
        %4702 = vmatprep.subr.bf16.mxu0 %v4621
        %4703 = vmatpush1.bf16.msra.mxu0 %v4618
        %4704 = vmatprep.subr.bf16.mxu0 0
        %4705 = vmatpush1.bf16.msra.mxu0 0
        %4706 = vmatprep.subr.bf16.mxu0 0
        %4707 = vmatpush1.bf16.msra.mxu0 0
        %4708 = vmatprep.mubr.bf16.mxu0 %v4609
        %4709 = vmatmul.mubr.bf16.gmra.mrb[0].mxu0 %v4052
        %v4710 = vpop.f32.mrb[0].mxu0
        %v4711 = vadd.f32 %v4047, %v4710
        %v4712 = vpop.f32.mrb[0].mxu0
        %v4713 = vadd.f32 %v4047, %v4712
        %v4714 = vpop.f32.mrb[0].mxu0
        %v4715 = vpop.f32.mrb[0].mxu0
        %4716 = vdwg.mxu0
        %4717 = vmatprep.subr.bf16.mxu0 %v4396
        %4718 = vmatpush1.bf16.msra.mxu0 %v4395
        %4719 = vmatprep.subr.bf16.mxu0 %v4404
        %4720 = vmatpush1.bf16.msra.mxu0 %v4403
        %4721 = vmatprep.subr.bf16.mxu0 %v4412
        %4722 = vmatpush1.bf16.msra.mxu0 %v4411
        %4723 = vmatprep.subr.bf16.mxu0 %v4420
        %4724 = vmatpush1.bf16.msra.mxu0 %v4419
        %4725 = vmatprep.subr.bf16.mxu0 %v4428
        %4726 = vmatpush1.bf16.msra.mxu0 %v4427
        %4727 = vmatprep.subr.bf16.mxu0 %v4436
        %4728 = vmatpush1.bf16.msra.mxu0 %v4435
        %4729 = vmatprep.subr.bf16.mxu0 %v4444
        %4730 = vmatpush1.bf16.msra.mxu0 %v4443
        %4731 = vmatprep.subr.bf16.mxu0 %v4452
        %4732 = vmatpush1.bf16.msra.mxu0 %v4451
        %4733 = vmatprep.subr.bf16.mxu0 %v4460
        %4734 = vmatpush1.bf16.msra.mxu0 %v4459
        %4735 = vmatprep.subr.bf16.mxu0 %v4468
        %4736 = vmatpush1.bf16.msra.mxu0 %v4467
        %4737 = vmatprep.subr.bf16.mxu0 %v4476
        %4738 = vmatpush1.bf16.msra.mxu0 %v4475
        %4739 = vmatprep.subr.bf16.mxu0 %v4484
        %4740 = vmatpush1.bf16.msra.mxu0 %v4483
        %4741 = vmatprep.subr.bf16.mxu0 %v4492
        %4742 = vmatpush1.bf16.msra.mxu0 %v4491
        %4743 = vmatprep.subr.bf16.mxu0 %v4627
        %4744 = vmatpush1.bf16.msra.mxu0 %v4624
        %4745 = vmatprep.subr.bf16.mxu0 0
        %4746 = vmatpush1.bf16.msra.mxu0 0
        %4747 = vmatprep.subr.bf16.mxu0 0
        %4748 = vmatpush1.bf16.msra.mxu0 0
        %4749 = vmatprep.mubr.bf16.mxu0 %v4609
        %4750 = vmatmul.mubr.bf16.gmra.mrb[0].mxu0 %v4052
        %v4751 = vpop.f32.mrb[0].mxu0
        %v4752 = vadd.f32 %v4047, %v4751
        %v4753 = vpop.f32.mrb[0].mxu0
        %v4754 = vadd.f32 %v4047, %v4753
        %v4755 = vpop.f32.mrb[0].mxu0
        %v4756 = vpop.f32.mrb[0].mxu0
        %4757 = vdwg.mxu0
        %4758 = vmatprep.subr.bf16.mxu0 %v4398
        %4759 = vmatpush1.bf16.msra.mxu0 %v4397
        %4760 = vmatprep.subr.bf16.mxu0 %v4406
        %4761 = vmatpush1.bf16.msra.mxu0 %v4405
        %4762 = vmatprep.subr.bf16.mxu0 %v4414
        %4763 = vmatpush1.bf16.msra.mxu0 %v4413
        %4764 = vmatprep.subr.bf16.mxu0 %v4422
        %4765 = vmatpush1.bf16.msra.mxu0 %v4421
        %4766 = vmatprep.subr.bf16.mxu0 %v4430
        %4767 = vmatpush1.bf16.msra.mxu0 %v4429
        %4768 = vmatprep.subr.bf16.mxu0 %v4438
        %4769 = vmatpush1.bf16.msra.mxu0 %v4437
        %4770 = vmatprep.subr.bf16.mxu0 %v4446
        %4771 = vmatpush1.bf16.msra.mxu0 %v4445
        %4772 = vmatprep.subr.bf16.mxu0 %v4454
        %4773 = vmatpush1.bf16.msra.mxu0 %v4453
        %4774 = vmatprep.subr.bf16.mxu0 %v4462
        %4775 = vmatpush1.bf16.msra.mxu0 %v4461
        %4776 = vmatprep.subr.bf16.mxu0 %v4470
        %4777 = vmatpush1.bf16.msra.mxu0 %v4469
        %4778 = vmatprep.subr.bf16.mxu0 %v4478
        %4779 = vmatpush1.bf16.msra.mxu0 %v4477
        %4780 = vmatprep.subr.bf16.mxu0 %v4486
        %4781 = vmatpush1.bf16.msra.mxu0 %v4485
        %4782 = vmatprep.subr.bf16.mxu0 %v4494
        %4783 = vmatpush1.bf16.msra.mxu0 %v4493
        %4784 = vmatprep.subr.bf16.mxu0 %v4633
        %4785 = vmatpush1.bf16.msra.mxu0 %v4630
        %4786 = vmatprep.subr.bf16.mxu0 0
        %4787 = vmatpush1.bf16.msra.mxu0 0
        %4788 = vmatprep.subr.bf16.mxu0 0
        %4789 = vmatpush1.bf16.msra.mxu0 0
        %4790 = vmatprep.mubr.bf16.mxu0 %v4609
        %4791 = vmatmul.mubr.bf16.gmra.mrb[0].mxu0 %v4052
        %v4792 = vpop.f32.mrb[0].mxu0
        %v4793 = vadd.f32 %v4047, %v4792
        %v4794 = vpop.f32.mrb[0].mxu0
        %v4795 = vadd.f32 %v4047, %v4794
        %v4796 = vpop.f32.mrb[0].mxu0
        %v4797 = vpop.f32.mrb[0].mxu0
        %4798 = vdwg.mxu0
        %v4799 = vmax.f32 %v4670, 0.0
        %v4800 = vmax.f32 %v4672, 0.0
        %v4801 = vmax.f32 %v4711, 0.0
        %v4802 = vmax.f32 %v4713, 0.0
        %v4803 = vmax.f32 %v4752, 0.0
        %v4804 = vmax.f32 %v4754, 0.0
        %v4805 = vmax.f32 %v4793, 0.0
        %v4806 = vmax.f32 %v4795, 0.0
        %4807 = vst [vmem:[%s267] sm:$0xff] %v4799
        %4808 = vst [vmem:[%s267 + $0x8] sm:$0xff] %v4800
        %4809 = vst [vmem:[%s267 + $0x10] sm:$0xff] %v4801
        %4810 = vst [vmem:[%s267 + $0x18] sm:$0xff] %v4802
        %4811 = vst [vmem:[%s267 + $0x20] sm:$0xff] %v4803
        %4812 = vst [vmem:[%s267 + $0x28] sm:$0xff] %v4804
        %4813 = vst [vmem:[%s267 + $0x30] sm:$0xff] %v4805
        %vm4814 = vcmask 850944
        %4815 = vst.msk [vmem:[%s267 + $0x38] sm:$0xff] %vm4814, %v4806
        %s4816 = sand.u32 %s162, 1
        %s4817 = scalar_lea.sflag [#allocation7], %s4816
        %s4818 = sand.u32 %s162, 1
        %s4819 = smul.addr %s4818, 64
        %s4820 = scalar_lea.vmem [#allocation8], %s4819
        // Predicated region
        $region49: #{tpu_custom_call.1} parent=43 // pred_check
          %p4821 = pneg %p172
        $region50: #{tpu_custom_call.1} parent=43 // pred_check_branch
          %4823 = sbr.rel (%p4821) target = $region52
        $region51: #{tpu_custom_call.1} parent=43 // pred_region
          %s4825 = ssub.s32 1024, 1024
          %4826 = vsyncadd %s4817, %s4825
          %s4827 = smul.addr %s23, 8
          %s4828 = smul.addr %s4827, 128
          %s4829 = scalar_lea.hbm %s6, %s4828
          %s4831 = sshll.u32 %s4820, 4
          %s4832 = int_to_ptr.vmem [resolvable:$true] %s4831
          %4834 = dma.vmem_to_hbm [thread:$0]  %s4832, 1024, %s4829, %s4817
        $region52: #{tpu_custom_call.1} parent=43 // pred_fallthru
          _
      $region44: #{tpu_custom_call.1} parent=5 // pred_fallthru
        _
      %p4835 = scmp.le.s32.totalorder 2, %s18
      // Predicated region
      $region53: #{tpu_custom_call.1} parent=5 // pred_check
        %p4836 = pneg %p4835
      $region54: #{tpu_custom_call.1} parent=5 // pred_check_branch
        %4838 = sbr.rel (%p4836) target = $region56
      $region55: #{tpu_custom_call.1} parent=5 // pred_region
        %s4839 = ssub.s32 %s18, 2
        // Predicated region
        $region57: #{tpu_custom_call.1} parent=55 // pred_check
          %p4840 = pneg %p178
        $region58: #{tpu_custom_call.1} parent=55 // pred_check_branch
          %4842 = sbr.rel (%p4840) target = $region60
        $region59: #{tpu_custom_call.1} parent=55 // pred_region
          %s4843 = sand.u32 %s163, 1
          %s4844 = scalar_lea.sflag [#allocation7], %s4843
          %s4845 = sand.u32 %s163, 1
          %s4846 = smul.addr %s4845, 64
          %s4847 = scalar_lea.vmem [#allocation8], %s4846
          %4848 = dma.done %s4844, 1024
        $region60: #{tpu_custom_call.1} parent=55 // pred_fallthru
          _
      $region56: #{tpu_custom_call.1} parent=5 // pred_fallthru
        _
    $region6: #{tpu_custom_call.1} parent=1 // loop_footer
      %s22 = sadd.s32 1, %s18
    $region7: #{tpu_custom_call.1} parent=1 // loop_footer_branch
      %17 = sbr.rel target = $region3
    $region8: #{tpu_custom_call.1} parent=1 // loop_exit
      _
    %4849 = vsyncpa [#allocation6], 1
    %s4850 = scalar_lea.sflag [#allocation6], 1
    %4851 = vsyncpa %s4850, 1
    %4852 = vsyncpa [#allocation7], 1
    %s4853 = scalar_lea.sflag [#allocation7], 1
    %4854 = vsyncpa %s4853, 1

</llo_original>
